<compile_context>
chip_gen: v7x
topology: tpu7x:2x2x1
jax: 0.10.0
libtpu: 0.0.40
codegen_flags: <defaults>
</compile_context>

<pallas_src>
import functools

import numpy as np
import jax
import jax.numpy as jnp
from jax.experimental import pallas as pl
from jax.experimental.pallas import tpu as pltpu


# ConvTranspose2d(k=4, s=2, p=1) sub-pixel decomposition: for output parity r
# (per spatial dim), the contributing (input offset d, kernel index k) pairs:
#   o = 2*q + r  and  o = 2*i - 1 + k   =>   i = q + d, with (d, k) as below.
_T_TAPS = {0: ((0, 1), (-1, 3)),
           1: ((0, 2), (1, 0))}
_PHASES = ((0, 0), (0, 1), (1, 0), (1, 1))

_CONST_KEYS = ("gd1", "wd1", "bd1", "gd2", "wd2", "bd2",
               "mu1", "wu1", "bu1", "s1", "mu2", "wu2", "bu2", "s2")


# --------------------------- host-side constants -----------------------------

def _down_gather_mats(H, W, B, dtype):
    """9 x (B*H*W, B*(H//2)*(W//2)) 0/1 gather matrices: tap t = ky*3+kx of a
    conv3x3 / stride 2 / pad 1 reads input (2ho+ky-1, 2wo+kx-1) for output
    (ho, wo); zero outside the image; block-diagonal over packed samples."""
    Ho, Wo = H // 2, W // 2
    M, Mo = H * W, Ho * Wo
    g = np.zeros((9, B * M, B * Mo), np.float32)
    for t in range(9):
        dy, dx = t // 3 - 1, t % 3 - 1
        for ho in range(Ho):
            iy = 2 * ho + dy
            if not (0 <= iy < H):
                continue
            for wo in range(Wo):
                ix = 2 * wo + dx
                if not (0 <= ix < W):
                    continue
                for b in range(B):
                    g[t, b * M + iy * W + ix, b * Mo + ho * Wo + wo] = 1.0
    return jnp.asarray(g, dtype)


def _interleave_mat(Hi, Wi, B, dtype):
    """(4*B*Hi*Wi, B*2Hi*2Wi) 0/1 permutation: row p*(B*Mi) + b*Mi + qy*Wi + qx
    (phase-block-major lane concat of the 4 phase outputs) feeds output column
    (b, oy=2*qy+ry, ox=2*qx+rx)."""
    Mi = Hi * Wi
    Ho, Wo = 2 * Hi, 2 * Wi
    Mo = Ho * Wo
    s = np.zeros((4 * B * Mi, B * Mo), np.float32)
    for oy in range(Ho):
        for ox in range(Wo):
            p = (oy % 2) * 2 + (ox % 2)
            q = (oy // 2) * Wi + (ox // 2)
            for b in range(B):
                s[p * B * Mi + b * Mi + q, b * Mo + oy * Wo + ox] = 1.0
    return jnp.asarray(s, dtype)


def _shift_masks(Hi, Wi, B, dtype):
    """(9, 1, B*Hi*Wi) border masks: entry s = (dy+1)*3 + (dx+1) is 1 where
    (qy+dy, qx+dx) stays inside the Hi x Wi image (per packed sample)."""
    Mi = Hi * Wi
    m = np.zeros((9, 1, B * Mi), np.float32)
    for s in range(9):
        dy, dx = s // 3 - 1, s % 3 - 1
        for qy in range(Hi):
            for qx in range(Wi):
                if 0 <= qy + dy < Hi and 0 <= qx + dx < Wi:
                    for b in range(B):
                        m[s, 0, b * Mi + qy * Wi + qx] = 1.0
    return jnp.asarray(m, dtype)


def _flat_conv3x3_w(w, dtype):
    """(Co, Ci, 3, 3) PyTorch Conv2d weight -> (Co, 9*Ci), tap-major/ci-minor."""
    Co, Ci = w.shape[0], w.shape[1]
    return jnp.transpose(w, (0, 2, 3, 1)).reshape(Co, 9 * Ci).astype(dtype)


def _phase_convT4x4_w(wt, dtype):
    """(Ci, Co, 4, 4) PyTorch ConvTranspose2d weight -> (4 phases, Co, 4*Ci),
    tap-major / input-channel-minor, matching the in-kernel tap stacking."""
    phases = []
    for ry, rx in _PHASES:
        cols = []
        for _dy, ky in _T_TAPS[ry]:
            for _dx, kx in _T_TAPS[rx]:
                cols.append(jnp.transpose(wt[:, :, ky, kx]))    # (Co, Ci)
        phases.append(jnp.concatenate(cols, axis=1))            # (Co, 4*Ci)
    return jnp.stack(phases, axis=0).astype(dtype)              # (4, Co, 4*Ci)


def prepare_ublock(params, *, height, width, batch_tile=1,
                   compute_dtype=jnp.bfloat16):
    """One-time prep (review item 6: keep the per-call jit free of the weight /
    constant reshuffle).  Returns resident-VMEM constants for the kernel."""
    C = params["down1_b"].shape[0]
    H, W, B, cdt = height, width, batch_tile, compute_dtype
    consts = {
        "gd1": _down_gather_mats(H, W, B, cdt),
        "wd1": _flat_conv3x3_w(params["down1_w"], cdt),
        "bd1": params["down1_b"].reshape(C, 1).astype(jnp.float32),
        "gd2": _down_gather_mats(H // 2, W // 2, B, cdt),
        "wd2": _flat_conv3x3_w(params["down2_w"], cdt),
        "bd2": params["down2_b"].reshape(C, 1).astype(jnp.float32),
        "mu1": _shift_masks(H // 4, W // 4, B, cdt),
        "wu1": _phase_convT4x4_w(params["up1_w"], cdt),
        "bu1": params["up1_b"].reshape(C, 1).astype(jnp.float32),
        "s1":  _interleave_mat(H // 4, W // 4, B, cdt),
        "mu2": _shift_masks(H // 2, W // 2, B, cdt),
        "wu2": _phase_convT4x4_w(params["up2_w"], cdt),
        "bu2": params["up2_b"].reshape(C, 1).astype(jnp.float32),
        "s2":  _interleave_mat(H // 2, W // 2, B, cdt),
    }
    return jax.device_put(consts)


# ------------------------------ in-kernel helpers ----------------------------

def _masked_shift(x, dy, dx, Wi, masks):
    """x[:, q] -> x[:, q + dy*Wi + dx] with zeros where (qy+dy, qx+dx) leaves
    the image.  The border mask is a host-precomputed constant (no iota); it
    also kills any leakage across packed-sample boundaries."""
    d = dy * Wi + dx
    if d == 0:
        return x
    rows, Lp = x.shape
    if d > 0:
        y = jnp.concatenate([x[:, d:], jnp.zeros((rows, d), x.dtype)], axis=1)
    else:
        y = jnp.concatenate([jnp.zeros((rows, -d), x.dtype), x[:, :Lp + d]],
                            axis=1)
    return y * masks[(dy + 1) * 3 + (dx + 1)]


def _down_conv(x, g_ref, w_flat, bias):
    """Conv2d(k=3, s=2, p=1) + bias + ReLU.
    x: (Ci, L_in) compute dtype; g_ref: (9, L_in, L_out) 0/1 gathers (stride
    folded in); w_flat: (Co, 9*Ci).  9 gather matmuls (full contraction depth)
    + ONE weight matmul over the sublane-stacked taps."""
    cdt = x.dtype
    taps = []
    for t in range(9):
        tap = jnp.dot(x, g_ref[t], preferred_element_type=jnp.float32)
        taps.append(tap.astype(cdt))          # exact: 0/1 gather of cdt values
    taps = jnp.concatenate(taps, axis=0)      # (9*Ci, L_out)
    acc = jnp.dot(w_flat, taps, preferred_element_type=jnp.float32)
    return jnp.maximum(acc + bias, 0.0)       # f32 (Co, L_out)


def _up_convT(x, w_ph, bias, masks, Wi, s_ref):
    """ConvTranspose2d(k=4, s=2, p=1) + bias + ReLU via sub-pixel phases.
    x: (Ci, L_in); w_ph: (4, Co, 4*Ci); masks: (9, 1, L_in);
    s_ref: (4*L_in, 4*L_in) 0/1 phase-interleave permutation.
    One matmul per phase (tap-stacked contraction) + one interleave matmul;
    bias+ReLU are applied per phase (they commute with the permutation)."""
    cdt = x.dtype
    shifted = {}
    phase_out = []
    for p, (ry, rx) in enumerate(_PHASES):
        blocks = []
        for dy, _ky in _T_TAPS[ry]:
            for dx, _kx in _T_TAPS[rx]:
                if (dy, dx) not in shifted:          # each shift built once
                    shifted[(dy, dx)] = _masked_shift(x, dy, dx, Wi, masks)
                blocks.append(shifted[(dy, dx)])
        taps = jnp.concatenate(blocks, axis=0)       # (4*Ci, L_in)
        acc = jnp.dot(w_ph[p], taps, preferred_element_type=jnp.float32)
        phase_out.append(jnp.maximum(acc + bias, 0.0).astype(cdt))
    ph_cat = jnp.concatenate(phase_out, axis=1)      # (Co, 4*L_in)
    return jnp.dot(ph_cat, s_ref[...], preferred_element_type=jnp.float32)


# ---------------------------------- kernel -----------------------------------

def _ublock_kernel(x_ref,
                   gd1_ref, wd1_ref, bd1_ref,
                   gd2_ref, wd2_ref, bd2_ref,
                   mu1_ref, wu1_ref, bu1_ref, s1_ref,
                   mu2_ref, wu2_ref, bu2_ref, s2_ref,
                   o_ref, *, width):
    cdt = x_ref.dtype
    W1, W2 = width // 2, width // 4
    x = x_ref[0]                                                   # (C, B*H*W)

    # down1 / down2: taps gathered straight onto the half-resolution grid.
    d1 = _down_conv(x, gd1_ref, wd1_ref[...], bd1_ref[...])        # f32 (C, L1)
    d1c = d1.astype(cdt)                                           # cast once, reused
    d2 = _down_conv(d1c, gd2_ref, wd2_ref[...], bd2_ref[...])      # f32 (C, L2)
    d2c = d2.astype(cdt)

    # up1: sub-pixel phases + single interleave matmul.
    u1 = _up_convT(d2c, wu1_ref[...], bu1_ref[...], mu1_ref[...], W2, s1_ref)
    u1c = u1.astype(cdt)                                           # exact (already cdt values)

    # up2 on concat([u1, d1]): 8-sublane in-register concat; each phase then
    # contracts over 4*2C rows in one matmul (no split-K, no HBM concat).
    xcat = jnp.concatenate([u1c, d1c], axis=0)                     # (2C, L1)
    u2 = _up_convT(xcat, wu2_ref[...], bu2_ref[...], mu2_ref[...], W1, s2_ref)

    o_ref[0] = u2.astype(o_ref.dtype)


# ------------------------------ host-side wrapper -----------------------------

@functools.partial(jax.jit, static_argnames=("height", "width", "batch_tile",
                                              "compute_dtype"))
def ublock_forward(consts, x, *, height, width, batch_tile=1,
                   compute_dtype=jnp.bfloat16):
    """UBlock forward.  x: (N, C, H, W) f32 -> (N, C, H, W) f32."""
    N, C, H, W = x.shape
    assert (H, W) == (height, width) and H % 4 == 0 and W % 4 == 0
    B = batch_tile
    G = -(-N // B)                 # grid length; keep >= 2 when possible (v7x has 2 TCs)
    Np = G * B
    M = H * W
    L = B * M

    xk = x.reshape(N, C, M)
    if Np != N:
        xk = jnp.concatenate([xk, jnp.zeros((Np - N, C, M), xk.dtype)], axis=0)
    # Lane-pack batch_tile samples per grid step: (G, C, B*M), spatial row-major
    # per sample, samples contiguous along lanes.
    xk = (xk.reshape(G, B, C, M).transpose(0, 2, 1, 3)
             .reshape(G, C, L).astype(compute_dtype))

    def resident(a):               # whole array, same block every grid step
        nd = a.ndim
        return pl.BlockSpec(a.shape, lambda n, _nd=nd: (0,) * _nd)

    cvals = [consts[k] for k in _CONST_KEYS]
    out = pl.pallas_call(
        functools.partial(_ublock_kernel, width=W),
        out_shape=jax.ShapeDtypeStruct((G, C, L), jnp.float32),
        grid_spec=pltpu.PrefetchScalarGridSpec(
            num_scalar_prefetch=0,
            grid=(G,),
            in_specs=[pl.BlockSpec((1, C, L), lambda n: (n, 0, 0))]
                     + [resident(a) for a in cvals],
            out_specs=pl.BlockSpec((1, C, L), lambda n: (n, 0, 0)),
        ),
        compiler_params=pltpu.CompilerParams(
            dimension_semantics=("parallel",)),
    )(xk, *cvals)

    out = (out.reshape(G, C, B, M).transpose(0, 2, 1, 3)
              .reshape(Np, C, H, W))[:N]
    return out


# ----------------------------- pure-JAX reference -----------------------------

def _ref_conv2d(x, w, b, stride, pad):
    y = jax.lax.conv_general_dilated(
        x, w, (stride, stride), [(pad, pad), (pad, pad)],
        dimension_numbers=("NCHW", "OIHW", "NCHW"),
        precision=jax.lax.Precision.HIGHEST)
    return jax.nn.relu(y + b[None, :, None, None])


def _ref_convT2d(x, w, b, stride, pad):
    k = w.shape[2]
    w_conv = jnp.transpose(w, (1, 0, 2, 3))[:, :, ::-1, ::-1]
    y = jax.lax.conv_general_dilated(
        x, w_conv, (1, 1), [(k - 1 - pad, k - 1 - pad)] * 2,
        lhs_dilation=(stride, stride),
        dimension_numbers=("NCHW", "OIHW", "NCHW"),
        precision=jax.lax.Precision.HIGHEST)
    return jax.nn.relu(y + b[None, :, None, None])


def ublock_ref(params, x):
    d1 = _ref_conv2d(x, params["down1_w"], params["down1_b"], 2, 1)
    d2 = _ref_conv2d(d1, params["down2_w"], params["down2_b"], 2, 1)
    u1 = _ref_convT2d(d2, params["up1_w"], params["up1_b"], 2, 1)
    u2 = _ref_convT2d(jnp.concatenate([u1, d1], axis=1),
                      params["up2_w"], params["up2_b"], 2, 1)
    return u2


# ---------------------------------- params ------------------------------------

def init_params(key, channels):
    C = channels
    keys = jax.random.split(key, 8)

    def u(k, shape, fan_in):
        bound = 1.0 / (fan_in ** 0.5)
        return jax.random.uniform(k, shape, jnp.float32, -bound, bound)

    return {
        "down1_w": u(keys[0], (C, C, 3, 3), C * 9),
        "down1_b": u(keys[1], (C,), C * 9),
        "down2_w": u(keys[2], (C, C, 3, 3), C * 9),
        "down2_b": u(keys[3], (C,), C * 9),
        "up1_w":   u(keys[4], (C, C, 4, 4), C * 16),
        "up1_b":   u(keys[5], (C,), C * 16),
        "up2_w":   u(keys[6], (2 * C, C, 4, 4), 2 * C * 16),
        "up2_b":   u(keys[7], (C,), 2 * C * 16),
    }


if __name__ == "__main__":
    key = jax.random.PRNGKey(0)
    pkey, xkey = jax.random.split(key)
    N, C, H, W = 2, 4, 16, 16
    params = init_params(pkey, C)
    x = jax.random.normal(xkey, (N, C, H, W), jnp.float32)

    ref = jax.block_until_ready(ublock_ref(params, x))

    # f32 operands: tight check against the high-precision lax reference.
    c32 = prepare_ublock(params, height=H, width=W, batch_tile=1,
                         compute_dtype=jnp.float32)
    out_f32 = jax.block_until_ready(
        ublock_forward(c32, x, height=H, width=W, batch_tile=1,
                       compute_dtype=jnp.float32))
    assert out_f32.shape == (N, C, H, W), out_f32.shape
    assert float(jnp.max(jnp.abs(out_f32 - ref))) < 1e-3

    # default bf16 operands / f32 accumulation; grid=2 keeps both v7x TCs busy.
    cbf = prepare_ublock(params, height=H, width=W, batch_tile=1)
    out_bf = jax.block_until_ready(
        ublock_forward(cbf, x, height=H, width=W, batch_tile=1))
    assert out_bf.shape == (N, C, H, W), out_bf.shape
    assert float(jnp.max(jnp.abs(out_bf - ref))) < 1e-1

    # lane-packed variant: both samples in one grid step (exercises the packed
    # masks / gather / interleave constants).
    cbf2 = prepare_ublock(params, height=H, width=W, batch_tile=2)
    out_bf2 = jax.block_until_ready(
        ublock_forward(cbf2, x, height=H, width=W, batch_tile=2))
    assert float(jnp.max(jnp.abs(out_bf2 - ref))) < 1e-1

    print("KERNEL_OK")
</pallas_src>

<mosaic_0001>
module attributes {stable_mosaic.version = 11 : i64} {
  func.func @_ublock_kernel(%arg0: i32, %arg1: memref<1x4x256xf32, #tpu.memory_space<vmem>>, %arg2: memref<9x256x64xf32, #tpu.memory_space<vmem>>, %arg3: memref<4x36xf32, #tpu.memory_space<vmem>>, %arg4: memref<4x1xf32, #tpu.memory_space<vmem>>, %arg5: memref<9x64x16xf32, #tpu.memory_space<vmem>>, %arg6: memref<4x36xf32, #tpu.memory_space<vmem>>, %arg7: memref<4x1xf32, #tpu.memory_space<vmem>>, %arg8: memref<9x1x16xf32, #tpu.memory_space<vmem>>, %arg9: memref<4x4x16xf32, #tpu.memory_space<vmem>>, %arg10: memref<4x1xf32, #tpu.memory_space<vmem>>, %arg11: memref<64x64xf32, #tpu.memory_space<vmem>>, %arg12: memref<9x1x64xf32, #tpu.memory_space<vmem>>, %arg13: memref<4x4x32xf32, #tpu.memory_space<vmem>>, %arg14: memref<4x1xf32, #tpu.memory_space<vmem>>, %arg15: memref<256x256xf32, #tpu.memory_space<vmem>>, %arg16: memref<1x4x256xf32, #tpu.memory_space<vmem>>) attributes {dimension_semantics = [#tpu.dimension_semantics<parallel>], iteration_bounds = array<i64: 2>, scalar_prefetch = 0 : i64, scratch_operands = 0 : i64, tpu.core_type = #tpu.core_type<tc>, window_params = [{transform_indices = @transform_0, window_bounds = array<i64: 1, 4, 256>}, {pipeline_mode = #tpu.pipeline_mode<synchronous>, transform_indices = @transform_1, window_bounds = array<i64: 9, 256, 64>}, {pipeline_mode = #tpu.pipeline_mode<synchronous>, transform_indices = @transform_2, window_bounds = array<i64: 4, 36>}, {pipeline_mode = #tpu.pipeline_mode<synchronous>, transform_indices = @transform_3, window_bounds = array<i64: 4, 1>}, {pipeline_mode = #tpu.pipeline_mode<synchronous>, transform_indices = @transform_4, window_bounds = array<i64: 9, 64, 16>}, {pipeline_mode = #tpu.pipeline_mode<synchronous>, transform_indices = @transform_5, window_bounds = array<i64: 4, 36>}, {pipeline_mode = #tpu.pipeline_mode<synchronous>, transform_indices = @transform_6, window_bounds = array<i64: 4, 1>}, {pipeline_mode = #tpu.pipeline_mode<synchronous>, transform_indices = @transform_7, window_bounds = array<i64: 9, 1, 16>}, {pipeline_mode = #tpu.pipeline_mode<synchronous>, transform_indices = @transform_8, window_bounds = array<i64: 4, 4, 16>}, {pipeline_mode = #tpu.pipeline_mode<synchronous>, transform_indices = @transform_9, window_bounds = array<i64: 4, 1>}, {pipeline_mode = #tpu.pipeline_mode<synchronous>, transform_indices = @transform_10, window_bounds = array<i64: 64, 64>}, {pipeline_mode = #tpu.pipeline_mode<synchronous>, transform_indices = @transform_11, window_bounds = array<i64: 9, 1, 64>}, {pipeline_mode = #tpu.pipeline_mode<synchronous>, transform_indices = @transform_12, window_bounds = array<i64: 4, 4, 32>}, {pipeline_mode = #tpu.pipeline_mode<synchronous>, transform_indices = @transform_13, window_bounds = array<i64: 4, 1>}, {pipeline_mode = #tpu.pipeline_mode<synchronous>, transform_indices = @transform_14, window_bounds = array<i64: 256, 256>}, {transform_indices = @transform_15, window_bounds = array<i64: 1, 4, 256>}]} {
    %c0 = arith.constant 0 : index
    %c0_0 = arith.constant 0 : index
    %c0_1 = arith.constant 0 : index
    %0 = vector.load %arg1[%c0, %c0_0, %c0_1] : memref<1x4x256xf32, #tpu.memory_space<vmem>>, vector<1x4x256xf32>
    %1 = vector.shape_cast %0 : vector<1x4x256xf32> to vector<4x256xf32>
    %c0_2 = arith.constant 0 : index
    %c0_3 = arith.constant 0 : index
    %2 = vector.load %arg3[%c0_2, %c0_3] : memref<4x36xf32, #tpu.memory_space<vmem>>, vector<4x36xf32>
    %c0_4 = arith.constant 0 : index
    %c0_5 = arith.constant 0 : index
    %3 = vector.load %arg4[%c0_4, %c0_5] : memref<4x1xf32, #tpu.memory_space<vmem>>, vector<4x1xf32>
    %c0_6 = arith.constant 0 : index
    %c0_7 = arith.constant 0 : index
    %c0_8 = arith.constant 0 : index
    %4 = vector.load %arg2[%c0_6, %c0_7, %c0_8] : memref<9x256x64xf32, #tpu.memory_space<vmem>>, vector<1x256x64xf32>
    %5 = vector.shape_cast %4 : vector<1x256x64xf32> to vector<256x64xf32>
    %cst = arith.constant dense<0.000000e+00> : vector<4x64xf32>
    %6 = tpu.matmul %1, %5, %cst {dimension_numbers = #tpu.dot_dimension_numbers<[1], [0], [0], [1], [0, 0, 1, 1], [], []>} : vector<4x256xf32>, vector<256x64xf32>, vector<4x64xf32> -> vector<4x64xf32>
    %c1 = arith.constant 1 : index
    %c0_9 = arith.constant 0 : index
    %c0_10 = arith.constant 0 : index
    %7 = vector.load %arg2[%c1, %c0_9, %c0_10] : memref<9x256x64xf32, #tpu.memory_space<vmem>>, vector<1x256x64xf32>
    %8 = vector.shape_cast %7 : vector<1x256x64xf32> to vector<256x64xf32>
    %cst_11 = arith.constant dense<0.000000e+00> : vector<4x64xf32>
    %9 = tpu.matmul %1, %8, %cst_11 {dimension_numbers = #tpu.dot_dimension_numbers<[1], [0], [0], [1], [0, 0, 1, 1], [], []>} : vector<4x256xf32>, vector<256x64xf32>, vector<4x64xf32> -> vector<4x64xf32>
    %c2 = arith.constant 2 : index
    %c0_12 = arith.constant 0 : index
    %c0_13 = arith.constant 0 : index
    %10 = vector.load %arg2[%c2, %c0_12, %c0_13] : memref<9x256x64xf32, #tpu.memory_space<vmem>>, vector<1x256x64xf32>
    %11 = vector.shape_cast %10 : vector<1x256x64xf32> to vector<256x64xf32>
    %cst_14 = arith.constant dense<0.000000e+00> : vector<4x64xf32>
    %12 = tpu.matmul %1, %11, %cst_14 {dimension_numbers = #tpu.dot_dimension_numbers<[1], [0], [0], [1], [0, 0, 1, 1], [], []>} : vector<4x256xf32>, vector<256x64xf32>, vector<4x64xf32> -> vector<4x64xf32>
    %c3 = arith.constant 3 : index
    %c0_15 = arith.constant 0 : index
    %c0_16 = arith.constant 0 : index
    %13 = vector.load %arg2[%c3, %c0_15, %c0_16] : memref<9x256x64xf32, #tpu.memory_space<vmem>>, vector<1x256x64xf32>
    %14 = vector.shape_cast %13 : vector<1x256x64xf32> to vector<256x64xf32>
    %cst_17 = arith.constant dense<0.000000e+00> : vector<4x64xf32>
    %15 = tpu.matmul %1, %14, %cst_17 {dimension_numbers = #tpu.dot_dimension_numbers<[1], [0], [0], [1], [0, 0, 1, 1], [], []>} : vector<4x256xf32>, vector<256x64xf32>, vector<4x64xf32> -> vector<4x64xf32>
    %c4 = arith.constant 4 : index
    %c0_18 = arith.constant 0 : index
    %c0_19 = arith.constant 0 : index
    %16 = vector.load %arg2[%c4, %c0_18, %c0_19] : memref<9x256x64xf32, #tpu.memory_space<vmem>>, vector<1x256x64xf32>
    %17 = vector.shape_cast %16 : vector<1x256x64xf32> to vector<256x64xf32>
    %cst_20 = arith.constant dense<0.000000e+00> : vector<4x64xf32>
    %18 = tpu.matmul %1, %17, %cst_20 {dimension_numbers = #tpu.dot_dimension_numbers<[1], [0], [0], [1], [0, 0, 1, 1], [], []>} : vector<4x256xf32>, vector<256x64xf32>, vector<4x64xf32> -> vector<4x64xf32>
    %c5 = arith.constant 5 : index
    %c0_21 = arith.constant 0 : index
    %c0_22 = arith.constant 0 : index
    %19 = vector.load %arg2[%c5, %c0_21, %c0_22] : memref<9x256x64xf32, #tpu.memory_space<vmem>>, vector<1x256x64xf32>
    %20 = vector.shape_cast %19 : vector<1x256x64xf32> to vector<256x64xf32>
    %cst_23 = arith.constant dense<0.000000e+00> : vector<4x64xf32>
    %21 = tpu.matmul %1, %20, %cst_23 {dimension_numbers = #tpu.dot_dimension_numbers<[1], [0], [0], [1], [0, 0, 1, 1], [], []>} : vector<4x256xf32>, vector<256x64xf32>, vector<4x64xf32> -> vector<4x64xf32>
    %c6 = arith.constant 6 : index
    %c0_24 = arith.constant 0 : index
    %c0_25 = arith.constant 0 : index
    %22 = vector.load %arg2[%c6, %c0_24, %c0_25] : memref<9x256x64xf32, #tpu.memory_space<vmem>>, vector<1x256x64xf32>
    %23 = vector.shape_cast %22 : vector<1x256x64xf32> to vector<256x64xf32>
    %cst_26 = arith.constant dense<0.000000e+00> : vector<4x64xf32>
    %24 = tpu.matmul %1, %23, %cst_26 {dimension_numbers = #tpu.dot_dimension_numbers<[1], [0], [0], [1], [0, 0, 1, 1], [], []>} : vector<4x256xf32>, vector<256x64xf32>, vector<4x64xf32> -> vector<4x64xf32>
    %c7 = arith.constant 7 : index
    %c0_27 = arith.constant 0 : index
    %c0_28 = arith.constant 0 : index
    %25 = vector.load %arg2[%c7, %c0_27, %c0_28] : memref<9x256x64xf32, #tpu.memory_space<vmem>>, vector<1x256x64xf32>
    %26 = vector.shape_cast %25 : vector<1x256x64xf32> to vector<256x64xf32>
    %cst_29 = arith.constant dense<0.000000e+00> : vector<4x64xf32>
    %27 = tpu.matmul %1, %26, %cst_29 {dimension_numbers = #tpu.dot_dimension_numbers<[1], [0], [0], [1], [0, 0, 1, 1], [], []>} : vector<4x256xf32>, vector<256x64xf32>, vector<4x64xf32> -> vector<4x64xf32>
    %c8 = arith.constant 8 : index
    %c0_30 = arith.constant 0 : index
    %c0_31 = arith.constant 0 : index
    %28 = vector.load %arg2[%c8, %c0_30, %c0_31] : memref<9x256x64xf32, #tpu.memory_space<vmem>>, vector<1x256x64xf32>
    %29 = vector.shape_cast %28 : vector<1x256x64xf32> to vector<256x64xf32>
    %cst_32 = arith.constant dense<0.000000e+00> : vector<4x64xf32>
    %30 = tpu.matmul %1, %29, %cst_32 {dimension_numbers = #tpu.dot_dimension_numbers<[1], [0], [0], [1], [0, 0, 1, 1], [], []>} : vector<4x256xf32>, vector<256x64xf32>, vector<4x64xf32> -> vector<4x64xf32>
    %31 = tpu.concatenate %6, %9, %12, %15, %18, %21, %24, %27, %30 in 0 : vector<4x64xf32>, vector<4x64xf32>, vector<4x64xf32>, vector<4x64xf32>, vector<4x64xf32>, vector<4x64xf32>, vector<4x64xf32>, vector<4x64xf32>, vector<4x64xf32> -> vector<36x64xf32>
    %cst_33 = arith.constant dense<0.000000e+00> : vector<4x64xf32>
    %32 = tpu.matmul %2, %31, %cst_33 {dimension_numbers = #tpu.dot_dimension_numbers<[1], [0], [0], [1], [0, 0, 1, 1], [], []>} : vector<4x36xf32>, vector<36x64xf32>, vector<4x64xf32> -> vector<4x64xf32>
    %33 = vector.broadcast %3 : vector<4x1xf32> to vector<4x64xf32>
    %34 = arith.addf %32, %33 : vector<4x64xf32>
    %cst_34 = arith.constant 0.000000e+00 : f32
    %35 = vector.broadcast %cst_34 : f32 to vector<4x64xf32>
    %36 = arith.maximumf %34, %35 : vector<4x64xf32>
    %c0_35 = arith.constant 0 : index
    %c0_36 = arith.constant 0 : index
    %37 = vector.load %arg6[%c0_35, %c0_36] : memref<4x36xf32, #tpu.memory_space<vmem>>, vector<4x36xf32>
    %c0_37 = arith.constant 0 : index
    %c0_38 = arith.constant 0 : index
    %38 = vector.load %arg7[%c0_37, %c0_38] : memref<4x1xf32, #tpu.memory_space<vmem>>, vector<4x1xf32>
    %c0_39 = arith.constant 0 : index
    %c0_40 = arith.constant 0 : index
    %c0_41 = arith.constant 0 : index
    %39 = vector.load %arg5[%c0_39, %c0_40, %c0_41] : memref<9x64x16xf32, #tpu.memory_space<vmem>>, vector<1x64x16xf32>
    %40 = vector.shape_cast %39 : vector<1x64x16xf32> to vector<64x16xf32>
    %cst_42 = arith.constant dense<0.000000e+00> : vector<4x16xf32>
    %41 = tpu.matmul %36, %40, %cst_42 {dimension_numbers = #tpu.dot_dimension_numbers<[1], [0], [0], [1], [0, 0, 1, 1], [], []>} : vector<4x64xf32>, vector<64x16xf32>, vector<4x16xf32> -> vector<4x16xf32>
    %c1_43 = arith.constant 1 : index
    %c0_44 = arith.constant 0 : index
    %c0_45 = arith.constant 0 : index
    %42 = vector.load %arg5[%c1_43, %c0_44, %c0_45] : memref<9x64x16xf32, #tpu.memory_space<vmem>>, vector<1x64x16xf32>
    %43 = vector.shape_cast %42 : vector<1x64x16xf32> to vector<64x16xf32>
    %cst_46 = arith.constant dense<0.000000e+00> : vector<4x16xf32>
    %44 = tpu.matmul %36, %43, %cst_46 {dimension_numbers = #tpu.dot_dimension_numbers<[1], [0], [0], [1], [0, 0, 1, 1], [], []>} : vector<4x64xf32>, vector<64x16xf32>, vector<4x16xf32> -> vector<4x16xf32>
    %c2_47 = arith.constant 2 : index
    %c0_48 = arith.constant 0 : index
    %c0_49 = arith.constant 0 : index
    %45 = vector.load %arg5[%c2_47, %c0_48, %c0_49] : memref<9x64x16xf32, #tpu.memory_space<vmem>>, vector<1x64x16xf32>
    %46 = vector.shape_cast %45 : vector<1x64x16xf32> to vector<64x16xf32>
    %cst_50 = arith.constant dense<0.000000e+00> : vector<4x16xf32>
    %47 = tpu.matmul %36, %46, %cst_50 {dimension_numbers = #tpu.dot_dimension_numbers<[1], [0], [0], [1], [0, 0, 1, 1], [], []>} : vector<4x64xf32>, vector<64x16xf32>, vector<4x16xf32> -> vector<4x16xf32>
    %c3_51 = arith.constant 3 : index
    %c0_52 = arith.constant 0 : index
    %c0_53 = arith.constant 0 : index
    %48 = vector.load %arg5[%c3_51, %c0_52, %c0_53] : memref<9x64x16xf32, #tpu.memory_space<vmem>>, vector<1x64x16xf32>
    %49 = vector.shape_cast %48 : vector<1x64x16xf32> to vector<64x16xf32>
    %cst_54 = arith.constant dense<0.000000e+00> : vector<4x16xf32>
    %50 = tpu.matmul %36, %49, %cst_54 {dimension_numbers = #tpu.dot_dimension_numbers<[1], [0], [0], [1], [0, 0, 1, 1], [], []>} : vector<4x64xf32>, vector<64x16xf32>, vector<4x16xf32> -> vector<4x16xf32>
    %c4_55 = arith.constant 4 : index
    %c0_56 = arith.constant 0 : index
    %c0_57 = arith.constant 0 : index
    %51 = vector.load %arg5[%c4_55, %c0_56, %c0_57] : memref<9x64x16xf32, #tpu.memory_space<vmem>>, vector<1x64x16xf32>
    %52 = vector.shape_cast %51 : vector<1x64x16xf32> to vector<64x16xf32>
    %cst_58 = arith.constant dense<0.000000e+00> : vector<4x16xf32>
    %53 = tpu.matmul %36, %52, %cst_58 {dimension_numbers = #tpu.dot_dimension_numbers<[1], [0], [0], [1], [0, 0, 1, 1], [], []>} : vector<4x64xf32>, vector<64x16xf32>, vector<4x16xf32> -> vector<4x16xf32>
    %c5_59 = arith.constant 5 : index
    %c0_60 = arith.constant 0 : index
    %c0_61 = arith.constant 0 : index
    %54 = vector.load %arg5[%c5_59, %c0_60, %c0_61] : memref<9x64x16xf32, #tpu.memory_space<vmem>>, vector<1x64x16xf32>
    %55 = vector.shape_cast %54 : vector<1x64x16xf32> to vector<64x16xf32>
    %cst_62 = arith.constant dense<0.000000e+00> : vector<4x16xf32>
    %56 = tpu.matmul %36, %55, %cst_62 {dimension_numbers = #tpu.dot_dimension_numbers<[1], [0], [0], [1], [0, 0, 1, 1], [], []>} : vector<4x64xf32>, vector<64x16xf32>, vector<4x16xf32> -> vector<4x16xf32>
    %c6_63 = arith.constant 6 : index
    %c0_64 = arith.constant 0 : index
    %c0_65 = arith.constant 0 : index
    %57 = vector.load %arg5[%c6_63, %c0_64, %c0_65] : memref<9x64x16xf32, #tpu.memory_space<vmem>>, vector<1x64x16xf32>
    %58 = vector.shape_cast %57 : vector<1x64x16xf32> to vector<64x16xf32>
    %cst_66 = arith.constant dense<0.000000e+00> : vector<4x16xf32>
    %59 = tpu.matmul %36, %58, %cst_66 {dimension_numbers = #tpu.dot_dimension_numbers<[1], [0], [0], [1], [0, 0, 1, 1], [], []>} : vector<4x64xf32>, vector<64x16xf32>, vector<4x16xf32> -> vector<4x16xf32>
    %c7_67 = arith.constant 7 : index
    %c0_68 = arith.constant 0 : index
    %c0_69 = arith.constant 0 : index
    %60 = vector.load %arg5[%c7_67, %c0_68, %c0_69] : memref<9x64x16xf32, #tpu.memory_space<vmem>>, vector<1x64x16xf32>
    %61 = vector.shape_cast %60 : vector<1x64x16xf32> to vector<64x16xf32>
    %cst_70 = arith.constant dense<0.000000e+00> : vector<4x16xf32>
    %62 = tpu.matmul %36, %61, %cst_70 {dimension_numbers = #tpu.dot_dimension_numbers<[1], [0], [0], [1], [0, 0, 1, 1], [], []>} : vector<4x64xf32>, vector<64x16xf32>, vector<4x16xf32> -> vector<4x16xf32>
    %c8_71 = arith.constant 8 : index
    %c0_72 = arith.constant 0 : index
    %c0_73 = arith.constant 0 : index
    %63 = vector.load %arg5[%c8_71, %c0_72, %c0_73] : memref<9x64x16xf32, #tpu.memory_space<vmem>>, vector<1x64x16xf32>
    %64 = vector.shape_cast %63 : vector<1x64x16xf32> to vector<64x16xf32>
    %cst_74 = arith.constant dense<0.000000e+00> : vector<4x16xf32>
    %65 = tpu.matmul %36, %64, %cst_74 {dimension_numbers = #tpu.dot_dimension_numbers<[1], [0], [0], [1], [0, 0, 1, 1], [], []>} : vector<4x64xf32>, vector<64x16xf32>, vector<4x16xf32> -> vector<4x16xf32>
    %66 = tpu.concatenate %41, %44, %47, %50, %53, %56, %59, %62, %65 in 0 : vector<4x16xf32>, vector<4x16xf32>, vector<4x16xf32>, vector<4x16xf32>, vector<4x16xf32>, vector<4x16xf32>, vector<4x16xf32>, vector<4x16xf32>, vector<4x16xf32> -> vector<36x16xf32>
    %cst_75 = arith.constant dense<0.000000e+00> : vector<4x16xf32>
    %67 = tpu.matmul %37, %66, %cst_75 {dimension_numbers = #tpu.dot_dimension_numbers<[1], [0], [0], [1], [0, 0, 1, 1], [], []>} : vector<4x36xf32>, vector<36x16xf32>, vector<4x16xf32> -> vector<4x16xf32>
    %68 = vector.broadcast %38 : vector<4x1xf32> to vector<4x16xf32>
    %69 = arith.addf %67, %68 : vector<4x16xf32>
    %cst_76 = arith.constant 0.000000e+00 : f32
    %70 = vector.broadcast %cst_76 : f32 to vector<4x16xf32>
    %71 = arith.maximumf %69, %70 : vector<4x16xf32>
    %c0_77 = arith.constant 0 : index
    %c0_78 = arith.constant 0 : index
    %c0_79 = arith.constant 0 : index
    %72 = vector.load %arg9[%c0_77, %c0_78, %c0_79] : memref<4x4x16xf32, #tpu.memory_space<vmem>>, vector<4x4x16xf32>
    %c0_80 = arith.constant 0 : index
    %c0_81 = arith.constant 0 : index
    %73 = vector.load %arg10[%c0_80, %c0_81] : memref<4x1xf32, #tpu.memory_space<vmem>>, vector<4x1xf32>
    %c0_82 = arith.constant 0 : index
    %c0_83 = arith.constant 0 : index
    %c0_84 = arith.constant 0 : index
    %74 = vector.load %arg8[%c0_82, %c0_83, %c0_84] : memref<9x1x16xf32, #tpu.memory_space<vmem>>, vector<9x1x16xf32>
    %cst_85 = arith.constant 0.000000e+00 : f32
    %75 = vector.broadcast %cst_85 : f32 to vector<4x1xf32>
    %76 = vector.extract_strided_slice %71 {offsets = [0, 0], sizes = [4, 15], strides = [1, 1]} : vector<4x16xf32> to vector<4x15xf32>
    %77 = tpu.concatenate %75, %76 in 1 : vector<4x1xf32>, vector<4x15xf32> -> vector<4x16xf32>
    %78 = vector.extract_strided_slice %74 {offsets = [3, 0, 0], sizes = [1, 1, 16], strides = [1, 1, 1]} : vector<9x1x16xf32> to vector<1x1x16xf32>
    %79 = vector.shape_cast %78 : vector<1x1x16xf32> to vector<1x16xf32>
    %80 = vector.broadcast %79 : vector<1x16xf32> to vector<4x16xf32>
    %81 = arith.mulf %77, %80 : vector<4x16xf32>
    %cst_86 = arith.constant 0.000000e+00 : f32
    %82 = vector.broadcast %cst_86 : f32 to vector<4x4xf32>
    %83 = vector.extract_strided_slice %71 {offsets = [0, 0], sizes = [4, 12], strides = [1, 1]} : vector<4x16xf32> to vector<4x12xf32>
    %84 = tpu.concatenate %82, %83 in 1 : vector<4x4xf32>, vector<4x12xf32> -> vector<4x16xf32>
    %85 = vector.extract_strided_slice %74 {offsets = [1, 0, 0], sizes = [1, 1, 16], strides = [1, 1, 1]} : vector<9x1x16xf32> to vector<1x1x16xf32>
    %86 = vector.shape_cast %85 : vector<1x1x16xf32> to vector<1x16xf32>
    %87 = vector.broadcast %86 : vector<1x16xf32> to vector<4x16xf32>
    %88 = arith.mulf %84, %87 : vector<4x16xf32>
    %cst_87 = arith.constant 0.000000e+00 : f32
    %89 = vector.broadcast %cst_87 : f32 to vector<4x5xf32>
    %90 = vector.extract_strided_slice %71 {offsets = [0, 0], sizes = [4, 11], strides = [1, 1]} : vector<4x16xf32> to vector<4x11xf32>
    %91 = tpu.concatenate %89, %90 in 1 : vector<4x5xf32>, vector<4x11xf32> -> vector<4x16xf32>
    %92 = vector.extract_strided_slice %74 {offsets = [0, 0, 0], sizes = [1, 1, 16], strides = [1, 1, 1]} : vector<9x1x16xf32> to vector<1x1x16xf32>
    %93 = vector.shape_cast %92 : vector<1x1x16xf32> to vector<1x16xf32>
    %94 = vector.broadcast %93 : vector<1x16xf32> to vector<4x16xf32>
    %95 = arith.mulf %91, %94 : vector<4x16xf32>
    %96 = tpu.concatenate %71, %81, %88, %95 in 0 : vector<4x16xf32>, vector<4x16xf32>, vector<4x16xf32>, vector<4x16xf32> -> vector<16x16xf32>
    %97 = vector.extract_strided_slice %72 {offsets = [0, 0, 0], sizes = [1, 4, 16], strides = [1, 1, 1]} : vector<4x4x16xf32> to vector<1x4x16xf32>
    %98 = vector.shape_cast %97 : vector<1x4x16xf32> to vector<4x16xf32>
    %cst_88 = arith.constant dense<0.000000e+00> : vector<4x16xf32>
    %99 = tpu.matmul %98, %96, %cst_88 {dimension_numbers = #tpu.dot_dimension_numbers<[1], [0], [0], [1], [0, 0, 1, 1], [], []>} : vector<4x16xf32>, vector<16x16xf32>, vector<4x16xf32> -> vector<4x16xf32>
    %100 = vector.broadcast %73 : vector<4x1xf32> to vector<4x16xf32>
    %101 = arith.addf %99, %100 : vector<4x16xf32>
    %cst_89 = arith.constant 0.000000e+00 : f32
    %102 = vector.broadcast %cst_89 : f32 to vector<4x16xf32>
    %103 = arith.maximumf %101, %102 : vector<4x16xf32>
    %104 = vector.extract_strided_slice %71 {offsets = [0, 1], sizes = [4, 15], strides = [1, 1]} : vector<4x16xf32> to vector<4x15xf32>
    %cst_90 = arith.constant 0.000000e+00 : f32
    %105 = vector.broadcast %cst_90 : f32 to vector<4x1xf32>
    %106 = tpu.concatenate %104, %105 in 1 : vector<4x15xf32>, vector<4x1xf32> -> vector<4x16xf32>
    %107 = vector.extract_strided_slice %74 {offsets = [5, 0, 0], sizes = [1, 1, 16], strides = [1, 1, 1]} : vector<9x1x16xf32> to vector<1x1x16xf32>
    %108 = vector.shape_cast %107 : vector<1x1x16xf32> to vector<1x16xf32>
    %109 = vector.broadcast %108 : vector<1x16xf32> to vector<4x16xf32>
    %110 = arith.mulf %106, %109 : vector<4x16xf32>
    %cst_91 = arith.constant 0.000000e+00 : f32
    %111 = vector.broadcast %cst_91 : f32 to vector<4x3xf32>
    %112 = vector.extract_strided_slice %71 {offsets = [0, 0], sizes = [4, 13], strides = [1, 1]} : vector<4x16xf32> to vector<4x13xf32>
    %113 = tpu.concatenate %111, %112 in 1 : vector<4x3xf32>, vector<4x13xf32> -> vector<4x16xf32>
    %114 = vector.extract_strided_slice %74 {offsets = [2, 0, 0], sizes = [1, 1, 16], strides = [1, 1, 1]} : vector<9x1x16xf32> to vector<1x1x16xf32>
    %115 = vector.shape_cast %114 : vector<1x1x16xf32> to vector<1x16xf32>
    %116 = vector.broadcast %115 : vector<1x16xf32> to vector<4x16xf32>
    %117 = arith.mulf %113, %116 : vector<4x16xf32>
    %118 = tpu.concatenate %71, %110, %88, %117 in 0 : vector<4x16xf32>, vector<4x16xf32>, vector<4x16xf32>, vector<4x16xf32> -> vector<16x16xf32>
    %119 = vector.extract_strided_slice %72 {offsets = [1, 0, 0], sizes = [1, 4, 16], strides = [1, 1, 1]} : vector<4x4x16xf32> to vector<1x4x16xf32>
    %120 = vector.shape_cast %119 : vector<1x4x16xf32> to vector<4x16xf32>
    %cst_92 = arith.constant dense<0.000000e+00> : vector<4x16xf32>
    %121 = tpu.matmul %120, %118, %cst_92 {dimension_numbers = #tpu.dot_dimension_numbers<[1], [0], [0], [1], [0, 0, 1, 1], [], []>} : vector<4x16xf32>, vector<16x16xf32>, vector<4x16xf32> -> vector<4x16xf32>
    %122 = vector.broadcast %73 : vector<4x1xf32> to vector<4x16xf32>
    %123 = arith.addf %121, %122 : vector<4x16xf32>
    %cst_93 = arith.constant 0.000000e+00 : f32
    %124 = vector.broadcast %cst_93 : f32 to vector<4x16xf32>
    %125 = arith.maximumf %123, %124 : vector<4x16xf32>
    %126 = vector.extract_strided_slice %71 {offsets = [0, 4], sizes = [4, 12], strides = [1, 1]} : vector<4x16xf32> to vector<4x12xf32>
    %cst_94 = arith.constant 0.000000e+00 : f32
    %127 = vector.broadcast %cst_94 : f32 to vector<4x4xf32>
    %128 = tpu.concatenate %126, %127 in 1 : vector<4x12xf32>, vector<4x4xf32> -> vector<4x16xf32>
    %129 = vector.extract_strided_slice %74 {offsets = [7, 0, 0], sizes = [1, 1, 16], strides = [1, 1, 1]} : vector<9x1x16xf32> to vector<1x1x16xf32>
    %130 = vector.shape_cast %129 : vector<1x1x16xf32> to vector<1x16xf32>
    %131 = vector.broadcast %130 : vector<1x16xf32> to vector<4x16xf32>
    %132 = arith.mulf %128, %131 : vector<4x16xf32>
    %133 = vector.extract_strided_slice %71 {offsets = [0, 3], sizes = [4, 13], strides = [1, 1]} : vector<4x16xf32> to vector<4x13xf32>
    %cst_95 = arith.constant 0.000000e+00 : f32
    %134 = vector.broadcast %cst_95 : f32 to vector<4x3xf32>
    %135 = tpu.concatenate %133, %134 in 1 : vector<4x13xf32>, vector<4x3xf32> -> vector<4x16xf32>
    %136 = vector.extract_strided_slice %74 {offsets = [6, 0, 0], sizes = [1, 1, 16], strides = [1, 1, 1]} : vector<9x1x16xf32> to vector<1x1x16xf32>
    %137 = vector.shape_cast %136 : vector<1x1x16xf32> to vector<1x16xf32>
    %138 = vector.broadcast %137 : vector<1x16xf32> to vector<4x16xf32>
    %139 = arith.mulf %135, %138 : vector<4x16xf32>
    %140 = tpu.concatenate %71, %81, %132, %139 in 0 : vector<4x16xf32>, vector<4x16xf32>, vector<4x16xf32>, vector<4x16xf32> -> vector<16x16xf32>
    %141 = vector.extract_strided_slice %72 {offsets = [2, 0, 0], sizes = [1, 4, 16], strides = [1, 1, 1]} : vector<4x4x16xf32> to vector<1x4x16xf32>
    %142 = vector.shape_cast %141 : vector<1x4x16xf32> to vector<4x16xf32>
    %cst_96 = arith.constant dense<0.000000e+00> : vector<4x16xf32>
    %143 = tpu.matmul %142, %140, %cst_96 {dimension_numbers = #tpu.dot_dimension_numbers<[1], [0], [0], [1], [0, 0, 1, 1], [], []>} : vector<4x16xf32>, vector<16x16xf32>, vector<4x16xf32> -> vector<4x16xf32>
    %144 = vector.broadcast %73 : vector<4x1xf32> to vector<4x16xf32>
    %145 = arith.addf %143, %144 : vector<4x16xf32>
    %cst_97 = arith.constant 0.000000e+00 : f32
    %146 = vector.broadcast %cst_97 : f32 to vector<4x16xf32>
    %147 = arith.maximumf %145, %146 : vector<4x16xf32>
    %148 = vector.extract_strided_slice %71 {offsets = [0, 5], sizes = [4, 11], strides = [1, 1]} : vector<4x16xf32> to vector<4x11xf32>
    %cst_98 = arith.constant 0.000000e+00 : f32
    %149 = vector.broadcast %cst_98 : f32 to vector<4x5xf32>
    %150 = tpu.concatenate %148, %149 in 1 : vector<4x11xf32>, vector<4x5xf32> -> vector<4x16xf32>
    %151 = vector.extract_strided_slice %74 {offsets = [8, 0, 0], sizes = [1, 1, 16], strides = [1, 1, 1]} : vector<9x1x16xf32> to vector<1x1x16xf32>
    %152 = vector.shape_cast %151 : vector<1x1x16xf32> to vector<1x16xf32>
    %153 = vector.broadcast %152 : vector<1x16xf32> to vector<4x16xf32>
    %154 = arith.mulf %150, %153 : vector<4x16xf32>
    %155 = tpu.concatenate %71, %110, %132, %154 in 0 : vector<4x16xf32>, vector<4x16xf32>, vector<4x16xf32>, vector<4x16xf32> -> vector<16x16xf32>
    %156 = vector.extract_strided_slice %72 {offsets = [3, 0, 0], sizes = [1, 4, 16], strides = [1, 1, 1]} : vector<4x4x16xf32> to vector<1x4x16xf32>
    %157 = vector.shape_cast %156 : vector<1x4x16xf32> to vector<4x16xf32>
    %cst_99 = arith.constant dense<0.000000e+00> : vector<4x16xf32>
    %158 = tpu.matmul %157, %155, %cst_99 {dimension_numbers = #tpu.dot_dimension_numbers<[1], [0], [0], [1], [0, 0, 1, 1], [], []>} : vector<4x16xf32>, vector<16x16xf32>, vector<4x16xf32> -> vector<4x16xf32>
    %159 = vector.broadcast %73 : vector<4x1xf32> to vector<4x16xf32>
    %160 = arith.addf %158, %159 : vector<4x16xf32>
    %cst_100 = arith.constant 0.000000e+00 : f32
    %161 = vector.broadcast %cst_100 : f32 to vector<4x16xf32>
    %162 = arith.maximumf %160, %161 : vector<4x16xf32>
    %163 = tpu.concatenate %103, %125, %147, %162 in 1 : vector<4x16xf32>, vector<4x16xf32>, vector<4x16xf32>, vector<4x16xf32> -> vector<4x64xf32>
    %c0_101 = arith.constant 0 : index
    %c0_102 = arith.constant 0 : index
    %164 = vector.load %arg11[%c0_101, %c0_102] : memref<64x64xf32, #tpu.memory_space<vmem>>, vector<64x64xf32>
    %cst_103 = arith.constant dense<0.000000e+00> : vector<4x64xf32>
    %165 = tpu.matmul %163, %164, %cst_103 {dimension_numbers = #tpu.dot_dimension_numbers<[1], [0], [0], [1], [0, 0, 1, 1], [], []>} : vector<4x64xf32>, vector<64x64xf32>, vector<4x64xf32> -> vector<4x64xf32>
    %166 = tpu.concatenate %165, %36 in 0 : vector<4x64xf32>, vector<4x64xf32> -> vector<8x64xf32>
    %c0_104 = arith.constant 0 : index
    %c0_105 = arith.constant 0 : index
    %c0_106 = arith.constant 0 : index
    %167 = vector.load %arg13[%c0_104, %c0_105, %c0_106] : memref<4x4x32xf32, #tpu.memory_space<vmem>>, vector<4x4x32xf32>
    %c0_107 = arith.constant 0 : index
    %c0_108 = arith.constant 0 : index
    %168 = vector.load %arg14[%c0_107, %c0_108] : memref<4x1xf32, #tpu.memory_space<vmem>>, vector<4x1xf32>
    %c0_109 = arith.constant 0 : index
    %c0_110 = arith.constant 0 : index
    %c0_111 = arith.constant 0 : index
    %169 = vector.load %arg12[%c0_109, %c0_110, %c0_111] : memref<9x1x64xf32, #tpu.memory_space<vmem>>, vector<9x1x64xf32>
    %cst_112 = arith.constant 0.000000e+00 : f32
    %170 = vector.broadcast %cst_112 : f32 to vector<8x1xf32>
    %171 = vector.extract_strided_slice %166 {offsets = [0, 0], sizes = [8, 63], strides = [1, 1]} : vector<8x64xf32> to vector<8x63xf32>
    %172 = tpu.concatenate %170, %171 in 1 : vector<8x1xf32>, vector<8x63xf32> -> vector<8x64xf32>
    %173 = vector.extract_strided_slice %169 {offsets = [3, 0, 0], sizes = [1, 1, 64], strides = [1, 1, 1]} : vector<9x1x64xf32> to vector<1x1x64xf32>
    %174 = vector.shape_cast %173 : vector<1x1x64xf32> to vector<1x64xf32>
    %175 = vector.broadcast %174 : vector<1x64xf32> to vector<8x64xf32>
    %176 = arith.mulf %172, %175 : vector<8x64xf32>
    %cst_113 = arith.constant 0.000000e+00 : f32
    %177 = vector.broadcast %cst_113 : f32 to vector<8x8xf32>
    %178 = vector.extract_strided_slice %166 {offsets = [0, 0], sizes = [8, 56], strides = [1, 1]} : vector<8x64xf32> to vector<8x56xf32>
    %179 = tpu.concatenate %177, %178 in 1 : vector<8x8xf32>, vector<8x56xf32> -> vector<8x64xf32>
    %180 = vector.extract_strided_slice %169 {offsets = [1, 0, 0], sizes = [1, 1, 64], strides = [1, 1, 1]} : vector<9x1x64xf32> to vector<1x1x64xf32>
    %181 = vector.shape_cast %180 : vector<1x1x64xf32> to vector<1x64xf32>
    %182 = vector.broadcast %181 : vector<1x64xf32> to vector<8x64xf32>
    %183 = arith.mulf %179, %182 : vector<8x64xf32>
    %cst_114 = arith.constant 0.000000e+00 : f32
    %184 = vector.broadcast %cst_114 : f32 to vector<8x9xf32>
    %185 = vector.extract_strided_slice %166 {offsets = [0, 0], sizes = [8, 55], strides = [1, 1]} : vector<8x64xf32> to vector<8x55xf32>
    %186 = tpu.concatenate %184, %185 in 1 : vector<8x9xf32>, vector<8x55xf32> -> vector<8x64xf32>
    %187 = vector.extract_strided_slice %169 {offsets = [0, 0, 0], sizes = [1, 1, 64], strides = [1, 1, 1]} : vector<9x1x64xf32> to vector<1x1x64xf32>
    %188 = vector.shape_cast %187 : vector<1x1x64xf32> to vector<1x64xf32>
    %189 = vector.broadcast %188 : vector<1x64xf32> to vector<8x64xf32>
    %190 = arith.mulf %186, %189 : vector<8x64xf32>
    %191 = tpu.concatenate %166, %176, %183, %190 in 0 : vector<8x64xf32>, vector<8x64xf32>, vector<8x64xf32>, vector<8x64xf32> -> vector<32x64xf32>
    %192 = vector.extract_strided_slice %167 {offsets = [0, 0, 0], sizes = [1, 4, 32], strides = [1, 1, 1]} : vector<4x4x32xf32> to vector<1x4x32xf32>
    %193 = vector.shape_cast %192 : vector<1x4x32xf32> to vector<4x32xf32>
    %cst_115 = arith.constant dense<0.000000e+00> : vector<4x64xf32>
    %194 = tpu.matmul %193, %191, %cst_115 {dimension_numbers = #tpu.dot_dimension_numbers<[1], [0], [0], [1], [0, 0, 1, 1], [], []>} : vector<4x32xf32>, vector<32x64xf32>, vector<4x64xf32> -> vector<4x64xf32>
    %195 = vector.broadcast %168 : vector<4x1xf32> to vector<4x64xf32>
    %196 = arith.addf %194, %195 : vector<4x64xf32>
    %cst_116 = arith.constant 0.000000e+00 : f32
    %197 = vector.broadcast %cst_116 : f32 to vector<4x64xf32>
    %198 = arith.maximumf %196, %197 : vector<4x64xf32>
    %199 = vector.extract_strided_slice %166 {offsets = [0, 1], sizes = [8, 63], strides = [1, 1]} : vector<8x64xf32> to vector<8x63xf32>
    %cst_117 = arith.constant 0.000000e+00 : f32
    %200 = vector.broadcast %cst_117 : f32 to vector<8x1xf32>
    %201 = tpu.concatenate %199, %200 in 1 : vector<8x63xf32>, vector<8x1xf32> -> vector<8x64xf32>
    %202 = vector.extract_strided_slice %169 {offsets = [5, 0, 0], sizes = [1, 1, 64], strides = [1, 1, 1]} : vector<9x1x64xf32> to vector<1x1x64xf32>
    %203 = vector.shape_cast %202 : vector<1x1x64xf32> to vector<1x64xf32>
    %204 = vector.broadcast %203 : vector<1x64xf32> to vector<8x64xf32>
    %205 = arith.mulf %201, %204 : vector<8x64xf32>
    %cst_118 = arith.constant 0.000000e+00 : f32
    %206 = vector.broadcast %cst_118 : f32 to vector<8x7xf32>
    %207 = vector.extract_strided_slice %166 {offsets = [0, 0], sizes = [8, 57], strides = [1, 1]} : vector<8x64xf32> to vector<8x57xf32>
    %208 = tpu.concatenate %206, %207 in 1 : vector<8x7xf32>, vector<8x57xf32> -> vector<8x64xf32>
    %209 = vector.extract_strided_slice %169 {offsets = [2, 0, 0], sizes = [1, 1, 64], strides = [1, 1, 1]} : vector<9x1x64xf32> to vector<1x1x64xf32>
    %210 = vector.shape_cast %209 : vector<1x1x64xf32> to vector<1x64xf32>
    %211 = vector.broadcast %210 : vector<1x64xf32> to vector<8x64xf32>
    %212 = arith.mulf %208, %211 : vector<8x64xf32>
    %213 = tpu.concatenate %166, %205, %183, %212 in 0 : vector<8x64xf32>, vector<8x64xf32>, vector<8x64xf32>, vector<8x64xf32> -> vector<32x64xf32>
    %214 = vector.extract_strided_slice %167 {offsets = [1, 0, 0], sizes = [1, 4, 32], strides = [1, 1, 1]} : vector<4x4x32xf32> to vector<1x4x32xf32>
    %215 = vector.shape_cast %214 : vector<1x4x32xf32> to vector<4x32xf32>
    %cst_119 = arith.constant dense<0.000000e+00> : vector<4x64xf32>
    %216 = tpu.matmul %215, %213, %cst_119 {dimension_numbers = #tpu.dot_dimension_numbers<[1], [0], [0], [1], [0, 0, 1, 1], [], []>} : vector<4x32xf32>, vector<32x64xf32>, vector<4x64xf32> -> vector<4x64xf32>
    %217 = vector.broadcast %168 : vector<4x1xf32> to vector<4x64xf32>
    %218 = arith.addf %216, %217 : vector<4x64xf32>
    %cst_120 = arith.constant 0.000000e+00 : f32
    %219 = vector.broadcast %cst_120 : f32 to vector<4x64xf32>
    %220 = arith.maximumf %218, %219 : vector<4x64xf32>
    %221 = vector.extract_strided_slice %166 {offsets = [0, 8], sizes = [8, 56], strides = [1, 1]} : vector<8x64xf32> to vector<8x56xf32>
    %cst_121 = arith.constant 0.000000e+00 : f32
    %222 = vector.broadcast %cst_121 : f32 to vector<8x8xf32>
    %223 = tpu.concatenate %221, %222 in 1 : vector<8x56xf32>, vector<8x8xf32> -> vector<8x64xf32>
    %224 = vector.extract_strided_slice %169 {offsets = [7, 0, 0], sizes = [1, 1, 64], strides = [1, 1, 1]} : vector<9x1x64xf32> to vector<1x1x64xf32>
    %225 = vector.shape_cast %224 : vector<1x1x64xf32> to vector<1x64xf32>
    %226 = vector.broadcast %225 : vector<1x64xf32> to vector<8x64xf32>
    %227 = arith.mulf %223, %226 : vector<8x64xf32>
    %228 = vector.extract_strided_slice %166 {offsets = [0, 7], sizes = [8, 57], strides = [1, 1]} : vector<8x64xf32> to vector<8x57xf32>
    %cst_122 = arith.constant 0.000000e+00 : f32
    %229 = vector.broadcast %cst_122 : f32 to vector<8x7xf32>
    %230 = tpu.concatenate %228, %229 in 1 : vector<8x57xf32>, vector<8x7xf32> -> vector<8x64xf32>
    %231 = vector.extract_strided_slice %169 {offsets = [6, 0, 0], sizes = [1, 1, 64], strides = [1, 1, 1]} : vector<9x1x64xf32> to vector<1x1x64xf32>
    %232 = vector.shape_cast %231 : vector<1x1x64xf32> to vector<1x64xf32>
    %233 = vector.broadcast %232 : vector<1x64xf32> to vector<8x64xf32>
    %234 = arith.mulf %230, %233 : vector<8x64xf32>
    %235 = tpu.concatenate %166, %176, %227, %234 in 0 : vector<8x64xf32>, vector<8x64xf32>, vector<8x64xf32>, vector<8x64xf32> -> vector<32x64xf32>
    %236 = vector.extract_strided_slice %167 {offsets = [2, 0, 0], sizes = [1, 4, 32], strides = [1, 1, 1]} : vector<4x4x32xf32> to vector<1x4x32xf32>
    %237 = vector.shape_cast %236 : vector<1x4x32xf32> to vector<4x32xf32>
    %cst_123 = arith.constant dense<0.000000e+00> : vector<4x64xf32>
    %238 = tpu.matmul %237, %235, %cst_123 {dimension_numbers = #tpu.dot_dimension_numbers<[1], [0], [0], [1], [0, 0, 1, 1], [], []>} : vector<4x32xf32>, vector<32x64xf32>, vector<4x64xf32> -> vector<4x64xf32>
    %239 = vector.broadcast %168 : vector<4x1xf32> to vector<4x64xf32>
    %240 = arith.addf %238, %239 : vector<4x64xf32>
    %cst_124 = arith.constant 0.000000e+00 : f32
    %241 = vector.broadcast %cst_124 : f32 to vector<4x64xf32>
    %242 = arith.maximumf %240, %241 : vector<4x64xf32>
    %243 = vector.extract_strided_slice %166 {offsets = [0, 9], sizes = [8, 55], strides = [1, 1]} : vector<8x64xf32> to vector<8x55xf32>
    %cst_125 = arith.constant 0.000000e+00 : f32
    %244 = vector.broadcast %cst_125 : f32 to vector<8x9xf32>
    %245 = tpu.concatenate %243, %244 in 1 : vector<8x55xf32>, vector<8x9xf32> -> vector<8x64xf32>
    %246 = vector.extract_strided_slice %169 {offsets = [8, 0, 0], sizes = [1, 1, 64], strides = [1, 1, 1]} : vector<9x1x64xf32> to vector<1x1x64xf32>
    %247 = vector.shape_cast %246 : vector<1x1x64xf32> to vector<1x64xf32>
    %248 = vector.broadcast %247 : vector<1x64xf32> to vector<8x64xf32>
    %249 = arith.mulf %245, %248 : vector<8x64xf32>
    %250 = tpu.concatenate %166, %205, %227, %249 in 0 : vector<8x64xf32>, vector<8x64xf32>, vector<8x64xf32>, vector<8x64xf32> -> vector<32x64xf32>
    %251 = vector.extract_strided_slice %167 {offsets = [3, 0, 0], sizes = [1, 4, 32], strides = [1, 1, 1]} : vector<4x4x32xf32> to vector<1x4x32xf32>
    %252 = vector.shape_cast %251 : vector<1x4x32xf32> to vector<4x32xf32>
    %cst_126 = arith.constant dense<0.000000e+00> : vector<4x64xf32>
    %253 = tpu.matmul %252, %250, %cst_126 {dimension_numbers = #tpu.dot_dimension_numbers<[1], [0], [0], [1], [0, 0, 1, 1], [], []>} : vector<4x32xf32>, vector<32x64xf32>, vector<4x64xf32> -> vector<4x64xf32>
    %254 = vector.broadcast %168 : vector<4x1xf32> to vector<4x64xf32>
    %255 = arith.addf %253, %254 : vector<4x64xf32>
    %cst_127 = arith.constant 0.000000e+00 : f32
    %256 = vector.broadcast %cst_127 : f32 to vector<4x64xf32>
    %257 = arith.maximumf %255, %256 : vector<4x64xf32>
    %258 = tpu.concatenate %198, %220, %242, %257 in 1 : vector<4x64xf32>, vector<4x64xf32>, vector<4x64xf32>, vector<4x64xf32> -> vector<4x256xf32>
    %c0_128 = arith.constant 0 : index
    %c0_129 = arith.constant 0 : index
    %259 = vector.load %arg15[%c0_128, %c0_129] : memref<256x256xf32, #tpu.memory_space<vmem>>, vector<256x256xf32>
    %cst_130 = arith.constant dense<0.000000e+00> : vector<4x256xf32>
    %260 = tpu.matmul %258, %259, %cst_130 {dimension_numbers = #tpu.dot_dimension_numbers<[1], [0], [0], [1], [0, 0, 1, 1], [], []>} : vector<4x256xf32>, vector<256x256xf32>, vector<4x256xf32> -> vector<4x256xf32>
    %c0_131 = arith.constant 0 : index
    %c0_132 = arith.constant 0 : index
    %c0_133 = arith.constant 0 : index
    %261 = vector.load %arg16[%c0_131, %c0_132, %c0_133] : memref<1x4x256xf32, #tpu.memory_space<vmem>>, vector<1x4x256xf32>
    %262 = vector.shape_cast %261 : vector<1x4x256xf32> to vector<4x256xf32>
    %263 = vector.shape_cast %260 : vector<4x256xf32> to vector<1x4x256xf32>
    tpu.vector_store %arg16[%c0_131, %c0_132, %c0_133], %263 {strides = array<i32>} : memref<1x4x256xf32, #tpu.memory_space<vmem>>, vector<1x4x256xf32>,
    return
  }
  func.func @transform_0(%arg0: i32) -> (i32, i32, i32) {
    %c0_i32 = arith.constant 0 : i32
    %c0_i32_0 = arith.constant 0 : i32
    %c0_i32_1 = arith.constant 0 : i32
    return %arg0, %c0_i32, %c0_i32_0 : i32, i32, i32
  }
  func.func @transform_1(%arg0: i32) -> (i32, i32, i32) {
    %c0_i32 = arith.constant 0 : i32
    %c0_i32_0 = arith.constant 0 : i32
    %c0_i32_1 = arith.constant 0 : i32
    %c0_i32_2 = arith.constant 0 : i32
    return %c0_i32, %c0_i32_0, %c0_i32_1 : i32, i32, i32
  }
  func.func @transform_2(%arg0: i32) -> (i32, i32) {
    %c0_i32 = arith.constant 0 : i32
    %c0_i32_0 = arith.constant 0 : i32
    %c0_i32_1 = arith.constant 0 : i32
    return %c0_i32, %c0_i32_0 : i32, i32
  }
  func.func @transform_3(%arg0: i32) -> (i32, i32) {
    %c0_i32 = arith.constant 0 : i32
    %c0_i32_0 = arith.constant 0 : i32
    %c0_i32_1 = arith.constant 0 : i32
    return %c0_i32, %c0_i32_0 : i32, i32
  }
  func.func @transform_4(%arg0: i32) -> (i32, i32, i32) {
    %c0_i32 = arith.constant 0 : i32
    %c0_i32_0 = arith.constant 0 : i32
    %c0_i32_1 = arith.constant 0 : i32
    %c0_i32_2 = arith.constant 0 : i32
    return %c0_i32, %c0_i32_0, %c0_i32_1 : i32, i32, i32
  }
  func.func @transform_5(%arg0: i32) -> (i32, i32) {
    %c0_i32 = arith.constant 0 : i32
    %c0_i32_0 = arith.constant 0 : i32
    %c0_i32_1 = arith.constant 0 : i32
    return %c0_i32, %c0_i32_0 : i32, i32
  }
  func.func @transform_6(%arg0: i32) -> (i32, i32) {
    %c0_i32 = arith.constant 0 : i32
    %c0_i32_0 = arith.constant 0 : i32
    %c0_i32_1 = arith.constant 0 : i32
    return %c0_i32, %c0_i32_0 : i32, i32
  }
  func.func @transform_7(%arg0: i32) -> (i32, i32, i32) {
    %c0_i32 = arith.constant 0 : i32
    %c0_i32_0 = arith.constant 0 : i32
    %c0_i32_1 = arith.constant 0 : i32
    %c0_i32_2 = arith.constant 0 : i32
    return %c0_i32, %c0_i32_0, %c0_i32_1 : i32, i32, i32
  }
  func.func @transform_8(%arg0: i32) -> (i32, i32, i32) {
    %c0_i32 = arith.constant 0 : i32
    %c0_i32_0 = arith.constant 0 : i32
    %c0_i32_1 = arith.constant 0 : i32
    %c0_i32_2 = arith.constant 0 : i32
    return %c0_i32, %c0_i32_0, %c0_i32_1 : i32, i32, i32
  }
  func.func @transform_9(%arg0: i32) -> (i32, i32) {
    %c0_i32 = arith.constant 0 : i32
    %c0_i32_0 = arith.constant 0 : i32
    %c0_i32_1 = arith.constant 0 : i32
    return %c0_i32, %c0_i32_0 : i32, i32
  }
  func.func @transform_10(%arg0: i32) -> (i32, i32) {
    %c0_i32 = arith.constant 0 : i32
    %c0_i32_0 = arith.constant 0 : i32
    %c0_i32_1 = arith.constant 0 : i32
    return %c0_i32, %c0_i32_0 : i32, i32
  }
  func.func @transform_11(%arg0: i32) -> (i32, i32, i32) {
    %c0_i32 = arith.constant 0 : i32
    %c0_i32_0 = arith.constant 0 : i32
    %c0_i32_1 = arith.constant 0 : i32
    %c0_i32_2 = arith.constant 0 : i32
    return %c0_i32, %c0_i32_0, %c0_i32_1 : i32, i32, i32
  }
  func.func @transform_12(%arg0: i32) -> (i32, i32, i32) {
    %c0_i32 = arith.constant 0 : i32
    %c0_i32_0 = arith.constant 0 : i32
    %c0_i32_1 = arith.constant 0 : i32
    %c0_i32_2 = arith.constant 0 : i32
    return %c0_i32, %c0_i32_0, %c0_i32_1 : i32, i32, i32
  }
  func.func @transform_13(%arg0: i32) -> (i32, i32) {
    %c0_i32 = arith.constant 0 : i32
    %c0_i32_0 = arith.constant 0 : i32
    %c0_i32_1 = arith.constant 0 : i32
    return %c0_i32, %c0_i32_0 : i32, i32
  }
  func.func @transform_14(%arg0: i32) -> (i32, i32) {
    %c0_i32 = arith.constant 0 : i32
    %c0_i32_0 = arith.constant 0 : i32
    %c0_i32_1 = arith.constant 0 : i32
    return %c0_i32, %c0_i32_0 : i32, i32
  }
  func.func @transform_15(%arg0: i32) -> (i32, i32, i32) {
    %c0_i32 = arith.constant 0 : i32
    %c0_i32_0 = arith.constant 0 : i32
    %c0_i32_1 = arith.constant 0 : i32
    return %arg0, %c0_i32, %c0_i32_0 : i32, i32, i32
  }
}

</mosaic_0001>

<llo_original>
// kernel: ublock_forward.1
$region0: #{ublock_forward.1}
  #allocation0 [shape = 'u32[]', space=smem, size = 0x4, offset = 0x4, fixed_abs, tag = 'smem constant byte address 0x4 - core index']
  #allocation1 [shape = 'u32[144,128]{1,0:T(1,128)}', space=vmem, size = 0x12000, scoped, tag = 'internal scratch']
  %s0 = inlined_call_operand.vmem [shape: f32[2,4,256], index: 0, kind: input, shape index: {}]
  %s1 = inlined_call_operand.vmem [shape: f32[9,256,64], index: 1, kind: input, shape index: {}]
  %s2 = inlined_call_operand.vmem [shape: f32[4,36], index: 2, kind: input, shape index: {}]
  %s3 = inlined_call_operand.vmem [shape: f32[4,1], index: 3, kind: input, shape index: {}]
  %s4 = inlined_call_operand.vmem [shape: f32[9,64,16], index: 4, kind: input, shape index: {}]
  %s5 = inlined_call_operand.vmem [shape: f32[4,36], index: 5, kind: input, shape index: {}]
  %s6 = inlined_call_operand.vmem [shape: f32[4,1], index: 6, kind: input, shape index: {}]
  %s7 = inlined_call_operand.vmem [shape: f32[9,1,16], index: 7, kind: input, shape index: {}]
  %s8 = inlined_call_operand.vmem [shape: f32[4,4,16], index: 8, kind: input, shape index: {}]
  %s9 = inlined_call_operand.vmem [shape: f32[4,1], index: 9, kind: input, shape index: {}]
  %s10 = inlined_call_operand.vmem [shape: f32[64,64], index: 10, kind: input, shape index: {}]
  %s11 = inlined_call_operand.vmem [shape: f32[9,1,64], index: 11, kind: input, shape index: {}]
  %s12 = inlined_call_operand.vmem [shape: f32[4,4,32], index: 12, kind: input, shape index: {}]
  %s13 = inlined_call_operand.vmem [shape: f32[4,1], index: 13, kind: input, shape index: {}]
  %s14 = inlined_call_operand.vmem [shape: f32[256,256], index: 14, kind: input, shape index: {}]
  %s15 = inlined_call_operand.vmem [shape: f32[2,4,256], index: 15, kind: output, shape index: {}]
  %s16 = sld [smem:[#allocation0]]
  $region93: #{ublock_forward.1} parent=0
    _
  %s18 = ssub.s32 1, %s16
  %s19 = scalar_select 0, %s18, %s16
  loop: start=0, step=1, limit=4
  $region2: #{ublock_forward.1} parent=0 // loop_pre_header
    _
  $region3: #{ublock_forward.1} parent=0 // loop_header
    %s21 = sphi 0, %s25
    %p22 = scmp.ge.s32.totalorder %s21, 4
    %s31 = sphi 0, %s33
    %s34 = sphi 0, %s31
    %s35 = sphi 0, %s34
    %s51 = sphi 0, %s35
    %s55 = sphi 0, %s55
    %s57 = sphi 0, %s55
    %s58 = sphi 0, %s57
    %s72 = sphi 0, %s58
    %s76 = sphi 0, %s76
    %s78 = sphi 0, %s76
    %s79 = sphi 0, %s78
    %s93 = sphi 0, %s79
    %s97 = sphi 0, %s97
    %s99 = sphi 0, %s97
    %s100 = sphi 0, %s99
    %s114 = sphi 0, %s100
    %s118 = sphi 0, %s118
    %s120 = sphi 0, %s118
    %s121 = sphi 0, %s120
    %s135 = sphi 0, %s121
    %s139 = sphi 0, %s139
    %s141 = sphi 0, %s139
    %s142 = sphi 0, %s141
    %s156 = sphi 0, %s142
    %s160 = sphi 0, %s160
    %s162 = sphi 0, %s160
    %s163 = sphi 0, %s162
    %s177 = sphi 0, %s163
    %s181 = sphi 0, %s181
    %s183 = sphi 0, %s181
    %s184 = sphi 0, %s183
    %s198 = sphi 0, %s184
    %s202 = sphi 0, %s202
    %s204 = sphi 0, %s202
    %s205 = sphi 0, %s204
    %s219 = sphi 0, %s205
    %s223 = sphi 0, %s223
    %s225 = sphi 0, %s223
    %s226 = sphi 0, %s225
    %s240 = sphi 0, %s226
    %s244 = sphi 0, %s244
    %s246 = sphi 0, %s244
    %s247 = sphi 0, %s246
    %s261 = sphi 0, %s247
    %s265 = sphi 0, %s265
    %s267 = sphi 0, %s265
    %s268 = sphi 0, %s267
    %s282 = sphi 0, %s268
    %s286 = sphi 0, %s286
    %s288 = sphi 0, %s286
    %s289 = sphi 0, %s288
    %s303 = sphi 0, %s289
    %s307 = sphi 0, %s307
    %s309 = sphi 0, %s307
    %s310 = sphi 0, %s309
    %s324 = sphi 0, %s310
    %s328 = sphi 0, %s328
    %s330 = sphi 0, %s328
    %s331 = sphi 0, %s330
    %s345 = sphi 0, %s331
    %s351 = sphi 0, %s353
    %s354 = sphi 0, %s351
    %s355 = sphi 0, %s354
    %s371 = sphi 0, %s355
  $region4: #{ublock_forward.1} parent=0 // loop_header_branch
    %24 = sbr.rel (%p22) target = $region8
  $region5: #{ublock_forward.1} parent=0 // loop_body
    %s26 = ssub.s32 %s21, 1
    %s27 = ssub.s32 %s21, 2
    %s28 = sadd.s32 %s21, 1
    %s29 = ssub.s32 %s21, %s28
    %p30 = scmp.eq.s32.totalorder %s29, 0
    %s32 = sadd.s32 %s31, 1
    %s33 = scalar_select %p30, %s31, %s32
    %p36 = pneg %p30
    %p37 = scmp.eq.s32.totalorder %s21, 1
    %p38 = por %p36, %p37
    %p39 = scmp.ne.s32.totalorder %s31, %s34
    %p40 = scmp.eq.s32.totalorder %s21, 0
    %p41 = por %p39, %p40
    %p42 = scmp.ne.s32.totalorder %s31, %s34
    %p43 = scmp.eq.s32.totalorder %s26, 1
    %p44 = por %p42, %p43
    %p45 = scmp.ne.s32.totalorder %s34, %s35
    %p46 = scmp.eq.s32.totalorder %s26, 0
    %p47 = por %p45, %p46
    %p48 = scmp.ne.s32.totalorder %s34, %s35
    %p49 = scmp.eq.s32.totalorder %s27, 1
    %p50 = por %p48, %p49
    %p52 = scmp.ne.s32.totalorder %s35, %s51
    %p53 = scmp.eq.s32.totalorder %s27, 0
    %p54 = por %p52, %p53
    %s56 = sadd.s32 %s55, 1
    %p59 = scmp.eq.s32.totalorder %s21, 1
    %p60 = scmp.ne.s32.totalorder %s55, %s57
    %p61 = scmp.eq.s32.totalorder %s21, 0
    %p62 = por %p60, %p61
    %p63 = scmp.ne.s32.totalorder %s55, %s57
    %p64 = scmp.eq.s32.totalorder %s26, 1
    %p65 = por %p63, %p64
    %p66 = scmp.ne.s32.totalorder %s57, %s58
    %p67 = scmp.eq.s32.totalorder %s26, 0
    %p68 = por %p66, %p67
    %p69 = scmp.ne.s32.totalorder %s57, %s58
    %p70 = scmp.eq.s32.totalorder %s27, 1
    %p71 = por %p69, %p70
    %p73 = scmp.ne.s32.totalorder %s58, %s72
    %p74 = scmp.eq.s32.totalorder %s27, 0
    %p75 = por %p73, %p74
    %s77 = sadd.s32 %s76, 1
    %p80 = scmp.eq.s32.totalorder %s21, 1
    %p81 = scmp.ne.s32.totalorder %s76, %s78
    %p82 = scmp.eq.s32.totalorder %s21, 0
    %p83 = por %p81, %p82
    %p84 = scmp.ne.s32.totalorder %s76, %s78
    %p85 = scmp.eq.s32.totalorder %s26, 1
    %p86 = por %p84, %p85
    %p87 = scmp.ne.s32.totalorder %s78, %s79
    %p88 = scmp.eq.s32.totalorder %s26, 0
    %p89 = por %p87, %p88
    %p90 = scmp.ne.s32.totalorder %s78, %s79
    %p91 = scmp.eq.s32.totalorder %s27, 1
    %p92 = por %p90, %p91
    %p94 = scmp.ne.s32.totalorder %s79, %s93
    %p95 = scmp.eq.s32.totalorder %s27, 0
    %p96 = por %p94, %p95
    %s98 = sadd.s32 %s97, 1
    %p101 = scmp.eq.s32.totalorder %s21, 1
    %p102 = scmp.ne.s32.totalorder %s97, %s99
    %p103 = scmp.eq.s32.totalorder %s21, 0
    %p104 = por %p102, %p103
    %p105 = scmp.ne.s32.totalorder %s97, %s99
    %p106 = scmp.eq.s32.totalorder %s26, 1
    %p107 = por %p105, %p106
    %p108 = scmp.ne.s32.totalorder %s99, %s100
    %p109 = scmp.eq.s32.totalorder %s26, 0
    %p110 = por %p108, %p109
    %p111 = scmp.ne.s32.totalorder %s99, %s100
    %p112 = scmp.eq.s32.totalorder %s27, 1
    %p113 = por %p111, %p112
    %p115 = scmp.ne.s32.totalorder %s100, %s114
    %p116 = scmp.eq.s32.totalorder %s27, 0
    %p117 = por %p115, %p116
    %s119 = sadd.s32 %s118, 1
    %p122 = scmp.eq.s32.totalorder %s21, 1
    %p123 = scmp.ne.s32.totalorder %s118, %s120
    %p124 = scmp.eq.s32.totalorder %s21, 0
    %p125 = por %p123, %p124
    %p126 = scmp.ne.s32.totalorder %s118, %s120
    %p127 = scmp.eq.s32.totalorder %s26, 1
    %p128 = por %p126, %p127
    %p129 = scmp.ne.s32.totalorder %s120, %s121
    %p130 = scmp.eq.s32.totalorder %s26, 0
    %p131 = por %p129, %p130
    %p132 = scmp.ne.s32.totalorder %s120, %s121
    %p133 = scmp.eq.s32.totalorder %s27, 1
    %p134 = por %p132, %p133
    %p136 = scmp.ne.s32.totalorder %s121, %s135
    %p137 = scmp.eq.s32.totalorder %s27, 0
    %p138 = por %p136, %p137
    %s140 = sadd.s32 %s139, 1
    %p143 = scmp.eq.s32.totalorder %s21, 1
    %p144 = scmp.ne.s32.totalorder %s139, %s141
    %p145 = scmp.eq.s32.totalorder %s21, 0
    %p146 = por %p144, %p145
    %p147 = scmp.ne.s32.totalorder %s139, %s141
    %p148 = scmp.eq.s32.totalorder %s26, 1
    %p149 = por %p147, %p148
    %p150 = scmp.ne.s32.totalorder %s141, %s142
    %p151 = scmp.eq.s32.totalorder %s26, 0
    %p152 = por %p150, %p151
    %p153 = scmp.ne.s32.totalorder %s141, %s142
    %p154 = scmp.eq.s32.totalorder %s27, 1
    %p155 = por %p153, %p154
    %p157 = scmp.ne.s32.totalorder %s142, %s156
    %p158 = scmp.eq.s32.totalorder %s27, 0
    %p159 = por %p157, %p158
    %s161 = sadd.s32 %s160, 1
    %p164 = scmp.eq.s32.totalorder %s21, 1
    %p165 = scmp.ne.s32.totalorder %s160, %s162
    %p166 = scmp.eq.s32.totalorder %s21, 0
    %p167 = por %p165, %p166
    %p168 = scmp.ne.s32.totalorder %s160, %s162
    %p169 = scmp.eq.s32.totalorder %s26, 1
    %p170 = por %p168, %p169
    %p171 = scmp.ne.s32.totalorder %s162, %s163
    %p172 = scmp.eq.s32.totalorder %s26, 0
    %p173 = por %p171, %p172
    %p174 = scmp.ne.s32.totalorder %s162, %s163
    %p175 = scmp.eq.s32.totalorder %s27, 1
    %p176 = por %p174, %p175
    %p178 = scmp.ne.s32.totalorder %s163, %s177
    %p179 = scmp.eq.s32.totalorder %s27, 0
    %p180 = por %p178, %p179
    %s182 = sadd.s32 %s181, 1
    %p185 = scmp.eq.s32.totalorder %s21, 1
    %p186 = scmp.ne.s32.totalorder %s181, %s183
    %p187 = scmp.eq.s32.totalorder %s21, 0
    %p188 = por %p186, %p187
    %p189 = scmp.ne.s32.totalorder %s181, %s183
    %p190 = scmp.eq.s32.totalorder %s26, 1
    %p191 = por %p189, %p190
    %p192 = scmp.ne.s32.totalorder %s183, %s184
    %p193 = scmp.eq.s32.totalorder %s26, 0
    %p194 = por %p192, %p193
    %p195 = scmp.ne.s32.totalorder %s183, %s184
    %p196 = scmp.eq.s32.totalorder %s27, 1
    %p197 = por %p195, %p196
    %p199 = scmp.ne.s32.totalorder %s184, %s198
    %p200 = scmp.eq.s32.totalorder %s27, 0
    %p201 = por %p199, %p200
    %s203 = sadd.s32 %s202, 1
    %p206 = scmp.eq.s32.totalorder %s21, 1
    %p207 = scmp.ne.s32.totalorder %s202, %s204
    %p208 = scmp.eq.s32.totalorder %s21, 0
    %p209 = por %p207, %p208
    %p210 = scmp.ne.s32.totalorder %s202, %s204
    %p211 = scmp.eq.s32.totalorder %s26, 1
    %p212 = por %p210, %p211
    %p213 = scmp.ne.s32.totalorder %s204, %s205
    %p214 = scmp.eq.s32.totalorder %s26, 0
    %p215 = por %p213, %p214
    %p216 = scmp.ne.s32.totalorder %s204, %s205
    %p217 = scmp.eq.s32.totalorder %s27, 1
    %p218 = por %p216, %p217
    %p220 = scmp.ne.s32.totalorder %s205, %s219
    %p221 = scmp.eq.s32.totalorder %s27, 0
    %p222 = por %p220, %p221
    %s224 = sadd.s32 %s223, 1
    %p227 = scmp.eq.s32.totalorder %s21, 1
    %p228 = scmp.ne.s32.totalorder %s223, %s225
    %p229 = scmp.eq.s32.totalorder %s21, 0
    %p230 = por %p228, %p229
    %p231 = scmp.ne.s32.totalorder %s223, %s225
    %p232 = scmp.eq.s32.totalorder %s26, 1
    %p233 = por %p231, %p232
    %p234 = scmp.ne.s32.totalorder %s225, %s226
    %p235 = scmp.eq.s32.totalorder %s26, 0
    %p236 = por %p234, %p235
    %p237 = scmp.ne.s32.totalorder %s225, %s226
    %p238 = scmp.eq.s32.totalorder %s27, 1
    %p239 = por %p237, %p238
    %p241 = scmp.ne.s32.totalorder %s226, %s240
    %p242 = scmp.eq.s32.totalorder %s27, 0
    %p243 = por %p241, %p242
    %s245 = sadd.s32 %s244, 1
    %p248 = scmp.eq.s32.totalorder %s21, 1
    %p249 = scmp.ne.s32.totalorder %s244, %s246
    %p250 = scmp.eq.s32.totalorder %s21, 0
    %p251 = por %p249, %p250
    %p252 = scmp.ne.s32.totalorder %s244, %s246
    %p253 = scmp.eq.s32.totalorder %s26, 1
    %p254 = por %p252, %p253
    %p255 = scmp.ne.s32.totalorder %s246, %s247
    %p256 = scmp.eq.s32.totalorder %s26, 0
    %p257 = por %p255, %p256
    %p258 = scmp.ne.s32.totalorder %s246, %s247
    %p259 = scmp.eq.s32.totalorder %s27, 1
    %p260 = por %p258, %p259
    %p262 = scmp.ne.s32.totalorder %s247, %s261
    %p263 = scmp.eq.s32.totalorder %s27, 0
    %p264 = por %p262, %p263
    %s266 = sadd.s32 %s265, 1
    %p269 = scmp.eq.s32.totalorder %s21, 1
    %p270 = scmp.ne.s32.totalorder %s265, %s267
    %p271 = scmp.eq.s32.totalorder %s21, 0
    %p272 = por %p270, %p271
    %p273 = scmp.ne.s32.totalorder %s265, %s267
    %p274 = scmp.eq.s32.totalorder %s26, 1
    %p275 = por %p273, %p274
    %p276 = scmp.ne.s32.totalorder %s267, %s268
    %p277 = scmp.eq.s32.totalorder %s26, 0
    %p278 = por %p276, %p277
    %p279 = scmp.ne.s32.totalorder %s267, %s268
    %p280 = scmp.eq.s32.totalorder %s27, 1
    %p281 = por %p279, %p280
    %p283 = scmp.ne.s32.totalorder %s268, %s282
    %p284 = scmp.eq.s32.totalorder %s27, 0
    %p285 = por %p283, %p284
    %s287 = sadd.s32 %s286, 1
    %p290 = scmp.eq.s32.totalorder %s21, 1
    %p291 = scmp.ne.s32.totalorder %s286, %s288
    %p292 = scmp.eq.s32.totalorder %s21, 0
    %p293 = por %p291, %p292
    %p294 = scmp.ne.s32.totalorder %s286, %s288
    %p295 = scmp.eq.s32.totalorder %s26, 1
    %p296 = por %p294, %p295
    %p297 = scmp.ne.s32.totalorder %s288, %s289
    %p298 = scmp.eq.s32.totalorder %s26, 0
    %p299 = por %p297, %p298
    %p300 = scmp.ne.s32.totalorder %s288, %s289
    %p301 = scmp.eq.s32.totalorder %s27, 1
    %p302 = por %p300, %p301
    %p304 = scmp.ne.s32.totalorder %s289, %s303
    %p305 = scmp.eq.s32.totalorder %s27, 0
    %p306 = por %p304, %p305
    %s308 = sadd.s32 %s307, 1
    %p311 = scmp.eq.s32.totalorder %s21, 1
    %p312 = scmp.ne.s32.totalorder %s307, %s309
    %p313 = scmp.eq.s32.totalorder %s21, 0
    %p314 = por %p312, %p313
    %p315 = scmp.ne.s32.totalorder %s307, %s309
    %p316 = scmp.eq.s32.totalorder %s26, 1
    %p317 = por %p315, %p316
    %p318 = scmp.ne.s32.totalorder %s309, %s310
    %p319 = scmp.eq.s32.totalorder %s26, 0
    %p320 = por %p318, %p319
    %p321 = scmp.ne.s32.totalorder %s309, %s310
    %p322 = scmp.eq.s32.totalorder %s27, 1
    %p323 = por %p321, %p322
    %p325 = scmp.ne.s32.totalorder %s310, %s324
    %p326 = scmp.eq.s32.totalorder %s27, 0
    %p327 = por %p325, %p326
    %s329 = sadd.s32 %s328, 1
    %p332 = scmp.eq.s32.totalorder %s21, 1
    %p333 = scmp.ne.s32.totalorder %s328, %s330
    %p334 = scmp.eq.s32.totalorder %s21, 0
    %p335 = por %p333, %p334
    %p336 = scmp.ne.s32.totalorder %s328, %s330
    %p337 = scmp.eq.s32.totalorder %s26, 1
    %p338 = por %p336, %p337
    %p339 = scmp.ne.s32.totalorder %s330, %s331
    %p340 = scmp.eq.s32.totalorder %s26, 0
    %p341 = por %p339, %p340
    %p342 = scmp.ne.s32.totalorder %s330, %s331
    %p343 = scmp.eq.s32.totalorder %s27, 1
    %p344 = por %p342, %p343
    %p346 = scmp.ne.s32.totalorder %s331, %s345
    %p347 = scmp.eq.s32.totalorder %s27, 0
    %p348 = por %p346, %p347
    %s349 = ssub.s32 %s21, %s28
    %p350 = scmp.eq.s32.totalorder %s349, 0
    %s352 = sadd.s32 %s351, 1
    %s353 = scalar_select %p350, %s351, %s352
    %p356 = pneg %p350
    %p357 = scmp.eq.s32.totalorder %s21, 1
    %p358 = por %p356, %p357
    %p359 = scmp.ne.s32.totalorder %s351, %s354
    %p360 = scmp.eq.s32.totalorder %s21, 0
    %p361 = por %p359, %p360
    %p362 = scmp.ne.s32.totalorder %s351, %s354
    %p363 = scmp.eq.s32.totalorder %s26, 1
    %p364 = por %p362, %p363
    %p365 = scmp.ne.s32.totalorder %s354, %s355
    %p366 = scmp.eq.s32.totalorder %s26, 0
    %p367 = por %p365, %p366
    %p368 = scmp.ne.s32.totalorder %s354, %s355
    %p369 = scmp.eq.s32.totalorder %s27, 1
    %p370 = por %p368, %p369
    %p372 = scmp.ne.s32.totalorder %s355, %s371
    %p373 = scmp.eq.s32.totalorder %s27, 0
    %p374 = por %p372, %p373
    %p375 = scmp.le.s32.totalorder 1, %s21
    %p376 = scmp.lt.s32.totalorder %s21, 3
    %p377 = pnand %p375, %p376
    %p378 = pneg %p377
    // Predicated region
    $region9: #{ublock_forward.1} parent=5 // pred_check
      _
    $region10: #{ublock_forward.1} parent=5 // pred_check_branch
      %380 = sbr.rel (%p377) target = $region12
    $region11: #{ublock_forward.1} parent=5 // pred_region
      %s381 = ssub.s32 %s21, 1
      // Predicated region
      $region13: #{ublock_forward.1} parent=11 // pred_check
        %p382 = pneg %p68
      $region14: #{ublock_forward.1} parent=11 // pred_check_branch
        %384 = sbr.rel (%p382) target = $region16
      $region15: #{ublock_forward.1} parent=11 // pred_region
        _
      $region16: #{ublock_forward.1} parent=11 // pred_fallthru
        _
      // Predicated region
      $region17: #{ublock_forward.1} parent=11 // pred_check
        %p385 = pneg %p89
      $region18: #{ublock_forward.1} parent=11 // pred_check_branch
        %387 = sbr.rel (%p385) target = $region20
      $region19: #{ublock_forward.1} parent=11 // pred_region
        _
      $region20: #{ublock_forward.1} parent=11 // pred_fallthru
        _
      // Predicated region
      $region21: #{ublock_forward.1} parent=11 // pred_check
        %p388 = pneg %p110
      $region22: #{ublock_forward.1} parent=11 // pred_check_branch
        %390 = sbr.rel (%p388) target = $region24
      $region23: #{ublock_forward.1} parent=11 // pred_region
        _
      $region24: #{ublock_forward.1} parent=11 // pred_fallthru
        _
      // Predicated region
      $region25: #{ublock_forward.1} parent=11 // pred_check
        %p391 = pneg %p131
      $region26: #{ublock_forward.1} parent=11 // pred_check_branch
        %393 = sbr.rel (%p391) target = $region28
      $region27: #{ublock_forward.1} parent=11 // pred_region
        _
      $region28: #{ublock_forward.1} parent=11 // pred_fallthru
        _
      // Predicated region
      $region29: #{ublock_forward.1} parent=11 // pred_check
        %p394 = pneg %p152
      $region30: #{ublock_forward.1} parent=11 // pred_check_branch
        %396 = sbr.rel (%p394) target = $region32
      $region31: #{ublock_forward.1} parent=11 // pred_region
        _
      $region32: #{ublock_forward.1} parent=11 // pred_fallthru
        _
      // Predicated region
      $region33: #{ublock_forward.1} parent=11 // pred_check
        %p397 = pneg %p173
      $region34: #{ublock_forward.1} parent=11 // pred_check_branch
        %399 = sbr.rel (%p397) target = $region36
      $region35: #{ublock_forward.1} parent=11 // pred_region
        _
      $region36: #{ublock_forward.1} parent=11 // pred_fallthru
        _
      // Predicated region
      $region37: #{ublock_forward.1} parent=11 // pred_check
        %p400 = pneg %p194
      $region38: #{ublock_forward.1} parent=11 // pred_check_branch
        %402 = sbr.rel (%p400) target = $region40
      $region39: #{ublock_forward.1} parent=11 // pred_region
        _
      $region40: #{ublock_forward.1} parent=11 // pred_fallthru
        _
      // Predicated region
      $region41: #{ublock_forward.1} parent=11 // pred_check
        %p403 = pneg %p215
      $region42: #{ublock_forward.1} parent=11 // pred_check_branch
        %405 = sbr.rel (%p403) target = $region44
      $region43: #{ublock_forward.1} parent=11 // pred_region
        _
      $region44: #{ublock_forward.1} parent=11 // pred_fallthru
        _
      // Predicated region
      $region45: #{ublock_forward.1} parent=11 // pred_check
        %p406 = pneg %p236
      $region46: #{ublock_forward.1} parent=11 // pred_check_branch
        %408 = sbr.rel (%p406) target = $region48
      $region47: #{ublock_forward.1} parent=11 // pred_region
        _
      $region48: #{ublock_forward.1} parent=11 // pred_fallthru
        _
      // Predicated region
      $region49: #{ublock_forward.1} parent=11 // pred_check
        %p409 = pneg %p257
      $region50: #{ublock_forward.1} parent=11 // pred_check_branch
        %411 = sbr.rel (%p409) target = $region52
      $region51: #{ublock_forward.1} parent=11 // pred_region
        _
      $region52: #{ublock_forward.1} parent=11 // pred_fallthru
        _
      // Predicated region
      $region53: #{ublock_forward.1} parent=11 // pred_check
        %p412 = pneg %p278
      $region54: #{ublock_forward.1} parent=11 // pred_check_branch
        %414 = sbr.rel (%p412) target = $region56
      $region55: #{ublock_forward.1} parent=11 // pred_region
        _
      $region56: #{ublock_forward.1} parent=11 // pred_fallthru
        _
      // Predicated region
      $region57: #{ublock_forward.1} parent=11 // pred_check
        %p415 = pneg %p299
      $region58: #{ublock_forward.1} parent=11 // pred_check_branch
        %417 = sbr.rel (%p415) target = $region60
      $region59: #{ublock_forward.1} parent=11 // pred_region
        _
      $region60: #{ublock_forward.1} parent=11 // pred_fallthru
        _
      // Predicated region
      $region61: #{ublock_forward.1} parent=11 // pred_check
        %p418 = pneg %p320
      $region62: #{ublock_forward.1} parent=11 // pred_check_branch
        %420 = sbr.rel (%p418) target = $region64
      $region63: #{ublock_forward.1} parent=11 // pred_region
        _
      $region64: #{ublock_forward.1} parent=11 // pred_fallthru
        _
      // Predicated region
      $region65: #{ublock_forward.1} parent=11 // pred_check
        %p421 = pneg %p341
      $region66: #{ublock_forward.1} parent=11 // pred_check_branch
        %423 = sbr.rel (%p421) target = $region68
      $region67: #{ublock_forward.1} parent=11 // pred_region
        _
      $region68: #{ublock_forward.1} parent=11 // pred_fallthru
        _
    $region12: #{ublock_forward.1} parent=5 // pred_fallthru
      _
    %p424 = scmp.lt.s32.totalorder %s21, 2
    // Predicated region
    $region69: #{ublock_forward.1} parent=5 // pred_check
      %p425 = pneg %p424
    $region70: #{ublock_forward.1} parent=5 // pred_check_branch
      %427 = sbr.rel (%p425) target = $region72
    $region71: #{ublock_forward.1} parent=5 // pred_region
      // Predicated region
      $region73: #{ublock_forward.1} parent=71 // pred_check
        %p428 = pneg %p41
      $region74: #{ublock_forward.1} parent=71 // pred_check_branch
        %430 = sbr.rel (%p428) target = $region76
      $region75: #{ublock_forward.1} parent=71 // pred_region
        %p431 = scmp.lt.s32.totalorder %s21, 1
        %s432 = scalar_select %p431, %s21, 1
        %s433 = smul.addr %s432, 2
        %s434 = smul.addr %s433, 4
        %s435 = scalar_lea.vmem %s0, %s434
      $region76: #{ublock_forward.1} parent=71 // pred_fallthru
        _
    $region72: #{ublock_forward.1} parent=5 // pred_fallthru
      _
    %p436 = scmp.le.s32.totalorder 1, %s21
    %p437 = scmp.lt.s32.totalorder %s21, 3
    %p438 = pnand %p436, %p437
    %p439 = pneg %p438
    // Predicated region
    $region77: #{ublock_forward.1} parent=5 // pred_check
      _
    $region78: #{ublock_forward.1} parent=5 // pred_check_branch
      %441 = sbr.rel (%p438) target = $region80
    $region79: #{ublock_forward.1} parent=5 // pred_region
      %s442 = ssub.s32 %s21, 1
      %p443 = scmp.lt.s32.totalorder %s26, 1
      %s444 = scalar_select %p443, %s26, 1
      %s445 = smul.addr %s444, 2
      %s446 = smul.addr %s445, 4
      %s447 = scalar_lea.vmem %s0, %s446
      %p448 = pneg %p47
      %p449 = pneg %p44
      %p450 = pneg %p68
      %p451 = pneg %p65
      %p452 = pneg %p89
      %p453 = pneg %p86
      %p454 = pneg %p110
      %p455 = pneg %p107
      %p456 = pneg %p131
      %p457 = pneg %p128
      %p458 = pneg %p152
      %p459 = pneg %p149
      %p460 = pneg %p173
      %p461 = pneg %p170
      %p462 = pneg %p194
      %p463 = pneg %p191
      %p464 = pneg %p215
      %p465 = pneg %p212
      %p466 = pneg %p236
      %p467 = pneg %p233
      %p468 = pneg %p257
      %p469 = pneg %p254
      %p470 = pneg %p278
      %p471 = pneg %p275
      %p472 = pneg %p299
      %p473 = pneg %p296
      %p474 = pneg %p320
      %p475 = pneg %p317
      %p476 = pneg %p341
      %p477 = pneg %p338
      %p478 = pneg %p367
      %p479 = pneg %p364
      %p480 = scmp.lt.s32.totalorder %s26, 1
      %s481 = scalar_select %p480, %s26, 1
      %s482 = smul.addr %s481, 2
      %s483 = smul.addr %s482, 4
      %s484 = scalar_lea.vmem %s15, %s483
      %p485 = scmp.lt.s32.totalorder %s26, 1
      %s486 = scalar_select %p485, %s26, 1
      %s487 = smul.addr %s486, 2
      %s488 = smul.addr %s487, 4
      %s489 = scalar_lea.vmem %s0, %s488
      %p490 = scmp.lt.s32.totalorder %s26, 1
      %s491 = scalar_select %p490, %s26, 1
      %s492 = smul.addr %s491, 2
      %s493 = smul.addr %s492, 4
      %s494 = scalar_lea.vmem %s15, %s493
      %v495 = vld [vmem:[%s489] sm:$0xff]
      %v496 = vld [vmem:[%s2] sm:$0xf]
      %v497 = vld [vmem:[%s3] sm:$0xf]
      %v498 = vld [vmem:[%s1] sm:$0xff]
      %v499 = vld [vmem:[%s1 + $0x8] sm:$0xff]
      %v500 = vld [vmem:[%s1 + $0x10] sm:$0xff]
      %v501 = vld [vmem:[%s1 + $0x18] sm:$0xff]
      %v502 = vld [vmem:[%s1 + $0x20] sm:$0xff]
      %v503 = vld [vmem:[%s1 + $0x28] sm:$0xff]
      %v504 = vld [vmem:[%s1 + $0x30] sm:$0xff]
      %v505 = vld [vmem:[%s1 + $0x38] sm:$0xff]
      %v506 = vld [vmem:[%s1 + $0x40] sm:$0xff]
      %v507 = vld [vmem:[%s1 + $0x48] sm:$0xff]
      %v508 = vld [vmem:[%s1 + $0x50] sm:$0xff]
      %v509 = vld [vmem:[%s1 + $0x58] sm:$0xff]
      %v510 = vld [vmem:[%s1 + $0x60] sm:$0xff]
      %v511 = vld [vmem:[%s1 + $0x68] sm:$0xff]
      %v512 = vld [vmem:[%s1 + $0x70] sm:$0xff]
      %v513 = vld [vmem:[%s1 + $0x78] sm:$0xff]
      %v514 = vld [vmem:[%s1 + $0x80] sm:$0xff]
      %v515 = vld [vmem:[%s1 + $0x88] sm:$0xff]
      %v516 = vld [vmem:[%s1 + $0x90] sm:$0xff]
      %v517 = vld [vmem:[%s1 + $0x98] sm:$0xff]
      %v518 = vld [vmem:[%s1 + $0xa0] sm:$0xff]
      %v519 = vld [vmem:[%s1 + $0xa8] sm:$0xff]
      %v520 = vld [vmem:[%s1 + $0xb0] sm:$0xff]
      %v521 = vld [vmem:[%s1 + $0xb8] sm:$0xff]
      %v522 = vld [vmem:[%s1 + $0xc0] sm:$0xff]
      %v523 = vld [vmem:[%s1 + $0xc8] sm:$0xff]
      %v524 = vld [vmem:[%s1 + $0xd0] sm:$0xff]
      %v525 = vld [vmem:[%s1 + $0xd8] sm:$0xff]
      %v526 = vld [vmem:[%s1 + $0xe0] sm:$0xff]
      %v527 = vld [vmem:[%s1 + $0xe8] sm:$0xff]
      %v528 = vld [vmem:[%s1 + $0xf0] sm:$0xff]
      %v529 = vld [vmem:[%s1 + $0xf8] sm:$0xff]
      %v531 = vcombine.high %v495, %v495
      %533 = vmatprep.subr.mxu0 0.0
      %534 = vmatpush1.msra.mxu0 %v498
      %535 = vmatprep.subr.mxu0 0.0
      %536 = vmatpush1.msra.mxu0 %v499
      %537 = vmatprep.subr.mxu0 0.0
      %538 = vmatpush1.msra.mxu0 %v500
      %539 = vmatprep.subr.mxu0 0.0
      %540 = vmatpush1.msra.mxu0 %v501
      %541 = vmatprep.subr.mxu0 0.0
      %542 = vmatpush1.msra.mxu0 %v502
      %543 = vmatprep.subr.mxu0 0.0
      %544 = vmatpush1.msra.mxu0 %v503
      %545 = vmatprep.subr.mxu0 0.0
      %546 = vmatpush1.msra.mxu0 %v504
      %547 = vmatprep.subr.mxu0 0.0
      %548 = vmatpush1.msra.mxu0 %v505
      %549 = vmatprep.subr.mxu0 0.0
      %550 = vmatpush1.msra.mxu0 %v506
      %551 = vmatprep.subr.mxu0 0.0
      %552 = vmatpush1.msra.mxu0 %v507
      %553 = vmatprep.subr.mxu0 0.0
      %554 = vmatpush1.msra.mxu0 %v508
      %555 = vmatprep.subr.mxu0 0.0
      %556 = vmatpush1.msra.mxu0 %v509
      %557 = vmatprep.subr.mxu0 0.0
      %558 = vmatpush1.msra.mxu0 %v510
      %559 = vmatprep.subr.mxu0 0.0
      %560 = vmatpush1.msra.mxu0 %v511
      %561 = vmatprep.subr.mxu0 0.0
      %562 = vmatpush1.msra.mxu0 %v512
      %563 = vmatprep.subr.mxu0 0.0
      %564 = vmatpush1.msra.mxu0 %v513
      %565 = vmatprep.subr.mxu0 0.0
      %566 = vmatpush1.msra.mxu0 %v514
      %567 = vmatprep.subr.mxu0 0.0
      %568 = vmatpush1.msra.mxu0 %v515
      %569 = vmatprep.subr.mxu0 0.0
      %570 = vmatpush1.msra.mxu0 %v516
      %571 = vmatprep.subr.mxu0 0.0
      %572 = vmatpush1.msra.mxu0 %v517
      %573 = vmatprep.subr.mxu0 0.0
      %574 = vmatpush1.msra.mxu0 %v518
      %575 = vmatprep.subr.mxu0 0.0
      %576 = vmatpush1.msra.mxu0 %v519
      %577 = vmatprep.subr.mxu0 0.0
      %578 = vmatpush1.msra.mxu0 %v520
      %579 = vmatprep.subr.mxu0 0.0
      %580 = vmatpush1.msra.mxu0 %v521
      %581 = vmatprep.subr.mxu0 0.0
      %582 = vmatpush1.msra.mxu0 %v522
      %583 = vmatprep.subr.mxu0 0.0
      %584 = vmatpush1.msra.mxu0 %v523
      %585 = vmatprep.subr.mxu0 0.0
      %586 = vmatpush1.msra.mxu0 %v524
      %587 = vmatprep.subr.mxu0 0.0
      %588 = vmatpush1.msra.mxu0 %v525
      %589 = vmatprep.subr.mxu0 0.0
      %590 = vmatpush1.msra.mxu0 %v526
      %591 = vmatprep.subr.mxu0 0.0
      %592 = vmatpush1.msra.mxu0 %v527
      %593 = vmatprep.subr.mxu0 0.0
      %594 = vmatpush1.msra.mxu0 %v528
      %595 = vmatprep.subr.mxu0 0.0
      %596 = vmatpush1.msra.mxu0 %v529
      %597 = vmatprep.mubr.f32.mxu0 %v531
      %598 = vmatmul.mubr.f32.gmra.mrb[0].mxu0 %v495
      %v599 = vpop.f32.mrb[0].mxu0
      %v600 = vadd.f32 0.0, %v599
      %v601 = vpop.f32.mrb[0].mxu0
      %602 = vdwg.mxu0
      %s603 = scalar_lea.vmem %s1, 256
      %v604 = vld [vmem:[%s603] sm:$0xff]
      %v605 = vld [vmem:[%s603 + $0x8] sm:$0xff]
      %v606 = vld [vmem:[%s603 + $0x10] sm:$0xff]
      %v607 = vld [vmem:[%s603 + $0x18] sm:$0xff]
      %v608 = vld [vmem:[%s603 + $0x20] sm:$0xff]
      %v609 = vld [vmem:[%s603 + $0x28] sm:$0xff]
      %v610 = vld [vmem:[%s603 + $0x30] sm:$0xff]
      %v611 = vld [vmem:[%s603 + $0x38] sm:$0xff]
      %v612 = vld [vmem:[%s603 + $0x40] sm:$0xff]
      %v613 = vld [vmem:[%s603 + $0x48] sm:$0xff]
      %v614 = vld [vmem:[%s603 + $0x50] sm:$0xff]
      %v615 = vld [vmem:[%s603 + $0x58] sm:$0xff]
      %v616 = vld [vmem:[%s603 + $0x60] sm:$0xff]
      %v617 = vld [vmem:[%s603 + $0x68] sm:$0xff]
      %v618 = vld [vmem:[%s603 + $0x70] sm:$0xff]
      %v619 = vld [vmem:[%s603 + $0x78] sm:$0xff]
      %v620 = vld [vmem:[%s603 + $0x80] sm:$0xff]
      %v621 = vld [vmem:[%s603 + $0x88] sm:$0xff]
      %v622 = vld [vmem:[%s603 + $0x90] sm:$0xff]
      %v623 = vld [vmem:[%s603 + $0x98] sm:$0xff]
      %v624 = vld [vmem:[%s603 + $0xa0] sm:$0xff]
      %v625 = vld [vmem:[%s603 + $0xa8] sm:$0xff]
      %v626 = vld [vmem:[%s603 + $0xb0] sm:$0xff]
      %v627 = vld [vmem:[%s603 + $0xb8] sm:$0xff]
      %v628 = vld [vmem:[%s603 + $0xc0] sm:$0xff]
      %v629 = vld [vmem:[%s603 + $0xc8] sm:$0xff]
      %v630 = vld [vmem:[%s603 + $0xd0] sm:$0xff]
      %v631 = vld [vmem:[%s603 + $0xd8] sm:$0xff]
      %v632 = vld [vmem:[%s603 + $0xe0] sm:$0xff]
      %v633 = vld [vmem:[%s603 + $0xe8] sm:$0xff]
      %v634 = vld [vmem:[%s603 + $0xf0] sm:$0xff]
      %v635 = vld [vmem:[%s603 + $0xf8] sm:$0xff]
      %636 = vmatprep.subr.mxu0 0.0
      %637 = vmatpush1.msra.mxu0 %v604
      %638 = vmatprep.subr.mxu0 0.0
      %639 = vmatpush1.msra.mxu0 %v605
      %640 = vmatprep.subr.mxu0 0.0
      %641 = vmatpush1.msra.mxu0 %v606
      %642 = vmatprep.subr.mxu0 0.0
      %643 = vmatpush1.msra.mxu0 %v607
      %644 = vmatprep.subr.mxu0 0.0
      %645 = vmatpush1.msra.mxu0 %v608
      %646 = vmatprep.subr.mxu0 0.0
      %647 = vmatpush1.msra.mxu0 %v609
      %648 = vmatprep.subr.mxu0 0.0
      %649 = vmatpush1.msra.mxu0 %v610
      %650 = vmatprep.subr.mxu0 0.0
      %651 = vmatpush1.msra.mxu0 %v611
      %652 = vmatprep.subr.mxu0 0.0
      %653 = vmatpush1.msra.mxu0 %v612
      %654 = vmatprep.subr.mxu0 0.0
      %655 = vmatpush1.msra.mxu0 %v613
      %656 = vmatprep.subr.mxu0 0.0
      %657 = vmatpush1.msra.mxu0 %v614
      %658 = vmatprep.subr.mxu0 0.0
      %659 = vmatpush1.msra.mxu0 %v615
      %660 = vmatprep.subr.mxu0 0.0
      %661 = vmatpush1.msra.mxu0 %v616
      %662 = vmatprep.subr.mxu0 0.0
      %663 = vmatpush1.msra.mxu0 %v617
      %664 = vmatprep.subr.mxu0 0.0
      %665 = vmatpush1.msra.mxu0 %v618
      %666 = vmatprep.subr.mxu0 0.0
      %667 = vmatpush1.msra.mxu0 %v619
      %668 = vmatprep.subr.mxu0 0.0
      %669 = vmatpush1.msra.mxu0 %v620
      %670 = vmatprep.subr.mxu0 0.0
      %671 = vmatpush1.msra.mxu0 %v621
      %672 = vmatprep.subr.mxu0 0.0
      %673 = vmatpush1.msra.mxu0 %v622
      %674 = vmatprep.subr.mxu0 0.0
      %675 = vmatpush1.msra.mxu0 %v623
      %676 = vmatprep.subr.mxu0 0.0
      %677 = vmatpush1.msra.mxu0 %v624
      %678 = vmatprep.subr.mxu0 0.0
      %679 = vmatpush1.msra.mxu0 %v625
      %680 = vmatprep.subr.mxu0 0.0
      %681 = vmatpush1.msra.mxu0 %v626
      %682 = vmatprep.subr.mxu0 0.0
      %683 = vmatpush1.msra.mxu0 %v627
      %684 = vmatprep.subr.mxu0 0.0
      %685 = vmatpush1.msra.mxu0 %v628
      %686 = vmatprep.subr.mxu0 0.0
      %687 = vmatpush1.msra.mxu0 %v629
      %688 = vmatprep.subr.mxu0 0.0
      %689 = vmatpush1.msra.mxu0 %v630
      %690 = vmatprep.subr.mxu0 0.0
      %691 = vmatpush1.msra.mxu0 %v631
      %692 = vmatprep.subr.mxu0 0.0
      %693 = vmatpush1.msra.mxu0 %v632
      %694 = vmatprep.subr.mxu0 0.0
      %695 = vmatpush1.msra.mxu0 %v633
      %696 = vmatprep.subr.mxu0 0.0
      %697 = vmatpush1.msra.mxu0 %v634
      %698 = vmatprep.subr.mxu0 0.0
      %699 = vmatpush1.msra.mxu0 %v635
      %700 = vmatprep.mubr.f32.mxu0 %v531
      %701 = vmatmul.mubr.f32.gmra.mrb[0].mxu0 %v495
      %v702 = vpop.f32.mrb[0].mxu0
      %v703 = vadd.f32 0.0, %v702
      %v704 = vpop.f32.mrb[0].mxu0
      %705 = vdwg.mxu0
      %s706 = scalar_lea.vmem %s1, 512
      %v707 = vld [vmem:[%s706] sm:$0xff]
      %v708 = vld [vmem:[%s706 + $0x8] sm:$0xff]
      %v709 = vld [vmem:[%s706 + $0x10] sm:$0xff]
      %v710 = vld [vmem:[%s706 + $0x18] sm:$0xff]
      %v711 = vld [vmem:[%s706 + $0x20] sm:$0xff]
      %v712 = vld [vmem:[%s706 + $0x28] sm:$0xff]
      %v713 = vld [vmem:[%s706 + $0x30] sm:$0xff]
      %v714 = vld [vmem:[%s706 + $0x38] sm:$0xff]
      %v715 = vld [vmem:[%s706 + $0x40] sm:$0xff]
      %v716 = vld [vmem:[%s706 + $0x48] sm:$0xff]
      %v717 = vld [vmem:[%s706 + $0x50] sm:$0xff]
      %v718 = vld [vmem:[%s706 + $0x58] sm:$0xff]
      %v719 = vld [vmem:[%s706 + $0x60] sm:$0xff]
      %v720 = vld [vmem:[%s706 + $0x68] sm:$0xff]
      %v721 = vld [vmem:[%s706 + $0x70] sm:$0xff]
      %v722 = vld [vmem:[%s706 + $0x78] sm:$0xff]
      %v723 = vld [vmem:[%s706 + $0x80] sm:$0xff]
      %v724 = vld [vmem:[%s706 + $0x88] sm:$0xff]
      %v725 = vld [vmem:[%s706 + $0x90] sm:$0xff]
      %v726 = vld [vmem:[%s706 + $0x98] sm:$0xff]
      %v727 = vld [vmem:[%s706 + $0xa0] sm:$0xff]
      %v728 = vld [vmem:[%s706 + $0xa8] sm:$0xff]
      %v729 = vld [vmem:[%s706 + $0xb0] sm:$0xff]
      %v730 = vld [vmem:[%s706 + $0xb8] sm:$0xff]
      %v731 = vld [vmem:[%s706 + $0xc0] sm:$0xff]
      %v732 = vld [vmem:[%s706 + $0xc8] sm:$0xff]
      %v733 = vld [vmem:[%s706 + $0xd0] sm:$0xff]
      %v734 = vld [vmem:[%s706 + $0xd8] sm:$0xff]
      %v735 = vld [vmem:[%s706 + $0xe0] sm:$0xff]
      %v736 = vld [vmem:[%s706 + $0xe8] sm:$0xff]
      %v737 = vld [vmem:[%s706 + $0xf0] sm:$0xff]
      %v738 = vld [vmem:[%s706 + $0xf8] sm:$0xff]
      %739 = vmatprep.subr.mxu0 0.0
      %740 = vmatpush1.msra.mxu0 %v707
      %741 = vmatprep.subr.mxu0 0.0
      %742 = vmatpush1.msra.mxu0 %v708
      %743 = vmatprep.subr.mxu0 0.0
      %744 = vmatpush1.msra.mxu0 %v709
      %745 = vmatprep.subr.mxu0 0.0
      %746 = vmatpush1.msra.mxu0 %v710
      %747 = vmatprep.subr.mxu0 0.0
      %748 = vmatpush1.msra.mxu0 %v711
      %749 = vmatprep.subr.mxu0 0.0
      %750 = vmatpush1.msra.mxu0 %v712
      %751 = vmatprep.subr.mxu0 0.0
      %752 = vmatpush1.msra.mxu0 %v713
      %753 = vmatprep.subr.mxu0 0.0
      %754 = vmatpush1.msra.mxu0 %v714
      %755 = vmatprep.subr.mxu0 0.0
      %756 = vmatpush1.msra.mxu0 %v715
      %757 = vmatprep.subr.mxu0 0.0
      %758 = vmatpush1.msra.mxu0 %v716
      %759 = vmatprep.subr.mxu0 0.0
      %760 = vmatpush1.msra.mxu0 %v717
      %761 = vmatprep.subr.mxu0 0.0
      %762 = vmatpush1.msra.mxu0 %v718
      %763 = vmatprep.subr.mxu0 0.0
      %764 = vmatpush1.msra.mxu0 %v719
      %765 = vmatprep.subr.mxu0 0.0
      %766 = vmatpush1.msra.mxu0 %v720
      %767 = vmatprep.subr.mxu0 0.0
      %768 = vmatpush1.msra.mxu0 %v721
      %769 = vmatprep.subr.mxu0 0.0
      %770 = vmatpush1.msra.mxu0 %v722
      %771 = vmatprep.subr.mxu0 0.0
      %772 = vmatpush1.msra.mxu0 %v723
      %773 = vmatprep.subr.mxu0 0.0
      %774 = vmatpush1.msra.mxu0 %v724
      %775 = vmatprep.subr.mxu0 0.0
      %776 = vmatpush1.msra.mxu0 %v725
      %777 = vmatprep.subr.mxu0 0.0
      %778 = vmatpush1.msra.mxu0 %v726
      %779 = vmatprep.subr.mxu0 0.0
      %780 = vmatpush1.msra.mxu0 %v727
      %781 = vmatprep.subr.mxu0 0.0
      %782 = vmatpush1.msra.mxu0 %v728
      %783 = vmatprep.subr.mxu0 0.0
      %784 = vmatpush1.msra.mxu0 %v729
      %785 = vmatprep.subr.mxu0 0.0
      %786 = vmatpush1.msra.mxu0 %v730
      %787 = vmatprep.subr.mxu0 0.0
      %788 = vmatpush1.msra.mxu0 %v731
      %789 = vmatprep.subr.mxu0 0.0
      %790 = vmatpush1.msra.mxu0 %v732
      %791 = vmatprep.subr.mxu0 0.0
      %792 = vmatpush1.msra.mxu0 %v733
      %793 = vmatprep.subr.mxu0 0.0
      %794 = vmatpush1.msra.mxu0 %v734
      %795 = vmatprep.subr.mxu0 0.0
      %796 = vmatpush1.msra.mxu0 %v735
      %797 = vmatprep.subr.mxu0 0.0
      %798 = vmatpush1.msra.mxu0 %v736
      %799 = vmatprep.subr.mxu0 0.0
      %800 = vmatpush1.msra.mxu0 %v737
      %801 = vmatprep.subr.mxu0 0.0
      %802 = vmatpush1.msra.mxu0 %v738
      %803 = vmatprep.mubr.f32.mxu0 %v531
      %804 = vmatmul.mubr.f32.gmra.mrb[0].mxu0 %v495
      %v805 = vpop.f32.mrb[0].mxu0
      %v806 = vadd.f32 0.0, %v805
      %v807 = vpop.f32.mrb[0].mxu0
      %808 = vdwg.mxu0
      %s809 = scalar_lea.vmem %s1, 768
      %v810 = vld [vmem:[%s809] sm:$0xff]
      %v811 = vld [vmem:[%s809 + $0x8] sm:$0xff]
      %v812 = vld [vmem:[%s809 + $0x10] sm:$0xff]
      %v813 = vld [vmem:[%s809 + $0x18] sm:$0xff]
      %v814 = vld [vmem:[%s809 + $0x20] sm:$0xff]
      %v815 = vld [vmem:[%s809 + $0x28] sm:$0xff]
      %v816 = vld [vmem:[%s809 + $0x30] sm:$0xff]
      %v817 = vld [vmem:[%s809 + $0x38] sm:$0xff]
      %v818 = vld [vmem:[%s809 + $0x40] sm:$0xff]
      %v819 = vld [vmem:[%s809 + $0x48] sm:$0xff]
      %v820 = vld [vmem:[%s809 + $0x50] sm:$0xff]
      %v821 = vld [vmem:[%s809 + $0x58] sm:$0xff]
      %v822 = vld [vmem:[%s809 + $0x60] sm:$0xff]
      %v823 = vld [vmem:[%s809 + $0x68] sm:$0xff]
      %v824 = vld [vmem:[%s809 + $0x70] sm:$0xff]
      %v825 = vld [vmem:[%s809 + $0x78] sm:$0xff]
      %v826 = vld [vmem:[%s809 + $0x80] sm:$0xff]
      %v827 = vld [vmem:[%s809 + $0x88] sm:$0xff]
      %v828 = vld [vmem:[%s809 + $0x90] sm:$0xff]
      %v829 = vld [vmem:[%s809 + $0x98] sm:$0xff]
      %v830 = vld [vmem:[%s809 + $0xa0] sm:$0xff]
      %v831 = vld [vmem:[%s809 + $0xa8] sm:$0xff]
      %v832 = vld [vmem:[%s809 + $0xb0] sm:$0xff]
      %v833 = vld [vmem:[%s809 + $0xb8] sm:$0xff]
      %v834 = vld [vmem:[%s809 + $0xc0] sm:$0xff]
      %v835 = vld [vmem:[%s809 + $0xc8] sm:$0xff]
      %v836 = vld [vmem:[%s809 + $0xd0] sm:$0xff]
      %v837 = vld [vmem:[%s809 + $0xd8] sm:$0xff]
      %v838 = vld [vmem:[%s809 + $0xe0] sm:$0xff]
      %v839 = vld [vmem:[%s809 + $0xe8] sm:$0xff]
      %v840 = vld [vmem:[%s809 + $0xf0] sm:$0xff]
      %v841 = vld [vmem:[%s809 + $0xf8] sm:$0xff]
      %842 = vmatprep.subr.mxu0 0.0
      %843 = vmatpush1.msra.mxu0 %v810
      %844 = vmatprep.subr.mxu0 0.0
      %845 = vmatpush1.msra.mxu0 %v811
      %846 = vmatprep.subr.mxu0 0.0
      %847 = vmatpush1.msra.mxu0 %v812
      %848 = vmatprep.subr.mxu0 0.0
      %849 = vmatpush1.msra.mxu0 %v813
      %850 = vmatprep.subr.mxu0 0.0
      %851 = vmatpush1.msra.mxu0 %v814
      %852 = vmatprep.subr.mxu0 0.0
      %853 = vmatpush1.msra.mxu0 %v815
      %854 = vmatprep.subr.mxu0 0.0
      %855 = vmatpush1.msra.mxu0 %v816
      %856 = vmatprep.subr.mxu0 0.0
      %857 = vmatpush1.msra.mxu0 %v817
      %858 = vmatprep.subr.mxu0 0.0
      %859 = vmatpush1.msra.mxu0 %v818
      %860 = vmatprep.subr.mxu0 0.0
      %861 = vmatpush1.msra.mxu0 %v819
      %862 = vmatprep.subr.mxu0 0.0
      %863 = vmatpush1.msra.mxu0 %v820
      %864 = vmatprep.subr.mxu0 0.0
      %865 = vmatpush1.msra.mxu0 %v821
      %866 = vmatprep.subr.mxu0 0.0
      %867 = vmatpush1.msra.mxu0 %v822
      %868 = vmatprep.subr.mxu0 0.0
      %869 = vmatpush1.msra.mxu0 %v823
      %870 = vmatprep.subr.mxu0 0.0
      %871 = vmatpush1.msra.mxu0 %v824
      %872 = vmatprep.subr.mxu0 0.0
      %873 = vmatpush1.msra.mxu0 %v825
      %874 = vmatprep.subr.mxu0 0.0
      %875 = vmatpush1.msra.mxu0 %v826
      %876 = vmatprep.subr.mxu0 0.0
      %877 = vmatpush1.msra.mxu0 %v827
      %878 = vmatprep.subr.mxu0 0.0
      %879 = vmatpush1.msra.mxu0 %v828
      %880 = vmatprep.subr.mxu0 0.0
      %881 = vmatpush1.msra.mxu0 %v829
      %882 = vmatprep.subr.mxu0 0.0
      %883 = vmatpush1.msra.mxu0 %v830
      %884 = vmatprep.subr.mxu0 0.0
      %885 = vmatpush1.msra.mxu0 %v831
      %886 = vmatprep.subr.mxu0 0.0
      %887 = vmatpush1.msra.mxu0 %v832
      %888 = vmatprep.subr.mxu0 0.0
      %889 = vmatpush1.msra.mxu0 %v833
      %890 = vmatprep.subr.mxu0 0.0
      %891 = vmatpush1.msra.mxu0 %v834
      %892 = vmatprep.subr.mxu0 0.0
      %893 = vmatpush1.msra.mxu0 %v835
      %894 = vmatprep.subr.mxu0 0.0
      %895 = vmatpush1.msra.mxu0 %v836
      %896 = vmatprep.subr.mxu0 0.0
      %897 = vmatpush1.msra.mxu0 %v837
      %898 = vmatprep.subr.mxu0 0.0
      %899 = vmatpush1.msra.mxu0 %v838
      %900 = vmatprep.subr.mxu0 0.0
      %901 = vmatpush1.msra.mxu0 %v839
      %902 = vmatprep.subr.mxu0 0.0
      %903 = vmatpush1.msra.mxu0 %v840
      %904 = vmatprep.subr.mxu0 0.0
      %905 = vmatpush1.msra.mxu0 %v841
      %906 = vmatprep.mubr.f32.mxu0 %v531
      %907 = vmatmul.mubr.f32.gmra.mrb[0].mxu0 %v495
      %v908 = vpop.f32.mrb[0].mxu0
      %v909 = vadd.f32 0.0, %v908
      %v910 = vpop.f32.mrb[0].mxu0
      %911 = vdwg.mxu0
      %s912 = scalar_lea.vmem %s1, 1024
      %v913 = vld [vmem:[%s912] sm:$0xff]
      %v914 = vld [vmem:[%s912 + $0x8] sm:$0xff]
      %v915 = vld [vmem:[%s912 + $0x10] sm:$0xff]
      %v916 = vld [vmem:[%s912 + $0x18] sm:$0xff]
      %v917 = vld [vmem:[%s912 + $0x20] sm:$0xff]
      %v918 = vld [vmem:[%s912 + $0x28] sm:$0xff]
      %v919 = vld [vmem:[%s912 + $0x30] sm:$0xff]
      %v920 = vld [vmem:[%s912 + $0x38] sm:$0xff]
      %v921 = vld [vmem:[%s912 + $0x40] sm:$0xff]
      %v922 = vld [vmem:[%s912 + $0x48] sm:$0xff]
      %v923 = vld [vmem:[%s912 + $0x50] sm:$0xff]
      %v924 = vld [vmem:[%s912 + $0x58] sm:$0xff]
      %v925 = vld [vmem:[%s912 + $0x60] sm:$0xff]
      %v926 = vld [vmem:[%s912 + $0x68] sm:$0xff]
      %v927 = vld [vmem:[%s912 + $0x70] sm:$0xff]
      %v928 = vld [vmem:[%s912 + $0x78] sm:$0xff]
      %v929 = vld [vmem:[%s912 + $0x80] sm:$0xff]
      %v930 = vld [vmem:[%s912 + $0x88] sm:$0xff]
      %v931 = vld [vmem:[%s912 + $0x90] sm:$0xff]
      %v932 = vld [vmem:[%s912 + $0x98] sm:$0xff]
      %v933 = vld [vmem:[%s912 + $0xa0] sm:$0xff]
      %v934 = vld [vmem:[%s912 + $0xa8] sm:$0xff]
      %v935 = vld [vmem:[%s912 + $0xb0] sm:$0xff]
      %v936 = vld [vmem:[%s912 + $0xb8] sm:$0xff]
      %v937 = vld [vmem:[%s912 + $0xc0] sm:$0xff]
      %v938 = vld [vmem:[%s912 + $0xc8] sm:$0xff]
      %v939 = vld [vmem:[%s912 + $0xd0] sm:$0xff]
      %v940 = vld [vmem:[%s912 + $0xd8] sm:$0xff]
      %v941 = vld [vmem:[%s912 + $0xe0] sm:$0xff]
      %v942 = vld [vmem:[%s912 + $0xe8] sm:$0xff]
      %v943 = vld [vmem:[%s912 + $0xf0] sm:$0xff]
      %v944 = vld [vmem:[%s912 + $0xf8] sm:$0xff]
      %945 = vmatprep.subr.mxu0 0.0
      %946 = vmatpush1.msra.mxu0 %v913
      %947 = vmatprep.subr.mxu0 0.0
      %948 = vmatpush1.msra.mxu0 %v914
      %949 = vmatprep.subr.mxu0 0.0
      %950 = vmatpush1.msra.mxu0 %v915
      %951 = vmatprep.subr.mxu0 0.0
      %952 = vmatpush1.msra.mxu0 %v916
      %953 = vmatprep.subr.mxu0 0.0
      %954 = vmatpush1.msra.mxu0 %v917
      %955 = vmatprep.subr.mxu0 0.0
      %956 = vmatpush1.msra.mxu0 %v918
      %957 = vmatprep.subr.mxu0 0.0
      %958 = vmatpush1.msra.mxu0 %v919
      %959 = vmatprep.subr.mxu0 0.0
      %960 = vmatpush1.msra.mxu0 %v920
      %961 = vmatprep.subr.mxu0 0.0
      %962 = vmatpush1.msra.mxu0 %v921
      %963 = vmatprep.subr.mxu0 0.0
      %964 = vmatpush1.msra.mxu0 %v922
      %965 = vmatprep.subr.mxu0 0.0
      %966 = vmatpush1.msra.mxu0 %v923
      %967 = vmatprep.subr.mxu0 0.0
      %968 = vmatpush1.msra.mxu0 %v924
      %969 = vmatprep.subr.mxu0 0.0
      %970 = vmatpush1.msra.mxu0 %v925
      %971 = vmatprep.subr.mxu0 0.0
      %972 = vmatpush1.msra.mxu0 %v926
      %973 = vmatprep.subr.mxu0 0.0
      %974 = vmatpush1.msra.mxu0 %v927
      %975 = vmatprep.subr.mxu0 0.0
      %976 = vmatpush1.msra.mxu0 %v928
      %977 = vmatprep.subr.mxu0 0.0
      %978 = vmatpush1.msra.mxu0 %v929
      %979 = vmatprep.subr.mxu0 0.0
      %980 = vmatpush1.msra.mxu0 %v930
      %981 = vmatprep.subr.mxu0 0.0
      %982 = vmatpush1.msra.mxu0 %v931
      %983 = vmatprep.subr.mxu0 0.0
      %984 = vmatpush1.msra.mxu0 %v932
      %985 = vmatprep.subr.mxu0 0.0
      %986 = vmatpush1.msra.mxu0 %v933
      %987 = vmatprep.subr.mxu0 0.0
      %988 = vmatpush1.msra.mxu0 %v934
      %989 = vmatprep.subr.mxu0 0.0
      %990 = vmatpush1.msra.mxu0 %v935
      %991 = vmatprep.subr.mxu0 0.0
      %992 = vmatpush1.msra.mxu0 %v936
      %993 = vmatprep.subr.mxu0 0.0
      %994 = vmatpush1.msra.mxu0 %v937
      %995 = vmatprep.subr.mxu0 0.0
      %996 = vmatpush1.msra.mxu0 %v938
      %997 = vmatprep.subr.mxu0 0.0
      %998 = vmatpush1.msra.mxu0 %v939
      %999 = vmatprep.subr.mxu0 0.0
      %1000 = vmatpush1.msra.mxu0 %v940
      %1001 = vmatprep.subr.mxu0 0.0
      %1002 = vmatpush1.msra.mxu0 %v941
      %1003 = vmatprep.subr.mxu0 0.0
      %1004 = vmatpush1.msra.mxu0 %v942
      %1005 = vmatprep.subr.mxu0 0.0
      %1006 = vmatpush1.msra.mxu0 %v943
      %1007 = vmatprep.subr.mxu0 0.0
      %1008 = vmatpush1.msra.mxu0 %v944
      %1009 = vmatprep.mubr.f32.mxu0 %v531
      %1010 = vmatmul.mubr.f32.gmra.mrb[0].mxu0 %v495
      %v1011 = vpop.f32.mrb[0].mxu0
      %v1012 = vadd.f32 0.0, %v1011
      %v1013 = vpop.f32.mrb[0].mxu0
      %1014 = vdwg.mxu0
      %s1015 = scalar_lea.vmem %s1, 1280
      %v1016 = vld [vmem:[%s1015] sm:$0xff]
      %v1017 = vld [vmem:[%s1015 + $0x8] sm:$0xff]
      %v1018 = vld [vmem:[%s1015 + $0x10] sm:$0xff]
      %v1019 = vld [vmem:[%s1015 + $0x18] sm:$0xff]
      %v1020 = vld [vmem:[%s1015 + $0x20] sm:$0xff]
      %v1021 = vld [vmem:[%s1015 + $0x28] sm:$0xff]
      %v1022 = vld [vmem:[%s1015 + $0x30] sm:$0xff]
      %v1023 = vld [vmem:[%s1015 + $0x38] sm:$0xff]
      %v1024 = vld [vmem:[%s1015 + $0x40] sm:$0xff]
      %v1025 = vld [vmem:[%s1015 + $0x48] sm:$0xff]
      %v1026 = vld [vmem:[%s1015 + $0x50] sm:$0xff]
      %v1027 = vld [vmem:[%s1015 + $0x58] sm:$0xff]
      %v1028 = vld [vmem:[%s1015 + $0x60] sm:$0xff]
      %v1029 = vld [vmem:[%s1015 + $0x68] sm:$0xff]
      %v1030 = vld [vmem:[%s1015 + $0x70] sm:$0xff]
      %v1031 = vld [vmem:[%s1015 + $0x78] sm:$0xff]
      %v1032 = vld [vmem:[%s1015 + $0x80] sm:$0xff]
      %v1033 = vld [vmem:[%s1015 + $0x88] sm:$0xff]
      %v1034 = vld [vmem:[%s1015 + $0x90] sm:$0xff]
      %v1035 = vld [vmem:[%s1015 + $0x98] sm:$0xff]
      %v1036 = vld [vmem:[%s1015 + $0xa0] sm:$0xff]
      %v1037 = vld [vmem:[%s1015 + $0xa8] sm:$0xff]
      %v1038 = vld [vmem:[%s1015 + $0xb0] sm:$0xff]
      %v1039 = vld [vmem:[%s1015 + $0xb8] sm:$0xff]
      %v1040 = vld [vmem:[%s1015 + $0xc0] sm:$0xff]
      %v1041 = vld [vmem:[%s1015 + $0xc8] sm:$0xff]
      %v1042 = vld [vmem:[%s1015 + $0xd0] sm:$0xff]
      %v1043 = vld [vmem:[%s1015 + $0xd8] sm:$0xff]
      %v1044 = vld [vmem:[%s1015 + $0xe0] sm:$0xff]
      %v1045 = vld [vmem:[%s1015 + $0xe8] sm:$0xff]
      %v1046 = vld [vmem:[%s1015 + $0xf0] sm:$0xff]
      %v1047 = vld [vmem:[%s1015 + $0xf8] sm:$0xff]
      %1048 = vmatprep.subr.mxu0 0.0
      %1049 = vmatpush1.msra.mxu0 %v1016
      %1050 = vmatprep.subr.mxu0 0.0
      %1051 = vmatpush1.msra.mxu0 %v1017
      %1052 = vmatprep.subr.mxu0 0.0
      %1053 = vmatpush1.msra.mxu0 %v1018
      %1054 = vmatprep.subr.mxu0 0.0
      %1055 = vmatpush1.msra.mxu0 %v1019
      %1056 = vmatprep.subr.mxu0 0.0
      %1057 = vmatpush1.msra.mxu0 %v1020
      %1058 = vmatprep.subr.mxu0 0.0
      %1059 = vmatpush1.msra.mxu0 %v1021
      %1060 = vmatprep.subr.mxu0 0.0
      %1061 = vmatpush1.msra.mxu0 %v1022
      %1062 = vmatprep.subr.mxu0 0.0
      %1063 = vmatpush1.msra.mxu0 %v1023
      %1064 = vmatprep.subr.mxu0 0.0
      %1065 = vmatpush1.msra.mxu0 %v1024
      %1066 = vmatprep.subr.mxu0 0.0
      %1067 = vmatpush1.msra.mxu0 %v1025
      %1068 = vmatprep.subr.mxu0 0.0
      %1069 = vmatpush1.msra.mxu0 %v1026
      %1070 = vmatprep.subr.mxu0 0.0
      %1071 = vmatpush1.msra.mxu0 %v1027
      %1072 = vmatprep.subr.mxu0 0.0
      %1073 = vmatpush1.msra.mxu0 %v1028
      %1074 = vmatprep.subr.mxu0 0.0
      %1075 = vmatpush1.msra.mxu0 %v1029
      %1076 = vmatprep.subr.mxu0 0.0
      %1077 = vmatpush1.msra.mxu0 %v1030
      %1078 = vmatprep.subr.mxu0 0.0
      %1079 = vmatpush1.msra.mxu0 %v1031
      %1080 = vmatprep.subr.mxu0 0.0
      %1081 = vmatpush1.msra.mxu0 %v1032
      %1082 = vmatprep.subr.mxu0 0.0
      %1083 = vmatpush1.msra.mxu0 %v1033
      %1084 = vmatprep.subr.mxu0 0.0
      %1085 = vmatpush1.msra.mxu0 %v1034
      %1086 = vmatprep.subr.mxu0 0.0
      %1087 = vmatpush1.msra.mxu0 %v1035
      %1088 = vmatprep.subr.mxu0 0.0
      %1089 = vmatpush1.msra.mxu0 %v1036
      %1090 = vmatprep.subr.mxu0 0.0
      %1091 = vmatpush1.msra.mxu0 %v1037
      %1092 = vmatprep.subr.mxu0 0.0
      %1093 = vmatpush1.msra.mxu0 %v1038
      %1094 = vmatprep.subr.mxu0 0.0
      %1095 = vmatpush1.msra.mxu0 %v1039
      %1096 = vmatprep.subr.mxu0 0.0
      %1097 = vmatpush1.msra.mxu0 %v1040
      %1098 = vmatprep.subr.mxu0 0.0
      %1099 = vmatpush1.msra.mxu0 %v1041
      %1100 = vmatprep.subr.mxu0 0.0
      %1101 = vmatpush1.msra.mxu0 %v1042
      %1102 = vmatprep.subr.mxu0 0.0
      %1103 = vmatpush1.msra.mxu0 %v1043
      %1104 = vmatprep.subr.mxu0 0.0
      %1105 = vmatpush1.msra.mxu0 %v1044
      %1106 = vmatprep.subr.mxu0 0.0
      %1107 = vmatpush1.msra.mxu0 %v1045
      %1108 = vmatprep.subr.mxu0 0.0
      %1109 = vmatpush1.msra.mxu0 %v1046
      %1110 = vmatprep.subr.mxu0 0.0
      %1111 = vmatpush1.msra.mxu0 %v1047
      %1112 = vmatprep.mubr.f32.mxu0 %v531
      %1113 = vmatmul.mubr.f32.gmra.mrb[0].mxu0 %v495
      %v1114 = vpop.f32.mrb[0].mxu0
      %v1115 = vadd.f32 0.0, %v1114
      %v1116 = vpop.f32.mrb[0].mxu0
      %1117 = vdwg.mxu0
      %s1118 = scalar_lea.vmem %s1, 1536
      %v1119 = vld [vmem:[%s1118] sm:$0xff]
      %v1120 = vld [vmem:[%s1118 + $0x8] sm:$0xff]
      %v1121 = vld [vmem:[%s1118 + $0x10] sm:$0xff]
      %v1122 = vld [vmem:[%s1118 + $0x18] sm:$0xff]
      %v1123 = vld [vmem:[%s1118 + $0x20] sm:$0xff]
      %v1124 = vld [vmem:[%s1118 + $0x28] sm:$0xff]
      %v1125 = vld [vmem:[%s1118 + $0x30] sm:$0xff]
      %v1126 = vld [vmem:[%s1118 + $0x38] sm:$0xff]
      %v1127 = vld [vmem:[%s1118 + $0x40] sm:$0xff]
      %v1128 = vld [vmem:[%s1118 + $0x48] sm:$0xff]
      %v1129 = vld [vmem:[%s1118 + $0x50] sm:$0xff]
      %v1130 = vld [vmem:[%s1118 + $0x58] sm:$0xff]
      %v1131 = vld [vmem:[%s1118 + $0x60] sm:$0xff]
      %v1132 = vld [vmem:[%s1118 + $0x68] sm:$0xff]
      %v1133 = vld [vmem:[%s1118 + $0x70] sm:$0xff]
      %v1134 = vld [vmem:[%s1118 + $0x78] sm:$0xff]
      %v1135 = vld [vmem:[%s1118 + $0x80] sm:$0xff]
      %v1136 = vld [vmem:[%s1118 + $0x88] sm:$0xff]
      %v1137 = vld [vmem:[%s1118 + $0x90] sm:$0xff]
      %v1138 = vld [vmem:[%s1118 + $0x98] sm:$0xff]
      %v1139 = vld [vmem:[%s1118 + $0xa0] sm:$0xff]
      %v1140 = vld [vmem:[%s1118 + $0xa8] sm:$0xff]
      %v1141 = vld [vmem:[%s1118 + $0xb0] sm:$0xff]
      %v1142 = vld [vmem:[%s1118 + $0xb8] sm:$0xff]
      %v1143 = vld [vmem:[%s1118 + $0xc0] sm:$0xff]
      %v1144 = vld [vmem:[%s1118 + $0xc8] sm:$0xff]
      %v1145 = vld [vmem:[%s1118 + $0xd0] sm:$0xff]
      %v1146 = vld [vmem:[%s1118 + $0xd8] sm:$0xff]
      %v1147 = vld [vmem:[%s1118 + $0xe0] sm:$0xff]
      %v1148 = vld [vmem:[%s1118 + $0xe8] sm:$0xff]
      %v1149 = vld [vmem:[%s1118 + $0xf0] sm:$0xff]
      %v1150 = vld [vmem:[%s1118 + $0xf8] sm:$0xff]
      %1151 = vmatprep.subr.mxu0 0.0
      %1152 = vmatpush1.msra.mxu0 %v1119
      %1153 = vmatprep.subr.mxu0 0.0
      %1154 = vmatpush1.msra.mxu0 %v1120
      %1155 = vmatprep.subr.mxu0 0.0
      %1156 = vmatpush1.msra.mxu0 %v1121
      %1157 = vmatprep.subr.mxu0 0.0
      %1158 = vmatpush1.msra.mxu0 %v1122
      %1159 = vmatprep.subr.mxu0 0.0
      %1160 = vmatpush1.msra.mxu0 %v1123
      %1161 = vmatprep.subr.mxu0 0.0
      %1162 = vmatpush1.msra.mxu0 %v1124
      %1163 = vmatprep.subr.mxu0 0.0
      %1164 = vmatpush1.msra.mxu0 %v1125
      %1165 = vmatprep.subr.mxu0 0.0
      %1166 = vmatpush1.msra.mxu0 %v1126
      %1167 = vmatprep.subr.mxu0 0.0
      %1168 = vmatpush1.msra.mxu0 %v1127
      %1169 = vmatprep.subr.mxu0 0.0
      %1170 = vmatpush1.msra.mxu0 %v1128
      %1171 = vmatprep.subr.mxu0 0.0
      %1172 = vmatpush1.msra.mxu0 %v1129
      %1173 = vmatprep.subr.mxu0 0.0
      %1174 = vmatpush1.msra.mxu0 %v1130
      %1175 = vmatprep.subr.mxu0 0.0
      %1176 = vmatpush1.msra.mxu0 %v1131
      %1177 = vmatprep.subr.mxu0 0.0
      %1178 = vmatpush1.msra.mxu0 %v1132
      %1179 = vmatprep.subr.mxu0 0.0
      %1180 = vmatpush1.msra.mxu0 %v1133
      %1181 = vmatprep.subr.mxu0 0.0
      %1182 = vmatpush1.msra.mxu0 %v1134
      %1183 = vmatprep.subr.mxu0 0.0
      %1184 = vmatpush1.msra.mxu0 %v1135
      %1185 = vmatprep.subr.mxu0 0.0
      %1186 = vmatpush1.msra.mxu0 %v1136
      %1187 = vmatprep.subr.mxu0 0.0
      %1188 = vmatpush1.msra.mxu0 %v1137
      %1189 = vmatprep.subr.mxu0 0.0
      %1190 = vmatpush1.msra.mxu0 %v1138
      %1191 = vmatprep.subr.mxu0 0.0
      %1192 = vmatpush1.msra.mxu0 %v1139
      %1193 = vmatprep.subr.mxu0 0.0
      %1194 = vmatpush1.msra.mxu0 %v1140
      %1195 = vmatprep.subr.mxu0 0.0
      %1196 = vmatpush1.msra.mxu0 %v1141
      %1197 = vmatprep.subr.mxu0 0.0
      %1198 = vmatpush1.msra.mxu0 %v1142
      %1199 = vmatprep.subr.mxu0 0.0
      %1200 = vmatpush1.msra.mxu0 %v1143
      %1201 = vmatprep.subr.mxu0 0.0
      %1202 = vmatpush1.msra.mxu0 %v1144
      %1203 = vmatprep.subr.mxu0 0.0
      %1204 = vmatpush1.msra.mxu0 %v1145
      %1205 = vmatprep.subr.mxu0 0.0
      %1206 = vmatpush1.msra.mxu0 %v1146
      %1207 = vmatprep.subr.mxu0 0.0
      %1208 = vmatpush1.msra.mxu0 %v1147
      %1209 = vmatprep.subr.mxu0 0.0
      %1210 = vmatpush1.msra.mxu0 %v1148
      %1211 = vmatprep.subr.mxu0 0.0
      %1212 = vmatpush1.msra.mxu0 %v1149
      %1213 = vmatprep.subr.mxu0 0.0
      %1214 = vmatpush1.msra.mxu0 %v1150
      %1215 = vmatprep.mubr.f32.mxu0 %v531
      %1216 = vmatmul.mubr.f32.gmra.mrb[0].mxu0 %v495
      %v1217 = vpop.f32.mrb[0].mxu0
      %v1218 = vadd.f32 0.0, %v1217
      %v1219 = vpop.f32.mrb[0].mxu0
      %1220 = vdwg.mxu0
      %s1221 = scalar_lea.vmem %s1, 1792
      %v1222 = vld [vmem:[%s1221] sm:$0xff]
      %v1223 = vld [vmem:[%s1221 + $0x8] sm:$0xff]
      %v1224 = vld [vmem:[%s1221 + $0x10] sm:$0xff]
      %v1225 = vld [vmem:[%s1221 + $0x18] sm:$0xff]
      %v1226 = vld [vmem:[%s1221 + $0x20] sm:$0xff]
      %v1227 = vld [vmem:[%s1221 + $0x28] sm:$0xff]
      %v1228 = vld [vmem:[%s1221 + $0x30] sm:$0xff]
      %v1229 = vld [vmem:[%s1221 + $0x38] sm:$0xff]
      %v1230 = vld [vmem:[%s1221 + $0x40] sm:$0xff]
      %v1231 = vld [vmem:[%s1221 + $0x48] sm:$0xff]
      %v1232 = vld [vmem:[%s1221 + $0x50] sm:$0xff]
      %v1233 = vld [vmem:[%s1221 + $0x58] sm:$0xff]
      %v1234 = vld [vmem:[%s1221 + $0x60] sm:$0xff]
      %v1235 = vld [vmem:[%s1221 + $0x68] sm:$0xff]
      %v1236 = vld [vmem:[%s1221 + $0x70] sm:$0xff]
      %v1237 = vld [vmem:[%s1221 + $0x78] sm:$0xff]
      %v1238 = vld [vmem:[%s1221 + $0x80] sm:$0xff]
      %v1239 = vld [vmem:[%s1221 + $0x88] sm:$0xff]
      %v1240 = vld [vmem:[%s1221 + $0x90] sm:$0xff]
      %v1241 = vld [vmem:[%s1221 + $0x98] sm:$0xff]
      %v1242 = vld [vmem:[%s1221 + $0xa0] sm:$0xff]
      %v1243 = vld [vmem:[%s1221 + $0xa8] sm:$0xff]
      %v1244 = vld [vmem:[%s1221 + $0xb0] sm:$0xff]
      %v1245 = vld [vmem:[%s1221 + $0xb8] sm:$0xff]
      %v1246 = vld [vmem:[%s1221 + $0xc0] sm:$0xff]
      %v1247 = vld [vmem:[%s1221 + $0xc8] sm:$0xff]
      %v1248 = vld [vmem:[%s1221 + $0xd0] sm:$0xff]
      %v1249 = vld [vmem:[%s1221 + $0xd8] sm:$0xff]
      %v1250 = vld [vmem:[%s1221 + $0xe0] sm:$0xff]
      %v1251 = vld [vmem:[%s1221 + $0xe8] sm:$0xff]
      %v1252 = vld [vmem:[%s1221 + $0xf0] sm:$0xff]
      %v1253 = vld [vmem:[%s1221 + $0xf8] sm:$0xff]
      %1254 = vmatprep.subr.mxu0 0.0
      %1255 = vmatpush1.msra.mxu0 %v1222
      %1256 = vmatprep.subr.mxu0 0.0
      %1257 = vmatpush1.msra.mxu0 %v1223
      %1258 = vmatprep.subr.mxu0 0.0
      %1259 = vmatpush1.msra.mxu0 %v1224
      %1260 = vmatprep.subr.mxu0 0.0
      %1261 = vmatpush1.msra.mxu0 %v1225
      %1262 = vmatprep.subr.mxu0 0.0
      %1263 = vmatpush1.msra.mxu0 %v1226
      %1264 = vmatprep.subr.mxu0 0.0
      %1265 = vmatpush1.msra.mxu0 %v1227
      %1266 = vmatprep.subr.mxu0 0.0
      %1267 = vmatpush1.msra.mxu0 %v1228
      %1268 = vmatprep.subr.mxu0 0.0
      %1269 = vmatpush1.msra.mxu0 %v1229
      %1270 = vmatprep.subr.mxu0 0.0
      %1271 = vmatpush1.msra.mxu0 %v1230
      %1272 = vmatprep.subr.mxu0 0.0
      %1273 = vmatpush1.msra.mxu0 %v1231
      %1274 = vmatprep.subr.mxu0 0.0
      %1275 = vmatpush1.msra.mxu0 %v1232
      %1276 = vmatprep.subr.mxu0 0.0
      %1277 = vmatpush1.msra.mxu0 %v1233
      %1278 = vmatprep.subr.mxu0 0.0
      %1279 = vmatpush1.msra.mxu0 %v1234
      %1280 = vmatprep.subr.mxu0 0.0
      %1281 = vmatpush1.msra.mxu0 %v1235
      %1282 = vmatprep.subr.mxu0 0.0
      %1283 = vmatpush1.msra.mxu0 %v1236
      %1284 = vmatprep.subr.mxu0 0.0
      %1285 = vmatpush1.msra.mxu0 %v1237
      %1286 = vmatprep.subr.mxu0 0.0
      %1287 = vmatpush1.msra.mxu0 %v1238
      %1288 = vmatprep.subr.mxu0 0.0
      %1289 = vmatpush1.msra.mxu0 %v1239
      %1290 = vmatprep.subr.mxu0 0.0
      %1291 = vmatpush1.msra.mxu0 %v1240
      %1292 = vmatprep.subr.mxu0 0.0
      %1293 = vmatpush1.msra.mxu0 %v1241
      %1294 = vmatprep.subr.mxu0 0.0
      %1295 = vmatpush1.msra.mxu0 %v1242
      %1296 = vmatprep.subr.mxu0 0.0
      %1297 = vmatpush1.msra.mxu0 %v1243
      %1298 = vmatprep.subr.mxu0 0.0
      %1299 = vmatpush1.msra.mxu0 %v1244
      %1300 = vmatprep.subr.mxu0 0.0
      %1301 = vmatpush1.msra.mxu0 %v1245
      %1302 = vmatprep.subr.mxu0 0.0
      %1303 = vmatpush1.msra.mxu0 %v1246
      %1304 = vmatprep.subr.mxu0 0.0
      %1305 = vmatpush1.msra.mxu0 %v1247
      %1306 = vmatprep.subr.mxu0 0.0
      %1307 = vmatpush1.msra.mxu0 %v1248
      %1308 = vmatprep.subr.mxu0 0.0
      %1309 = vmatpush1.msra.mxu0 %v1249
      %1310 = vmatprep.subr.mxu0 0.0
      %1311 = vmatpush1.msra.mxu0 %v1250
      %1312 = vmatprep.subr.mxu0 0.0
      %1313 = vmatpush1.msra.mxu0 %v1251
      %1314 = vmatprep.subr.mxu0 0.0
      %1315 = vmatpush1.msra.mxu0 %v1252
      %1316 = vmatprep.subr.mxu0 0.0
      %1317 = vmatpush1.msra.mxu0 %v1253
      %1318 = vmatprep.mubr.f32.mxu0 %v531
      %1319 = vmatmul.mubr.f32.gmra.mrb[0].mxu0 %v495
      %v1320 = vpop.f32.mrb[0].mxu0
      %v1321 = vadd.f32 0.0, %v1320
      %v1322 = vpop.f32.mrb[0].mxu0
      %1323 = vdwg.mxu0
      %s1324 = scalar_lea.vmem %s1, 2048
      %v1325 = vld [vmem:[%s1324] sm:$0xff]
      %v1326 = vld [vmem:[%s1324 + $0x8] sm:$0xff]
      %v1327 = vld [vmem:[%s1324 + $0x10] sm:$0xff]
      %v1328 = vld [vmem:[%s1324 + $0x18] sm:$0xff]
      %v1329 = vld [vmem:[%s1324 + $0x20] sm:$0xff]
      %v1330 = vld [vmem:[%s1324 + $0x28] sm:$0xff]
      %v1331 = vld [vmem:[%s1324 + $0x30] sm:$0xff]
      %v1332 = vld [vmem:[%s1324 + $0x38] sm:$0xff]
      %v1333 = vld [vmem:[%s1324 + $0x40] sm:$0xff]
      %v1334 = vld [vmem:[%s1324 + $0x48] sm:$0xff]
      %v1335 = vld [vmem:[%s1324 + $0x50] sm:$0xff]
      %v1336 = vld [vmem:[%s1324 + $0x58] sm:$0xff]
      %v1337 = vld [vmem:[%s1324 + $0x60] sm:$0xff]
      %v1338 = vld [vmem:[%s1324 + $0x68] sm:$0xff]
      %v1339 = vld [vmem:[%s1324 + $0x70] sm:$0xff]
      %v1340 = vld [vmem:[%s1324 + $0x78] sm:$0xff]
      %v1341 = vld [vmem:[%s1324 + $0x80] sm:$0xff]
      %v1342 = vld [vmem:[%s1324 + $0x88] sm:$0xff]
      %v1343 = vld [vmem:[%s1324 + $0x90] sm:$0xff]
      %v1344 = vld [vmem:[%s1324 + $0x98] sm:$0xff]
      %v1345 = vld [vmem:[%s1324 + $0xa0] sm:$0xff]
      %v1346 = vld [vmem:[%s1324 + $0xa8] sm:$0xff]
      %v1347 = vld [vmem:[%s1324 + $0xb0] sm:$0xff]
      %v1348 = vld [vmem:[%s1324 + $0xb8] sm:$0xff]
      %v1349 = vld [vmem:[%s1324 + $0xc0] sm:$0xff]
      %v1350 = vld [vmem:[%s1324 + $0xc8] sm:$0xff]
      %v1351 = vld [vmem:[%s1324 + $0xd0] sm:$0xff]
      %v1352 = vld [vmem:[%s1324 + $0xd8] sm:$0xff]
      %v1353 = vld [vmem:[%s1324 + $0xe0] sm:$0xff]
      %v1354 = vld [vmem:[%s1324 + $0xe8] sm:$0xff]
      %v1355 = vld [vmem:[%s1324 + $0xf0] sm:$0xff]
      %v1356 = vld [vmem:[%s1324 + $0xf8] sm:$0xff]
      %1357 = vmatprep.subr.mxu0 0.0
      %1358 = vmatpush1.msra.mxu0 %v1325
      %1359 = vmatprep.subr.mxu0 0.0
      %1360 = vmatpush1.msra.mxu0 %v1326
      %1361 = vmatprep.subr.mxu0 0.0
      %1362 = vmatpush1.msra.mxu0 %v1327
      %1363 = vmatprep.subr.mxu0 0.0
      %1364 = vmatpush1.msra.mxu0 %v1328
      %1365 = vmatprep.subr.mxu0 0.0
      %1366 = vmatpush1.msra.mxu0 %v1329
      %1367 = vmatprep.subr.mxu0 0.0
      %1368 = vmatpush1.msra.mxu0 %v1330
      %1369 = vmatprep.subr.mxu0 0.0
      %1370 = vmatpush1.msra.mxu0 %v1331
      %1371 = vmatprep.subr.mxu0 0.0
      %1372 = vmatpush1.msra.mxu0 %v1332
      %1373 = vmatprep.subr.mxu0 0.0
      %1374 = vmatpush1.msra.mxu0 %v1333
      %1375 = vmatprep.subr.mxu0 0.0
      %1376 = vmatpush1.msra.mxu0 %v1334
      %1377 = vmatprep.subr.mxu0 0.0
      %1378 = vmatpush1.msra.mxu0 %v1335
      %1379 = vmatprep.subr.mxu0 0.0
      %1380 = vmatpush1.msra.mxu0 %v1336
      %1381 = vmatprep.subr.mxu0 0.0
      %1382 = vmatpush1.msra.mxu0 %v1337
      %1383 = vmatprep.subr.mxu0 0.0
      %1384 = vmatpush1.msra.mxu0 %v1338
      %1385 = vmatprep.subr.mxu0 0.0
      %1386 = vmatpush1.msra.mxu0 %v1339
      %1387 = vmatprep.subr.mxu0 0.0
      %1388 = vmatpush1.msra.mxu0 %v1340
      %1389 = vmatprep.subr.mxu0 0.0
      %1390 = vmatpush1.msra.mxu0 %v1341
      %1391 = vmatprep.subr.mxu0 0.0
      %1392 = vmatpush1.msra.mxu0 %v1342
      %1393 = vmatprep.subr.mxu0 0.0
      %1394 = vmatpush1.msra.mxu0 %v1343
      %1395 = vmatprep.subr.mxu0 0.0
      %1396 = vmatpush1.msra.mxu0 %v1344
      %1397 = vmatprep.subr.mxu0 0.0
      %1398 = vmatpush1.msra.mxu0 %v1345
      %1399 = vmatprep.subr.mxu0 0.0
      %1400 = vmatpush1.msra.mxu0 %v1346
      %1401 = vmatprep.subr.mxu0 0.0
      %1402 = vmatpush1.msra.mxu0 %v1347
      %1403 = vmatprep.subr.mxu0 0.0
      %1404 = vmatpush1.msra.mxu0 %v1348
      %1405 = vmatprep.subr.mxu0 0.0
      %1406 = vmatpush1.msra.mxu0 %v1349
      %1407 = vmatprep.subr.mxu0 0.0
      %1408 = vmatpush1.msra.mxu0 %v1350
      %1409 = vmatprep.subr.mxu0 0.0
      %1410 = vmatpush1.msra.mxu0 %v1351
      %1411 = vmatprep.subr.mxu0 0.0
      %1412 = vmatpush1.msra.mxu0 %v1352
      %1413 = vmatprep.subr.mxu0 0.0
      %1414 = vmatpush1.msra.mxu0 %v1353
      %1415 = vmatprep.subr.mxu0 0.0
      %1416 = vmatpush1.msra.mxu0 %v1354
      %1417 = vmatprep.subr.mxu0 0.0
      %1418 = vmatpush1.msra.mxu0 %v1355
      %1419 = vmatprep.subr.mxu0 0.0
      %1420 = vmatpush1.msra.mxu0 %v1356
      %1421 = vmatprep.mubr.f32.mxu0 %v531
      %1422 = vmatmul.mubr.f32.gmra.mrb[0].mxu0 %v495
      %v1423 = vpop.f32.mrb[0].mxu0
      %v1424 = vadd.f32 0.0, %v1423
      %v1425 = vpop.f32.mrb[0].mxu0
      %1426 = vdwg.mxu0
      %v1428 = vrot.slane %v703, 4
      %v1431 = vrot.slane %v909, 4
      %v1434 = vrot.slane %v1115, 4
      %v1437 = vrot.slane %v1321, 4
      %vm1439 = vcmask 1043456
      %v1440 = vsel %vm1439, %v600, %v1428
      %v1441 = vsel %vm1439, %v806, %v1431
      %v1442 = vsel %vm1439, %v1012, %v1434
      %v1443 = vsel %vm1439, %v1218, %v1437
      %1445 = vset.pattern.permute.xlu0 0
      %1446 = vperm.xlu0 %1445, %v497
      %v1447 = vpop.permute.xlu0 %1446
      %vm1449 = vcmask 293888
      %v1451 = vsel %vm1449, %v496, 0
      %v1454 = vsel %vm1439, %v1424, 0
      %1456 = vmatprep.subr.mxu0 0.0
      %1457 = vmatpush1.msra.mxu0 %v1440
      %1458 = vmatprep.subr.mxu0 0.0
      %1459 = vmatpush1.msra.mxu0 %v1441
      %1460 = vmatprep.subr.mxu0 0.0
      %1461 = vmatpush1.msra.mxu0 %v1442
      %1462 = vmatprep.subr.mxu0 0.0
      %1463 = vmatpush1.msra.mxu0 %v1443
      %1464 = vmatprep.subr.mxu0 0.0
      %1465 = vmatpush1.msra.mxu0 %v1454
      %1466 = vmatprep.subr.mxu0 0.0
      %1467 = vmatpush1.msra.mxu0 0.0
      %1468 = vmatprep.subr.mxu0 0.0
      %1469 = vmatpush1.msra.mxu0 0.0
      %1470 = vmatprep.subr.mxu0 0.0
      %1471 = vmatpush1.msra.mxu0 0.0
      %1472 = vmatprep.subr.mxu0 0.0
      %1473 = vmatpush1.msra.mxu0 0.0
      %1474 = vmatprep.subr.mxu0 0.0
      %1475 = vmatpush1.msra.mxu0 0.0
      %1476 = vmatprep.subr.mxu0 0.0
      %1477 = vmatpush1.msra.mxu0 0.0
      %1478 = vmatprep.subr.mxu0 0.0
      %1479 = vmatpush1.msra.mxu0 0.0
      %1480 = vmatprep.subr.mxu0 0.0
      %1481 = vmatpush1.msra.mxu0 0.0
      %1482 = vmatprep.subr.mxu0 0.0
      %1483 = vmatpush1.msra.mxu0 0.0
      %1484 = vmatprep.subr.mxu0 0.0
      %1485 = vmatpush1.msra.mxu0 0.0
      %1486 = vmatprep.subr.mxu0 0.0
      %1487 = vmatpush1.msra.mxu0 0.0
      %1488 = vmatprep.subr.mxu0 0.0
      %1489 = vmatpush1.msra.mxu0 0.0
      %1490 = vmatprep.subr.mxu0 0.0
      %1491 = vmatpush1.msra.mxu0 0.0
      %1492 = vmatprep.subr.mxu0 0.0
      %1493 = vmatpush1.msra.mxu0 0.0
      %1494 = vmatprep.subr.mxu0 0.0
      %1495 = vmatpush1.msra.mxu0 0.0
      %1496 = vmatprep.subr.mxu0 0.0
      %1497 = vmatpush1.msra.mxu0 0.0
      %1498 = vmatprep.subr.mxu0 0.0
      %1499 = vmatpush1.msra.mxu0 0.0
      %1500 = vmatprep.subr.mxu0 0.0
      %1501 = vmatpush1.msra.mxu0 0.0
      %1502 = vmatprep.subr.mxu0 0.0
      %1503 = vmatpush1.msra.mxu0 0.0
      %1504 = vmatprep.subr.mxu0 0.0
      %1505 = vmatpush1.msra.mxu0 0.0
      %1506 = vmatprep.subr.mxu0 0.0
      %1507 = vmatpush1.msra.mxu0 0.0
      %1508 = vmatprep.subr.mxu0 0.0
      %1509 = vmatpush1.msra.mxu0 0.0
      %1510 = vmatprep.subr.mxu0 0.0
      %1511 = vmatpush1.msra.mxu0 0.0
      %1512 = vmatprep.subr.mxu0 0.0
      %1513 = vmatpush1.msra.mxu0 0.0
      %1514 = vmatprep.subr.mxu0 0.0
      %1515 = vmatpush1.msra.mxu0 0.0
      %1516 = vmatprep.subr.mxu0 0.0
      %1517 = vmatpush1.msra.mxu0 0.0
      %1518 = vmatprep.subr.mxu0 0.0
      %1519 = vmatpush1.msra.mxu0 0.0
      %1520 = vmatprep.mubr.f32.mxu0 0.0
      %1521 = vmatmul.mubr.f32.gmra.mrb[0].mxu0 %v1451
      %v1522 = vpop.f32.mrb[0].mxu0
      %v1523 = vadd.f32 %v1447, %v1522
      %v1524 = vpop.f32.mrb[0].mxu0
      %1525 = vdwg.mxu0
      %v1526 = vmax.f32 %v1523, 0.0
      %v1527 = vld [vmem:[%s5] sm:$0xf]
      %v1528 = vld [vmem:[%s6] sm:$0xf]
      %v1529 = vld [vmem:[%s4] sm:$0xff]
      %v1530 = vld [vmem:[%s4 + $0x8] sm:$0xff]
      %v1531 = vld [vmem:[%s4 + $0x10] sm:$0xff]
      %v1532 = vld [vmem:[%s4 + $0x18] sm:$0xff]
      %v1533 = vld [vmem:[%s4 + $0x20] sm:$0xff]
      %v1534 = vld [vmem:[%s4 + $0x28] sm:$0xff]
      %v1535 = vld [vmem:[%s4 + $0x30] sm:$0xff]
      %v1536 = vld [vmem:[%s4 + $0x38] sm:$0xff]
      %vm1537 = vcmask 523264
      %v1539 = vsel %vm1537, %v1526, 0
      %1541 = vmatprep.subr.mxu0 0.0
      %1542 = vmatpush1.msra.mxu0 %v1529
      %1543 = vmatprep.subr.mxu0 0.0
      %1544 = vmatpush1.msra.mxu0 %v1530
      %1545 = vmatprep.subr.mxu0 0.0
      %1546 = vmatpush1.msra.mxu0 %v1531
      %1547 = vmatprep.subr.mxu0 0.0
      %1548 = vmatpush1.msra.mxu0 %v1532
      %1549 = vmatprep.subr.mxu0 0.0
      %1550 = vmatpush1.msra.mxu0 %v1533
      %1551 = vmatprep.subr.mxu0 0.0
      %1552 = vmatpush1.msra.mxu0 %v1534
      %1553 = vmatprep.subr.mxu0 0.0
      %1554 = vmatpush1.msra.mxu0 %v1535
      %1555 = vmatprep.subr.mxu0 0.0
      %1556 = vmatpush1.msra.mxu0 %v1536
      %1557 = vmatprep.subr.mxu0 0.0
      %1558 = vmatpush1.msra.mxu0 0.0
      %1559 = vmatprep.subr.mxu0 0.0
      %1560 = vmatpush1.msra.mxu0 0.0
      %1561 = vmatprep.subr.mxu0 0.0
      %1562 = vmatpush1.msra.mxu0 0.0
      %1563 = vmatprep.subr.mxu0 0.0
      %1564 = vmatpush1.msra.mxu0 0.0
      %1565 = vmatprep.subr.mxu0 0.0
      %1566 = vmatpush1.msra.mxu0 0.0
      %1567 = vmatprep.subr.mxu0 0.0
      %1568 = vmatpush1.msra.mxu0 0.0
      %1569 = vmatprep.subr.mxu0 0.0
      %1570 = vmatpush1.msra.mxu0 0.0
      %1571 = vmatprep.subr.mxu0 0.0
      %1572 = vmatpush1.msra.mxu0 0.0
      %1573 = vmatprep.subr.mxu0 0.0
      %1574 = vmatpush1.msra.mxu0 0.0
      %1575 = vmatprep.subr.mxu0 0.0
      %1576 = vmatpush1.msra.mxu0 0.0
      %1577 = vmatprep.subr.mxu0 0.0
      %1578 = vmatpush1.msra.mxu0 0.0
      %1579 = vmatprep.subr.mxu0 0.0
      %1580 = vmatpush1.msra.mxu0 0.0
      %1581 = vmatprep.subr.mxu0 0.0
      %1582 = vmatpush1.msra.mxu0 0.0
      %1583 = vmatprep.subr.mxu0 0.0
      %1584 = vmatpush1.msra.mxu0 0.0
      %1585 = vmatprep.subr.mxu0 0.0
      %1586 = vmatpush1.msra.mxu0 0.0
      %1587 = vmatprep.subr.mxu0 0.0
      %1588 = vmatpush1.msra.mxu0 0.0
      %1589 = vmatprep.subr.mxu0 0.0
      %1590 = vmatpush1.msra.mxu0 0.0
      %1591 = vmatprep.subr.mxu0 0.0
      %1592 = vmatpush1.msra.mxu0 0.0
      %1593 = vmatprep.subr.mxu0 0.0
      %1594 = vmatpush1.msra.mxu0 0.0
      %1595 = vmatprep.subr.mxu0 0.0
      %1596 = vmatpush1.msra.mxu0 0.0
      %1597 = vmatprep.subr.mxu0 0.0
      %1598 = vmatpush1.msra.mxu0 0.0
      %1599 = vmatprep.subr.mxu0 0.0
      %1600 = vmatpush1.msra.mxu0 0.0
      %1601 = vmatprep.subr.mxu0 0.0
      %1602 = vmatpush1.msra.mxu0 0.0
      %1603 = vmatprep.subr.mxu0 0.0
      %1604 = vmatpush1.msra.mxu0 0.0
      %1605 = vmatprep.mubr.f32.mxu0 0.0
      %1606 = vmatmul.mubr.f32.gmra.mrb[0].mxu0 %v1539
      %v1607 = vpop.f32.mrb[0].mxu0
      %v1608 = vadd.f32 0.0, %v1607
      %v1609 = vpop.f32.mrb[0].mxu0
      %1610 = vdwg.mxu0
      %s1611 = scalar_lea.vmem %s4, 64
      %v1612 = vld [vmem:[%s1611] sm:$0xff]
      %v1613 = vld [vmem:[%s1611 + $0x8] sm:$0xff]
      %v1614 = vld [vmem:[%s1611 + $0x10] sm:$0xff]
      %v1615 = vld [vmem:[%s1611 + $0x18] sm:$0xff]
      %v1616 = vld [vmem:[%s1611 + $0x20] sm:$0xff]
      %v1617 = vld [vmem:[%s1611 + $0x28] sm:$0xff]
      %v1618 = vld [vmem:[%s1611 + $0x30] sm:$0xff]
      %v1619 = vld [vmem:[%s1611 + $0x38] sm:$0xff]
      %1620 = vmatprep.subr.mxu0 0.0
      %1621 = vmatpush1.msra.mxu0 %v1612
      %1622 = vmatprep.subr.mxu0 0.0
      %1623 = vmatpush1.msra.mxu0 %v1613
      %1624 = vmatprep.subr.mxu0 0.0
      %1625 = vmatpush1.msra.mxu0 %v1614
      %1626 = vmatprep.subr.mxu0 0.0
      %1627 = vmatpush1.msra.mxu0 %v1615
      %1628 = vmatprep.subr.mxu0 0.0
      %1629 = vmatpush1.msra.mxu0 %v1616
      %1630 = vmatprep.subr.mxu0 0.0
      %1631 = vmatpush1.msra.mxu0 %v1617
      %1632 = vmatprep.subr.mxu0 0.0
      %1633 = vmatpush1.msra.mxu0 %v1618
      %1634 = vmatprep.subr.mxu0 0.0
      %1635 = vmatpush1.msra.mxu0 %v1619
      %1636 = vmatprep.subr.mxu0 0.0
      %1637 = vmatpush1.msra.mxu0 0.0
      %1638 = vmatprep.subr.mxu0 0.0
      %1639 = vmatpush1.msra.mxu0 0.0
      %1640 = vmatprep.subr.mxu0 0.0
      %1641 = vmatpush1.msra.mxu0 0.0
      %1642 = vmatprep.subr.mxu0 0.0
      %1643 = vmatpush1.msra.mxu0 0.0
      %1644 = vmatprep.subr.mxu0 0.0
      %1645 = vmatpush1.msra.mxu0 0.0
      %1646 = vmatprep.subr.mxu0 0.0
      %1647 = vmatpush1.msra.mxu0 0.0
      %1648 = vmatprep.subr.mxu0 0.0
      %1649 = vmatpush1.msra.mxu0 0.0
      %1650 = vmatprep.subr.mxu0 0.0
      %1651 = vmatpush1.msra.mxu0 0.0
      %1652 = vmatprep.subr.mxu0 0.0
      %1653 = vmatpush1.msra.mxu0 0.0
      %1654 = vmatprep.subr.mxu0 0.0
      %1655 = vmatpush1.msra.mxu0 0.0
      %1656 = vmatprep.subr.mxu0 0.0
      %1657 = vmatpush1.msra.mxu0 0.0
      %1658 = vmatprep.subr.mxu0 0.0
      %1659 = vmatpush1.msra.mxu0 0.0
      %1660 = vmatprep.subr.mxu0 0.0
      %1661 = vmatpush1.msra.mxu0 0.0
      %1662 = vmatprep.subr.mxu0 0.0
      %1663 = vmatpush1.msra.mxu0 0.0
      %1664 = vmatprep.subr.mxu0 0.0
      %1665 = vmatpush1.msra.mxu0 0.0
      %1666 = vmatprep.subr.mxu0 0.0
      %1667 = vmatpush1.msra.mxu0 0.0
      %1668 = vmatprep.subr.mxu0 0.0
      %1669 = vmatpush1.msra.mxu0 0.0
      %1670 = vmatprep.subr.mxu0 0.0
      %1671 = vmatpush1.msra.mxu0 0.0
      %1672 = vmatprep.subr.mxu0 0.0
      %1673 = vmatpush1.msra.mxu0 0.0
      %1674 = vmatprep.subr.mxu0 0.0
      %1675 = vmatpush1.msra.mxu0 0.0
      %1676 = vmatprep.subr.mxu0 0.0
      %1677 = vmatpush1.msra.mxu0 0.0
      %1678 = vmatprep.subr.mxu0 0.0
      %1679 = vmatpush1.msra.mxu0 0.0
      %1680 = vmatprep.subr.mxu0 0.0
      %1681 = vmatpush1.msra.mxu0 0.0
      %1682 = vmatprep.subr.mxu0 0.0
      %1683 = vmatpush1.msra.mxu0 0.0
      %1684 = vmatprep.mubr.f32.mxu0 0.0
      %1685 = vmatmul.mubr.f32.gmra.mrb[0].mxu0 %v1539
      %v1686 = vpop.f32.mrb[0].mxu0
      %v1687 = vadd.f32 0.0, %v1686
      %v1688 = vpop.f32.mrb[0].mxu0
      %1689 = vdwg.mxu0
      %s1690 = scalar_lea.vmem %s4, 128
      %v1691 = vld [vmem:[%s1690] sm:$0xff]
      %v1692 = vld [vmem:[%s1690 + $0x8] sm:$0xff]
      %v1693 = vld [vmem:[%s1690 + $0x10] sm:$0xff]
      %v1694 = vld [vmem:[%s1690 + $0x18] sm:$0xff]
      %v1695 = vld [vmem:[%s1690 + $0x20] sm:$0xff]
      %v1696 = vld [vmem:[%s1690 + $0x28] sm:$0xff]
      %v1697 = vld [vmem:[%s1690 + $0x30] sm:$0xff]
      %v1698 = vld [vmem:[%s1690 + $0x38] sm:$0xff]
      %1699 = vmatprep.subr.mxu0 0.0
      %1700 = vmatpush1.msra.mxu0 %v1691
      %1701 = vmatprep.subr.mxu0 0.0
      %1702 = vmatpush1.msra.mxu0 %v1692
      %1703 = vmatprep.subr.mxu0 0.0
      %1704 = vmatpush1.msra.mxu0 %v1693
      %1705 = vmatprep.subr.mxu0 0.0
      %1706 = vmatpush1.msra.mxu0 %v1694
      %1707 = vmatprep.subr.mxu0 0.0
      %1708 = vmatpush1.msra.mxu0 %v1695
      %1709 = vmatprep.subr.mxu0 0.0
      %1710 = vmatpush1.msra.mxu0 %v1696
      %1711 = vmatprep.subr.mxu0 0.0
      %1712 = vmatpush1.msra.mxu0 %v1697
      %1713 = vmatprep.subr.mxu0 0.0
      %1714 = vmatpush1.msra.mxu0 %v1698
      %1715 = vmatprep.subr.mxu0 0.0
      %1716 = vmatpush1.msra.mxu0 0.0
      %1717 = vmatprep.subr.mxu0 0.0
      %1718 = vmatpush1.msra.mxu0 0.0
      %1719 = vmatprep.subr.mxu0 0.0
      %1720 = vmatpush1.msra.mxu0 0.0
      %1721 = vmatprep.subr.mxu0 0.0
      %1722 = vmatpush1.msra.mxu0 0.0
      %1723 = vmatprep.subr.mxu0 0.0
      %1724 = vmatpush1.msra.mxu0 0.0
      %1725 = vmatprep.subr.mxu0 0.0
      %1726 = vmatpush1.msra.mxu0 0.0
      %1727 = vmatprep.subr.mxu0 0.0
      %1728 = vmatpush1.msra.mxu0 0.0
      %1729 = vmatprep.subr.mxu0 0.0
      %1730 = vmatpush1.msra.mxu0 0.0
      %1731 = vmatprep.subr.mxu0 0.0
      %1732 = vmatpush1.msra.mxu0 0.0
      %1733 = vmatprep.subr.mxu0 0.0
      %1734 = vmatpush1.msra.mxu0 0.0
      %1735 = vmatprep.subr.mxu0 0.0
      %1736 = vmatpush1.msra.mxu0 0.0
      %1737 = vmatprep.subr.mxu0 0.0
      %1738 = vmatpush1.msra.mxu0 0.0
      %1739 = vmatprep.subr.mxu0 0.0
      %1740 = vmatpush1.msra.mxu0 0.0
      %1741 = vmatprep.subr.mxu0 0.0
      %1742 = vmatpush1.msra.mxu0 0.0
      %1743 = vmatprep.subr.mxu0 0.0
      %1744 = vmatpush1.msra.mxu0 0.0
      %1745 = vmatprep.subr.mxu0 0.0
      %1746 = vmatpush1.msra.mxu0 0.0
      %1747 = vmatprep.subr.mxu0 0.0
      %1748 = vmatpush1.msra.mxu0 0.0
      %1749 = vmatprep.subr.mxu0 0.0
      %1750 = vmatpush1.msra.mxu0 0.0
      %1751 = vmatprep.subr.mxu0 0.0
      %1752 = vmatpush1.msra.mxu0 0.0
      %1753 = vmatprep.subr.mxu0 0.0
      %1754 = vmatpush1.msra.mxu0 0.0
      %1755 = vmatprep.subr.mxu0 0.0
      %1756 = vmatpush1.msra.mxu0 0.0
      %1757 = vmatprep.subr.mxu0 0.0
      %1758 = vmatpush1.msra.mxu0 0.0
      %1759 = vmatprep.subr.mxu0 0.0
      %1760 = vmatpush1.msra.mxu0 0.0
      %1761 = vmatprep.subr.mxu0 0.0
      %1762 = vmatpush1.msra.mxu0 0.0
      %1763 = vmatprep.mubr.f32.mxu0 0.0
      %1764 = vmatmul.mubr.f32.gmra.mrb[0].mxu0 %v1539
      %v1765 = vpop.f32.mrb[0].mxu0
      %v1766 = vadd.f32 0.0, %v1765
      %v1767 = vpop.f32.mrb[0].mxu0
      %1768 = vdwg.mxu0
      %s1769 = scalar_lea.vmem %s4, 192
      %v1770 = vld [vmem:[%s1769] sm:$0xff]
      %v1771 = vld [vmem:[%s1769 + $0x8] sm:$0xff]
      %v1772 = vld [vmem:[%s1769 + $0x10] sm:$0xff]
      %v1773 = vld [vmem:[%s1769 + $0x18] sm:$0xff]
      %v1774 = vld [vmem:[%s1769 + $0x20] sm:$0xff]
      %v1775 = vld [vmem:[%s1769 + $0x28] sm:$0xff]
      %v1776 = vld [vmem:[%s1769 + $0x30] sm:$0xff]
      %v1777 = vld [vmem:[%s1769 + $0x38] sm:$0xff]
      %1778 = vmatprep.subr.mxu0 0.0
      %1779 = vmatpush1.msra.mxu0 %v1770
      %1780 = vmatprep.subr.mxu0 0.0
      %1781 = vmatpush1.msra.mxu0 %v1771
      %1782 = vmatprep.subr.mxu0 0.0
      %1783 = vmatpush1.msra.mxu0 %v1772
      %1784 = vmatprep.subr.mxu0 0.0
      %1785 = vmatpush1.msra.mxu0 %v1773
      %1786 = vmatprep.subr.mxu0 0.0
      %1787 = vmatpush1.msra.mxu0 %v1774
      %1788 = vmatprep.subr.mxu0 0.0
      %1789 = vmatpush1.msra.mxu0 %v1775
      %1790 = vmatprep.subr.mxu0 0.0
      %1791 = vmatpush1.msra.mxu0 %v1776
      %1792 = vmatprep.subr.mxu0 0.0
      %1793 = vmatpush1.msra.mxu0 %v1777
      %1794 = vmatprep.subr.mxu0 0.0
      %1795 = vmatpush1.msra.mxu0 0.0
      %1796 = vmatprep.subr.mxu0 0.0
      %1797 = vmatpush1.msra.mxu0 0.0
      %1798 = vmatprep.subr.mxu0 0.0
      %1799 = vmatpush1.msra.mxu0 0.0
      %1800 = vmatprep.subr.mxu0 0.0
      %1801 = vmatpush1.msra.mxu0 0.0
      %1802 = vmatprep.subr.mxu0 0.0
      %1803 = vmatpush1.msra.mxu0 0.0
      %1804 = vmatprep.subr.mxu0 0.0
      %1805 = vmatpush1.msra.mxu0 0.0
      %1806 = vmatprep.subr.mxu0 0.0
      %1807 = vmatpush1.msra.mxu0 0.0
      %1808 = vmatprep.subr.mxu0 0.0
      %1809 = vmatpush1.msra.mxu0 0.0
      %1810 = vmatprep.subr.mxu0 0.0
      %1811 = vmatpush1.msra.mxu0 0.0
      %1812 = vmatprep.subr.mxu0 0.0
      %1813 = vmatpush1.msra.mxu0 0.0
      %1814 = vmatprep.subr.mxu0 0.0
      %1815 = vmatpush1.msra.mxu0 0.0
      %1816 = vmatprep.subr.mxu0 0.0
      %1817 = vmatpush1.msra.mxu0 0.0
      %1818 = vmatprep.subr.mxu0 0.0
      %1819 = vmatpush1.msra.mxu0 0.0
      %1820 = vmatprep.subr.mxu0 0.0
      %1821 = vmatpush1.msra.mxu0 0.0
      %1822 = vmatprep.subr.mxu0 0.0
      %1823 = vmatpush1.msra.mxu0 0.0
      %1824 = vmatprep.subr.mxu0 0.0
      %1825 = vmatpush1.msra.mxu0 0.0
      %1826 = vmatprep.subr.mxu0 0.0
      %1827 = vmatpush1.msra.mxu0 0.0
      %1828 = vmatprep.subr.mxu0 0.0
      %1829 = vmatpush1.msra.mxu0 0.0
      %1830 = vmatprep.subr.mxu0 0.0
      %1831 = vmatpush1.msra.mxu0 0.0
      %1832 = vmatprep.subr.mxu0 0.0
      %1833 = vmatpush1.msra.mxu0 0.0
      %1834 = vmatprep.subr.mxu0 0.0
      %1835 = vmatpush1.msra.mxu0 0.0
      %1836 = vmatprep.subr.mxu0 0.0
      %1837 = vmatpush1.msra.mxu0 0.0
      %1838 = vmatprep.subr.mxu0 0.0
      %1839 = vmatpush1.msra.mxu0 0.0
      %1840 = vmatprep.subr.mxu0 0.0
      %1841 = vmatpush1.msra.mxu0 0.0
      %1842 = vmatprep.mubr.f32.mxu0 0.0
      %1843 = vmatmul.mubr.f32.gmra.mrb[0].mxu0 %v1539
      %v1844 = vpop.f32.mrb[0].mxu0
      %v1845 = vadd.f32 0.0, %v1844
      %v1846 = vpop.f32.mrb[0].mxu0
      %1847 = vdwg.mxu0
      %s1848 = scalar_lea.vmem %s4, 256
      %v1849 = vld [vmem:[%s1848] sm:$0xff]
      %v1850 = vld [vmem:[%s1848 + $0x8] sm:$0xff]
      %v1851 = vld [vmem:[%s1848 + $0x10] sm:$0xff]
      %v1852 = vld [vmem:[%s1848 + $0x18] sm:$0xff]
      %v1853 = vld [vmem:[%s1848 + $0x20] sm:$0xff]
      %v1854 = vld [vmem:[%s1848 + $0x28] sm:$0xff]
      %v1855 = vld [vmem:[%s1848 + $0x30] sm:$0xff]
      %v1856 = vld [vmem:[%s1848 + $0x38] sm:$0xff]
      %1857 = vmatprep.subr.mxu0 0.0
      %1858 = vmatpush1.msra.mxu0 %v1849
      %1859 = vmatprep.subr.mxu0 0.0
      %1860 = vmatpush1.msra.mxu0 %v1850
      %1861 = vmatprep.subr.mxu0 0.0
      %1862 = vmatpush1.msra.mxu0 %v1851
      %1863 = vmatprep.subr.mxu0 0.0
      %1864 = vmatpush1.msra.mxu0 %v1852
      %1865 = vmatprep.subr.mxu0 0.0
      %1866 = vmatpush1.msra.mxu0 %v1853
      %1867 = vmatprep.subr.mxu0 0.0
      %1868 = vmatpush1.msra.mxu0 %v1854
      %1869 = vmatprep.subr.mxu0 0.0
      %1870 = vmatpush1.msra.mxu0 %v1855
      %1871 = vmatprep.subr.mxu0 0.0
      %1872 = vmatpush1.msra.mxu0 %v1856
      %1873 = vmatprep.subr.mxu0 0.0
      %1874 = vmatpush1.msra.mxu0 0.0
      %1875 = vmatprep.subr.mxu0 0.0
      %1876 = vmatpush1.msra.mxu0 0.0
      %1877 = vmatprep.subr.mxu0 0.0
      %1878 = vmatpush1.msra.mxu0 0.0
      %1879 = vmatprep.subr.mxu0 0.0
      %1880 = vmatpush1.msra.mxu0 0.0
      %1881 = vmatprep.subr.mxu0 0.0
      %1882 = vmatpush1.msra.mxu0 0.0
      %1883 = vmatprep.subr.mxu0 0.0
      %1884 = vmatpush1.msra.mxu0 0.0
      %1885 = vmatprep.subr.mxu0 0.0
      %1886 = vmatpush1.msra.mxu0 0.0
      %1887 = vmatprep.subr.mxu0 0.0
      %1888 = vmatpush1.msra.mxu0 0.0
      %1889 = vmatprep.subr.mxu0 0.0
      %1890 = vmatpush1.msra.mxu0 0.0
      %1891 = vmatprep.subr.mxu0 0.0
      %1892 = vmatpush1.msra.mxu0 0.0
      %1893 = vmatprep.subr.mxu0 0.0
      %1894 = vmatpush1.msra.mxu0 0.0
      %1895 = vmatprep.subr.mxu0 0.0
      %1896 = vmatpush1.msra.mxu0 0.0
      %1897 = vmatprep.subr.mxu0 0.0
      %1898 = vmatpush1.msra.mxu0 0.0
      %1899 = vmatprep.subr.mxu0 0.0
      %1900 = vmatpush1.msra.mxu0 0.0
      %1901 = vmatprep.subr.mxu0 0.0
      %1902 = vmatpush1.msra.mxu0 0.0
      %1903 = vmatprep.subr.mxu0 0.0
      %1904 = vmatpush1.msra.mxu0 0.0
      %1905 = vmatprep.subr.mxu0 0.0
      %1906 = vmatpush1.msra.mxu0 0.0
      %1907 = vmatprep.subr.mxu0 0.0
      %1908 = vmatpush1.msra.mxu0 0.0
      %1909 = vmatprep.subr.mxu0 0.0
      %1910 = vmatpush1.msra.mxu0 0.0
      %1911 = vmatprep.subr.mxu0 0.0
      %1912 = vmatpush1.msra.mxu0 0.0
      %1913 = vmatprep.subr.mxu0 0.0
      %1914 = vmatpush1.msra.mxu0 0.0
      %1915 = vmatprep.subr.mxu0 0.0
      %1916 = vmatpush1.msra.mxu0 0.0
      %1917 = vmatprep.subr.mxu0 0.0
      %1918 = vmatpush1.msra.mxu0 0.0
      %1919 = vmatprep.subr.mxu0 0.0
      %1920 = vmatpush1.msra.mxu0 0.0
      %1921 = vmatprep.mubr.f32.mxu0 0.0
      %1922 = vmatmul.mubr.f32.gmra.mrb[0].mxu0 %v1539
      %v1923 = vpop.f32.mrb[0].mxu0
      %v1924 = vadd.f32 0.0, %v1923
      %v1925 = vpop.f32.mrb[0].mxu0
      %1926 = vdwg.mxu0
      %s1927 = scalar_lea.vmem %s4, 320
      %v1928 = vld [vmem:[%s1927] sm:$0xff]
      %v1929 = vld [vmem:[%s1927 + $0x8] sm:$0xff]
      %v1930 = vld [vmem:[%s1927 + $0x10] sm:$0xff]
      %v1931 = vld [vmem:[%s1927 + $0x18] sm:$0xff]
      %v1932 = vld [vmem:[%s1927 + $0x20] sm:$0xff]
      %v1933 = vld [vmem:[%s1927 + $0x28] sm:$0xff]
      %v1934 = vld [vmem:[%s1927 + $0x30] sm:$0xff]
      %v1935 = vld [vmem:[%s1927 + $0x38] sm:$0xff]
      %1936 = vmatprep.subr.mxu0 0.0
      %1937 = vmatpush1.msra.mxu0 %v1928
      %1938 = vmatprep.subr.mxu0 0.0
      %1939 = vmatpush1.msra.mxu0 %v1929
      %1940 = vmatprep.subr.mxu0 0.0
      %1941 = vmatpush1.msra.mxu0 %v1930
      %1942 = vmatprep.subr.mxu0 0.0
      %1943 = vmatpush1.msra.mxu0 %v1931
      %1944 = vmatprep.subr.mxu0 0.0
      %1945 = vmatpush1.msra.mxu0 %v1932
      %1946 = vmatprep.subr.mxu0 0.0
      %1947 = vmatpush1.msra.mxu0 %v1933
      %1948 = vmatprep.subr.mxu0 0.0
      %1949 = vmatpush1.msra.mxu0 %v1934
      %1950 = vmatprep.subr.mxu0 0.0
      %1951 = vmatpush1.msra.mxu0 %v1935
      %1952 = vmatprep.subr.mxu0 0.0
      %1953 = vmatpush1.msra.mxu0 0.0
      %1954 = vmatprep.subr.mxu0 0.0
      %1955 = vmatpush1.msra.mxu0 0.0
      %1956 = vmatprep.subr.mxu0 0.0
      %1957 = vmatpush1.msra.mxu0 0.0
      %1958 = vmatprep.subr.mxu0 0.0
      %1959 = vmatpush1.msra.mxu0 0.0
      %1960 = vmatprep.subr.mxu0 0.0
      %1961 = vmatpush1.msra.mxu0 0.0
      %1962 = vmatprep.subr.mxu0 0.0
      %1963 = vmatpush1.msra.mxu0 0.0
      %1964 = vmatprep.subr.mxu0 0.0
      %1965 = vmatpush1.msra.mxu0 0.0
      %1966 = vmatprep.subr.mxu0 0.0
      %1967 = vmatpush1.msra.mxu0 0.0
      %1968 = vmatprep.subr.mxu0 0.0
      %1969 = vmatpush1.msra.mxu0 0.0
      %1970 = vmatprep.subr.mxu0 0.0
      %1971 = vmatpush1.msra.mxu0 0.0
      %1972 = vmatprep.subr.mxu0 0.0
      %1973 = vmatpush1.msra.mxu0 0.0
      %1974 = vmatprep.subr.mxu0 0.0
      %1975 = vmatpush1.msra.mxu0 0.0
      %1976 = vmatprep.subr.mxu0 0.0
      %1977 = vmatpush1.msra.mxu0 0.0
      %1978 = vmatprep.subr.mxu0 0.0
      %1979 = vmatpush1.msra.mxu0 0.0
      %1980 = vmatprep.subr.mxu0 0.0
      %1981 = vmatpush1.msra.mxu0 0.0
      %1982 = vmatprep.subr.mxu0 0.0
      %1983 = vmatpush1.msra.mxu0 0.0
      %1984 = vmatprep.subr.mxu0 0.0
      %1985 = vmatpush1.msra.mxu0 0.0
      %1986 = vmatprep.subr.mxu0 0.0
      %1987 = vmatpush1.msra.mxu0 0.0
      %1988 = vmatprep.subr.mxu0 0.0
      %1989 = vmatpush1.msra.mxu0 0.0
      %1990 = vmatprep.subr.mxu0 0.0
      %1991 = vmatpush1.msra.mxu0 0.0
      %1992 = vmatprep.subr.mxu0 0.0
      %1993 = vmatpush1.msra.mxu0 0.0
      %1994 = vmatprep.subr.mxu0 0.0
      %1995 = vmatpush1.msra.mxu0 0.0
      %1996 = vmatprep.subr.mxu0 0.0
      %1997 = vmatpush1.msra.mxu0 0.0
      %1998 = vmatprep.subr.mxu0 0.0
      %1999 = vmatpush1.msra.mxu0 0.0
      %2000 = vmatprep.mubr.f32.mxu0 0.0
      %2001 = vmatmul.mubr.f32.gmra.mrb[0].mxu0 %v1539
      %v2002 = vpop.f32.mrb[0].mxu0
      %v2003 = vadd.f32 0.0, %v2002
      %v2004 = vpop.f32.mrb[0].mxu0
      %2005 = vdwg.mxu0
      %s2006 = scalar_lea.vmem %s4, 384
      %v2007 = vld [vmem:[%s2006] sm:$0xff]
      %v2008 = vld [vmem:[%s2006 + $0x8] sm:$0xff]
      %v2009 = vld [vmem:[%s2006 + $0x10] sm:$0xff]
      %v2010 = vld [vmem:[%s2006 + $0x18] sm:$0xff]
      %v2011 = vld [vmem:[%s2006 + $0x20] sm:$0xff]
      %v2012 = vld [vmem:[%s2006 + $0x28] sm:$0xff]
      %v2013 = vld [vmem:[%s2006 + $0x30] sm:$0xff]
      %v2014 = vld [vmem:[%s2006 + $0x38] sm:$0xff]
      %2015 = vmatprep.subr.mxu0 0.0
      %2016 = vmatpush1.msra.mxu0 %v2007
      %2017 = vmatprep.subr.mxu0 0.0
      %2018 = vmatpush1.msra.mxu0 %v2008
      %2019 = vmatprep.subr.mxu0 0.0
      %2020 = vmatpush1.msra.mxu0 %v2009
      %2021 = vmatprep.subr.mxu0 0.0
      %2022 = vmatpush1.msra.mxu0 %v2010
      %2023 = vmatprep.subr.mxu0 0.0
      %2024 = vmatpush1.msra.mxu0 %v2011
      %2025 = vmatprep.subr.mxu0 0.0
      %2026 = vmatpush1.msra.mxu0 %v2012
      %2027 = vmatprep.subr.mxu0 0.0
      %2028 = vmatpush1.msra.mxu0 %v2013
      %2029 = vmatprep.subr.mxu0 0.0
      %2030 = vmatpush1.msra.mxu0 %v2014
      %2031 = vmatprep.subr.mxu0 0.0
      %2032 = vmatpush1.msra.mxu0 0.0
      %2033 = vmatprep.subr.mxu0 0.0
      %2034 = vmatpush1.msra.mxu0 0.0
      %2035 = vmatprep.subr.mxu0 0.0
      %2036 = vmatpush1.msra.mxu0 0.0
      %2037 = vmatprep.subr.mxu0 0.0
      %2038 = vmatpush1.msra.mxu0 0.0
      %2039 = vmatprep.subr.mxu0 0.0
      %2040 = vmatpush1.msra.mxu0 0.0
      %2041 = vmatprep.subr.mxu0 0.0
      %2042 = vmatpush1.msra.mxu0 0.0
      %2043 = vmatprep.subr.mxu0 0.0
      %2044 = vmatpush1.msra.mxu0 0.0
      %2045 = vmatprep.subr.mxu0 0.0
      %2046 = vmatpush1.msra.mxu0 0.0
      %2047 = vmatprep.subr.mxu0 0.0
      %2048 = vmatpush1.msra.mxu0 0.0
      %2049 = vmatprep.subr.mxu0 0.0
      %2050 = vmatpush1.msra.mxu0 0.0
      %2051 = vmatprep.subr.mxu0 0.0
      %2052 = vmatpush1.msra.mxu0 0.0
      %2053 = vmatprep.subr.mxu0 0.0
      %2054 = vmatpush1.msra.mxu0 0.0
      %2055 = vmatprep.subr.mxu0 0.0
      %2056 = vmatpush1.msra.mxu0 0.0
      %2057 = vmatprep.subr.mxu0 0.0
      %2058 = vmatpush1.msra.mxu0 0.0
      %2059 = vmatprep.subr.mxu0 0.0
      %2060 = vmatpush1.msra.mxu0 0.0
      %2061 = vmatprep.subr.mxu0 0.0
      %2062 = vmatpush1.msra.mxu0 0.0
      %2063 = vmatprep.subr.mxu0 0.0
      %2064 = vmatpush1.msra.mxu0 0.0
      %2065 = vmatprep.subr.mxu0 0.0
      %2066 = vmatpush1.msra.mxu0 0.0
      %2067 = vmatprep.subr.mxu0 0.0
      %2068 = vmatpush1.msra.mxu0 0.0
      %2069 = vmatprep.subr.mxu0 0.0
      %2070 = vmatpush1.msra.mxu0 0.0
      %2071 = vmatprep.subr.mxu0 0.0
      %2072 = vmatpush1.msra.mxu0 0.0
      %2073 = vmatprep.subr.mxu0 0.0
      %2074 = vmatpush1.msra.mxu0 0.0
      %2075 = vmatprep.subr.mxu0 0.0
      %2076 = vmatpush1.msra.mxu0 0.0
      %2077 = vmatprep.subr.mxu0 0.0
      %2078 = vmatpush1.msra.mxu0 0.0
      %2079 = vmatprep.mubr.f32.mxu0 0.0
      %2080 = vmatmul.mubr.f32.gmra.mrb[0].mxu0 %v1539
      %v2081 = vpop.f32.mrb[0].mxu0
      %v2082 = vadd.f32 0.0, %v2081
      %v2083 = vpop.f32.mrb[0].mxu0
      %2084 = vdwg.mxu0
      %s2085 = scalar_lea.vmem %s4, 448
      %v2086 = vld [vmem:[%s2085] sm:$0xff]
      %v2087 = vld [vmem:[%s2085 + $0x8] sm:$0xff]
      %v2088 = vld [vmem:[%s2085 + $0x10] sm:$0xff]
      %v2089 = vld [vmem:[%s2085 + $0x18] sm:$0xff]
      %v2090 = vld [vmem:[%s2085 + $0x20] sm:$0xff]
      %v2091 = vld [vmem:[%s2085 + $0x28] sm:$0xff]
      %v2092 = vld [vmem:[%s2085 + $0x30] sm:$0xff]
      %v2093 = vld [vmem:[%s2085 + $0x38] sm:$0xff]
      %2094 = vmatprep.subr.mxu0 0.0
      %2095 = vmatpush1.msra.mxu0 %v2086
      %2096 = vmatprep.subr.mxu0 0.0
      %2097 = vmatpush1.msra.mxu0 %v2087
      %2098 = vmatprep.subr.mxu0 0.0
      %2099 = vmatpush1.msra.mxu0 %v2088
      %2100 = vmatprep.subr.mxu0 0.0
      %2101 = vmatpush1.msra.mxu0 %v2089
      %2102 = vmatprep.subr.mxu0 0.0
      %2103 = vmatpush1.msra.mxu0 %v2090
      %2104 = vmatprep.subr.mxu0 0.0
      %2105 = vmatpush1.msra.mxu0 %v2091
      %2106 = vmatprep.subr.mxu0 0.0
      %2107 = vmatpush1.msra.mxu0 %v2092
      %2108 = vmatprep.subr.mxu0 0.0
      %2109 = vmatpush1.msra.mxu0 %v2093
      %2110 = vmatprep.subr.mxu0 0.0
      %2111 = vmatpush1.msra.mxu0 0.0
      %2112 = vmatprep.subr.mxu0 0.0
      %2113 = vmatpush1.msra.mxu0 0.0
      %2114 = vmatprep.subr.mxu0 0.0
      %2115 = vmatpush1.msra.mxu0 0.0
      %2116 = vmatprep.subr.mxu0 0.0
      %2117 = vmatpush1.msra.mxu0 0.0
      %2118 = vmatprep.subr.mxu0 0.0
      %2119 = vmatpush1.msra.mxu0 0.0
      %2120 = vmatprep.subr.mxu0 0.0
      %2121 = vmatpush1.msra.mxu0 0.0
      %2122 = vmatprep.subr.mxu0 0.0
      %2123 = vmatpush1.msra.mxu0 0.0
      %2124 = vmatprep.subr.mxu0 0.0
      %2125 = vmatpush1.msra.mxu0 0.0
      %2126 = vmatprep.subr.mxu0 0.0
      %2127 = vmatpush1.msra.mxu0 0.0
      %2128 = vmatprep.subr.mxu0 0.0
      %2129 = vmatpush1.msra.mxu0 0.0
      %2130 = vmatprep.subr.mxu0 0.0
      %2131 = vmatpush1.msra.mxu0 0.0
      %2132 = vmatprep.subr.mxu0 0.0
      %2133 = vmatpush1.msra.mxu0 0.0
      %2134 = vmatprep.subr.mxu0 0.0
      %2135 = vmatpush1.msra.mxu0 0.0
      %2136 = vmatprep.subr.mxu0 0.0
      %2137 = vmatpush1.msra.mxu0 0.0
      %2138 = vmatprep.subr.mxu0 0.0
      %2139 = vmatpush1.msra.mxu0 0.0
      %2140 = vmatprep.subr.mxu0 0.0
      %2141 = vmatpush1.msra.mxu0 0.0
      %2142 = vmatprep.subr.mxu0 0.0
      %2143 = vmatpush1.msra.mxu0 0.0
      %2144 = vmatprep.subr.mxu0 0.0
      %2145 = vmatpush1.msra.mxu0 0.0
      %2146 = vmatprep.subr.mxu0 0.0
      %2147 = vmatpush1.msra.mxu0 0.0
      %2148 = vmatprep.subr.mxu0 0.0
      %2149 = vmatpush1.msra.mxu0 0.0
      %2150 = vmatprep.subr.mxu0 0.0
      %2151 = vmatpush1.msra.mxu0 0.0
      %2152 = vmatprep.subr.mxu0 0.0
      %2153 = vmatpush1.msra.mxu0 0.0
      %2154 = vmatprep.subr.mxu0 0.0
      %2155 = vmatpush1.msra.mxu0 0.0
      %2156 = vmatprep.subr.mxu0 0.0
      %2157 = vmatpush1.msra.mxu0 0.0
      %2158 = vmatprep.mubr.f32.mxu0 0.0
      %2159 = vmatmul.mubr.f32.gmra.mrb[0].mxu0 %v1539
      %v2160 = vpop.f32.mrb[0].mxu0
      %v2161 = vadd.f32 0.0, %v2160
      %v2162 = vpop.f32.mrb[0].mxu0
      %2163 = vdwg.mxu0
      %s2164 = scalar_lea.vmem %s4, 512
      %v2165 = vld [vmem:[%s2164] sm:$0xff]
      %v2166 = vld [vmem:[%s2164 + $0x8] sm:$0xff]
      %v2167 = vld [vmem:[%s2164 + $0x10] sm:$0xff]
      %v2168 = vld [vmem:[%s2164 + $0x18] sm:$0xff]
      %v2169 = vld [vmem:[%s2164 + $0x20] sm:$0xff]
      %v2170 = vld [vmem:[%s2164 + $0x28] sm:$0xff]
      %v2171 = vld [vmem:[%s2164 + $0x30] sm:$0xff]
      %v2172 = vld [vmem:[%s2164 + $0x38] sm:$0xff]
      %2173 = vmatprep.subr.mxu0 0.0
      %2174 = vmatpush1.msra.mxu0 %v2165
      %2175 = vmatprep.subr.mxu0 0.0
      %2176 = vmatpush1.msra.mxu0 %v2166
      %2177 = vmatprep.subr.mxu0 0.0
      %2178 = vmatpush1.msra.mxu0 %v2167
      %2179 = vmatprep.subr.mxu0 0.0
      %2180 = vmatpush1.msra.mxu0 %v2168
      %2181 = vmatprep.subr.mxu0 0.0
      %2182 = vmatpush1.msra.mxu0 %v2169
      %2183 = vmatprep.subr.mxu0 0.0
      %2184 = vmatpush1.msra.mxu0 %v2170
      %2185 = vmatprep.subr.mxu0 0.0
      %2186 = vmatpush1.msra.mxu0 %v2171
      %2187 = vmatprep.subr.mxu0 0.0
      %2188 = vmatpush1.msra.mxu0 %v2172
      %2189 = vmatprep.subr.mxu0 0.0
      %2190 = vmatpush1.msra.mxu0 0.0
      %2191 = vmatprep.subr.mxu0 0.0
      %2192 = vmatpush1.msra.mxu0 0.0
      %2193 = vmatprep.subr.mxu0 0.0
      %2194 = vmatpush1.msra.mxu0 0.0
      %2195 = vmatprep.subr.mxu0 0.0
      %2196 = vmatpush1.msra.mxu0 0.0
      %2197 = vmatprep.subr.mxu0 0.0
      %2198 = vmatpush1.msra.mxu0 0.0
      %2199 = vmatprep.subr.mxu0 0.0
      %2200 = vmatpush1.msra.mxu0 0.0
      %2201 = vmatprep.subr.mxu0 0.0
      %2202 = vmatpush1.msra.mxu0 0.0
      %2203 = vmatprep.subr.mxu0 0.0
      %2204 = vmatpush1.msra.mxu0 0.0
      %2205 = vmatprep.subr.mxu0 0.0
      %2206 = vmatpush1.msra.mxu0 0.0
      %2207 = vmatprep.subr.mxu0 0.0
      %2208 = vmatpush1.msra.mxu0 0.0
      %2209 = vmatprep.subr.mxu0 0.0
      %2210 = vmatpush1.msra.mxu0 0.0
      %2211 = vmatprep.subr.mxu0 0.0
      %2212 = vmatpush1.msra.mxu0 0.0
      %2213 = vmatprep.subr.mxu0 0.0
      %2214 = vmatpush1.msra.mxu0 0.0
      %2215 = vmatprep.subr.mxu0 0.0
      %2216 = vmatpush1.msra.mxu0 0.0
      %2217 = vmatprep.subr.mxu0 0.0
      %2218 = vmatpush1.msra.mxu0 0.0
      %2219 = vmatprep.subr.mxu0 0.0
      %2220 = vmatpush1.msra.mxu0 0.0
      %2221 = vmatprep.subr.mxu0 0.0
      %2222 = vmatpush1.msra.mxu0 0.0
      %2223 = vmatprep.subr.mxu0 0.0
      %2224 = vmatpush1.msra.mxu0 0.0
      %2225 = vmatprep.subr.mxu0 0.0
      %2226 = vmatpush1.msra.mxu0 0.0
      %2227 = vmatprep.subr.mxu0 0.0
      %2228 = vmatpush1.msra.mxu0 0.0
      %2229 = vmatprep.subr.mxu0 0.0
      %2230 = vmatpush1.msra.mxu0 0.0
      %2231 = vmatprep.subr.mxu0 0.0
      %2232 = vmatpush1.msra.mxu0 0.0
      %2233 = vmatprep.subr.mxu0 0.0
      %2234 = vmatpush1.msra.mxu0 0.0
      %2235 = vmatprep.subr.mxu0 0.0
      %2236 = vmatpush1.msra.mxu0 0.0
      %2237 = vmatprep.mubr.f32.mxu0 0.0
      %2238 = vmatmul.mubr.f32.gmra.mrb[0].mxu0 %v1539
      %v2239 = vpop.f32.mrb[0].mxu0
      %v2240 = vadd.f32 0.0, %v2239
      %v2241 = vpop.f32.mrb[0].mxu0
      %2242 = vdwg.mxu0
      %v2244 = vrot.slane %v1687, 4
      %v2247 = vrot.slane %v1845, 4
      %v2250 = vrot.slane %v2003, 4
      %v2253 = vrot.slane %v2161, 4
      %v2255 = vsel %vm1439, %v1608, %v2244
      %v2256 = vsel %vm1439, %v1766, %v2247
      %v2257 = vsel %vm1439, %v1924, %v2250
      %v2258 = vsel %vm1439, %v2082, %v2253
      %2260 = vset.pattern.permute.xlu0 0
      %2261 = vperm.xlu0 %2260, %v1528
      %v2262 = vpop.permute.xlu0 %2261
      %v2265 = vsel %vm1449, %v1527, 0
      %v2268 = vsel %vm1439, %v2240, 0
      %2270 = vmatprep.subr.mxu0 0.0
      %2271 = vmatpush1.msra.mxu0 %v2255
      %2272 = vmatprep.subr.mxu0 0.0
      %2273 = vmatpush1.msra.mxu0 %v2256
      %2274 = vmatprep.subr.mxu0 0.0
      %2275 = vmatpush1.msra.mxu0 %v2257
      %2276 = vmatprep.subr.mxu0 0.0
      %2277 = vmatpush1.msra.mxu0 %v2258
      %2278 = vmatprep.subr.mxu0 0.0
      %2279 = vmatpush1.msra.mxu0 %v2268
      %2280 = vmatprep.subr.mxu0 0.0
      %2281 = vmatpush1.msra.mxu0 0.0
      %2282 = vmatprep.subr.mxu0 0.0
      %2283 = vmatpush1.msra.mxu0 0.0
      %2284 = vmatprep.subr.mxu0 0.0
      %2285 = vmatpush1.msra.mxu0 0.0
      %2286 = vmatprep.subr.mxu0 0.0
      %2287 = vmatpush1.msra.mxu0 0.0
      %2288 = vmatprep.subr.mxu0 0.0
      %2289 = vmatpush1.msra.mxu0 0.0
      %2290 = vmatprep.subr.mxu0 0.0
      %2291 = vmatpush1.msra.mxu0 0.0
      %2292 = vmatprep.subr.mxu0 0.0
      %2293 = vmatpush1.msra.mxu0 0.0
      %2294 = vmatprep.subr.mxu0 0.0
      %2295 = vmatpush1.msra.mxu0 0.0
      %2296 = vmatprep.subr.mxu0 0.0
      %2297 = vmatpush1.msra.mxu0 0.0
      %2298 = vmatprep.subr.mxu0 0.0
      %2299 = vmatpush1.msra.mxu0 0.0
      %2300 = vmatprep.subr.mxu0 0.0
      %2301 = vmatpush1.msra.mxu0 0.0
      %2302 = vmatprep.subr.mxu0 0.0
      %2303 = vmatpush1.msra.mxu0 0.0
      %2304 = vmatprep.subr.mxu0 0.0
      %2305 = vmatpush1.msra.mxu0 0.0
      %2306 = vmatprep.subr.mxu0 0.0
      %2307 = vmatpush1.msra.mxu0 0.0
      %2308 = vmatprep.subr.mxu0 0.0
      %2309 = vmatpush1.msra.mxu0 0.0
      %2310 = vmatprep.subr.mxu0 0.0
      %2311 = vmatpush1.msra.mxu0 0.0
      %2312 = vmatprep.subr.mxu0 0.0
      %2313 = vmatpush1.msra.mxu0 0.0
      %2314 = vmatprep.subr.mxu0 0.0
      %2315 = vmatpush1.msra.mxu0 0.0
      %2316 = vmatprep.subr.mxu0 0.0
      %2317 = vmatpush1.msra.mxu0 0.0
      %2318 = vmatprep.subr.mxu0 0.0
      %2319 = vmatpush1.msra.mxu0 0.0
      %2320 = vmatprep.subr.mxu0 0.0
      %2321 = vmatpush1.msra.mxu0 0.0
      %2322 = vmatprep.subr.mxu0 0.0
      %2323 = vmatpush1.msra.mxu0 0.0
      %2324 = vmatprep.subr.mxu0 0.0
      %2325 = vmatpush1.msra.mxu0 0.0
      %2326 = vmatprep.subr.mxu0 0.0
      %2327 = vmatpush1.msra.mxu0 0.0
      %2328 = vmatprep.subr.mxu0 0.0
      %2329 = vmatpush1.msra.mxu0 0.0
      %2330 = vmatprep.subr.mxu0 0.0
      %2331 = vmatpush1.msra.mxu0 0.0
      %2332 = vmatprep.subr.mxu0 0.0
      %2333 = vmatpush1.msra.mxu0 0.0
      %2334 = vmatprep.mubr.f32.mxu0 0.0
      %2335 = vmatmul.mubr.f32.gmra.mrb[0].mxu0 %v2265
      %v2336 = vpop.f32.mrb[0].mxu0
      %v2337 = vadd.f32 %v2262, %v2336
      %v2338 = vpop.f32.mrb[0].mxu0
      %2339 = vdwg.mxu0
      %v2340 = vmax.f32 %v2337, 0.0
      %v2341 = vld [vmem:[%s8] sm:$0xf]
      %v2342 = vld [vmem:[%s8 + $0x4] sm:$0xf]
      %v2343 = vld [vmem:[%s8 + $0x8] sm:$0xf]
      %v2344 = vld [vmem:[%s8 + $0xc] sm:$0xf]
      %v2345 = vld [vmem:[%s9] sm:$0xf]
      %v2346 = vld [vmem:[%s7] sm:$0x1]
      %v2347 = vld [vmem:[%s7 + $0x1] sm:$0x1]
      %v2348 = vld [vmem:[%s7 + $0x2] sm:$0x1]
      %v2349 = vld [vmem:[%s7 + $0x3] sm:$0x1]
      %v2350 = vld [vmem:[%s7 + $0x5] sm:$0x1]
      %v2351 = vld [vmem:[%s7 + $0x6] sm:$0x1]
      %v2352 = vld [vmem:[%s7 + $0x7] sm:$0x1]
      %v2353 = vld [vmem:[%s7 + $0x8] sm:$0x1]
      %2355 = vrot.lane.b32.xlu0 %v2340, 1
      %v2356 = vpop.permute.xlu0 %2355
      %vm2358 = vcmask 7168
      %v2359 = vsel %vm2358, 0.0, %v2356
      %v2361 = vlaneseq
      %v2362 = vshrl.u32 %v2361, 7
      %v2363 = vsub.s32 0, %v2362
      %v2364 = vrot.slane %v2349, %v2363
      %v2366 = vmul.f32 %v2359, %v2364
      %2367 = vrot.lane.b32.xlu0 %v2340, 4
      %v2368 = vpop.permute.xlu0 %2367
      %vm2370 = vcmask 31744
      %v2371 = vsel %vm2370, 0.0, %v2368
      %v2373 = vlaneseq
      %v2374 = vshrl.u32 %v2373, 7
      %v2375 = vsub.s32 0, %v2374
      %v2376 = vrot.slane %v2347, %v2375
      %v2378 = vmul.f32 %v2371, %v2376
      %2379 = vrot.lane.b32.xlu0 %v2340, 5
      %v2380 = vpop.permute.xlu0 %2379
      %vm2382 = vcmask 39936
      %v2383 = vsel %vm2382, 0.0, %v2380
      %v2385 = vlaneseq
      %v2386 = vshrl.u32 %v2385, 7
      %v2387 = vsub.s32 0, %v2386
      %v2388 = vrot.slane %v2346, %v2387
      %v2390 = vmul.f32 %v2383, %v2388
      %v2392 = vrot.slane %v2366, 4
      %v2395 = vrot.slane %v2390, 4
      %v2397 = vsel %vm1439, %v2340, %v2392
      %v2398 = vsel %vm1439, %v2378, %v2395
      %2400 = vset.pattern.permute.xlu0 0
      %2401 = vperm.xlu0 %2400, %v2345
      %v2402 = vpop.permute.xlu0 %2401
      %vm2404 = vcmask 130048
      %v2406 = vsel %vm2404, %v2341, 0
      %2408 = vmatprep.subr.mxu0 0.0
      %2409 = vmatpush1.msra.mxu0 %v2397
      %2410 = vmatprep.subr.mxu0 0.0
      %2411 = vmatpush1.msra.mxu0 %v2398
      %2412 = vmatprep.subr.mxu0 0.0
      %2413 = vmatpush1.msra.mxu0 0.0
      %2414 = vmatprep.subr.mxu0 0.0
      %2415 = vmatpush1.msra.mxu0 0.0
      %2416 = vmatprep.subr.mxu0 0.0
      %2417 = vmatpush1.msra.mxu0 0.0
      %2418 = vmatprep.subr.mxu0 0.0
      %2419 = vmatpush1.msra.mxu0 0.0
      %2420 = vmatprep.subr.mxu0 0.0
      %2421 = vmatpush1.msra.mxu0 0.0
      %2422 = vmatprep.subr.mxu0 0.0
      %2423 = vmatpush1.msra.mxu0 0.0
      %2424 = vmatprep.subr.mxu0 0.0
      %2425 = vmatpush1.msra.mxu0 0.0
      %2426 = vmatprep.subr.mxu0 0.0
      %2427 = vmatpush1.msra.mxu0 0.0
      %2428 = vmatprep.subr.mxu0 0.0
      %2429 = vmatpush1.msra.mxu0 0.0
      %2430 = vmatprep.subr.mxu0 0.0
      %2431 = vmatpush1.msra.mxu0 0.0
      %2432 = vmatprep.subr.mxu0 0.0
      %2433 = vmatpush1.msra.mxu0 0.0
      %2434 = vmatprep.subr.mxu0 0.0
      %2435 = vmatpush1.msra.mxu0 0.0
      %2436 = vmatprep.subr.mxu0 0.0
      %2437 = vmatpush1.msra.mxu0 0.0
      %2438 = vmatprep.subr.mxu0 0.0
      %2439 = vmatpush1.msra.mxu0 0.0
      %2440 = vmatprep.subr.mxu0 0.0
      %2441 = vmatpush1.msra.mxu0 0.0
      %2442 = vmatprep.subr.mxu0 0.0
      %2443 = vmatpush1.msra.mxu0 0.0
      %2444 = vmatprep.subr.mxu0 0.0
      %2445 = vmatpush1.msra.mxu0 0.0
      %2446 = vmatprep.subr.mxu0 0.0
      %2447 = vmatpush1.msra.mxu0 0.0
      %2448 = vmatprep.subr.mxu0 0.0
      %2449 = vmatpush1.msra.mxu0 0.0
      %2450 = vmatprep.subr.mxu0 0.0
      %2451 = vmatpush1.msra.mxu0 0.0
      %2452 = vmatprep.subr.mxu0 0.0
      %2453 = vmatpush1.msra.mxu0 0.0
      %2454 = vmatprep.subr.mxu0 0.0
      %2455 = vmatpush1.msra.mxu0 0.0
      %2456 = vmatprep.subr.mxu0 0.0
      %2457 = vmatpush1.msra.mxu0 0.0
      %2458 = vmatprep.subr.mxu0 0.0
      %2459 = vmatpush1.msra.mxu0 0.0
      %2460 = vmatprep.subr.mxu0 0.0
      %2461 = vmatpush1.msra.mxu0 0.0
      %2462 = vmatprep.subr.mxu0 0.0
      %2463 = vmatpush1.msra.mxu0 0.0
      %2464 = vmatprep.subr.mxu0 0.0
      %2465 = vmatpush1.msra.mxu0 0.0
      %2466 = vmatprep.subr.mxu0 0.0
      %2467 = vmatpush1.msra.mxu0 0.0
      %2468 = vmatprep.subr.mxu0 0.0
      %2469 = vmatpush1.msra.mxu0 0.0
      %2470 = vmatprep.subr.mxu0 0.0
      %2471 = vmatpush1.msra.mxu0 0.0
      %2472 = vmatprep.mubr.f32.mxu0 0.0
      %2473 = vmatmul.mubr.f32.gmra.mrb[0].mxu0 %v2406
      %v2474 = vpop.f32.mrb[0].mxu0
      %v2475 = vadd.f32 %v2402, %v2474
      %v2476 = vpop.f32.mrb[0].mxu0
      %2477 = vdwg.mxu0
      %v2478 = vmax.f32 %v2475, 0.0
      %2479 = vrot.lane.b32.xlu0 %v2340, 127
      %v2480 = vpop.permute.xlu0 %2479
      %vm2482 = vcmask 121856
      %v2483 = vsel %vm2482, %v2480, 0.0
      %v2485 = vlaneseq
      %v2486 = vshrl.u32 %v2485, 7
      %v2487 = vsub.s32 0, %v2486
      %v2488 = vrot.slane %v2350, %v2487
      %v2490 = vmul.f32 %v2483, %v2488
      %2491 = vrot.lane.b32.xlu0 %v2340, 3
      %v2492 = vpop.permute.xlu0 %2491
      %vm2494 = vcmask 23552
      %v2495 = vsel %vm2494, 0.0, %v2492
      %v2497 = vlaneseq
      %v2498 = vshrl.u32 %v2497, 7
      %v2499 = vsub.s32 0, %v2498
      %v2500 = vrot.slane %v2348, %v2499
      %v2502 = vmul.f32 %v2495, %v2500
      %v2504 = vrot.slane %v2490, 4
      %v2507 = vrot.slane %v2502, 4
      %v2509 = vsel %vm1439, %v2340, %v2504
      %v2510 = vsel %vm1439, %v2378, %v2507
      %v2512 = vsel %vm2404, %v2342, 0
      %2514 = vmatprep.subr.mxu0 0.0
      %2515 = vmatpush1.msra.mxu0 %v2509
      %2516 = vmatprep.subr.mxu0 0.0
      %2517 = vmatpush1.msra.mxu0 %v2510
      %2518 = vmatprep.subr.mxu0 0.0
      %2519 = vmatpush1.msra.mxu0 0.0
      %2520 = vmatprep.subr.mxu0 0.0
      %2521 = vmatpush1.msra.mxu0 0.0
      %2522 = vmatprep.subr.mxu0 0.0
      %2523 = vmatpush1.msra.mxu0 0.0
      %2524 = vmatprep.subr.mxu0 0.0
      %2525 = vmatpush1.msra.mxu0 0.0
      %2526 = vmatprep.subr.mxu0 0.0
      %2527 = vmatpush1.msra.mxu0 0.0
      %2528 = vmatprep.subr.mxu0 0.0
      %2529 = vmatpush1.msra.mxu0 0.0
      %2530 = vmatprep.subr.mxu0 0.0
      %2531 = vmatpush1.msra.mxu0 0.0
      %2532 = vmatprep.subr.mxu0 0.0
      %2533 = vmatpush1.msra.mxu0 0.0
      %2534 = vmatprep.subr.mxu0 0.0
      %2535 = vmatpush1.msra.mxu0 0.0
      %2536 = vmatprep.subr.mxu0 0.0
      %2537 = vmatpush1.msra.mxu0 0.0
      %2538 = vmatprep.subr.mxu0 0.0
      %2539 = vmatpush1.msra.mxu0 0.0
      %2540 = vmatprep.subr.mxu0 0.0
      %2541 = vmatpush1.msra.mxu0 0.0
      %2542 = vmatprep.subr.mxu0 0.0
      %2543 = vmatpush1.msra.mxu0 0.0
      %2544 = vmatprep.subr.mxu0 0.0
      %2545 = vmatpush1.msra.mxu0 0.0
      %2546 = vmatprep.subr.mxu0 0.0
      %2547 = vmatpush1.msra.mxu0 0.0
      %2548 = vmatprep.subr.mxu0 0.0
      %2549 = vmatpush1.msra.mxu0 0.0
      %2550 = vmatprep.subr.mxu0 0.0
      %2551 = vmatpush1.msra.mxu0 0.0
      %2552 = vmatprep.subr.mxu0 0.0
      %2553 = vmatpush1.msra.mxu0 0.0
      %2554 = vmatprep.subr.mxu0 0.0
      %2555 = vmatpush1.msra.mxu0 0.0
      %2556 = vmatprep.subr.mxu0 0.0
      %2557 = vmatpush1.msra.mxu0 0.0
      %2558 = vmatprep.subr.mxu0 0.0
      %2559 = vmatpush1.msra.mxu0 0.0
      %2560 = vmatprep.subr.mxu0 0.0
      %2561 = vmatpush1.msra.mxu0 0.0
      %2562 = vmatprep.subr.mxu0 0.0
      %2563 = vmatpush1.msra.mxu0 0.0
      %2564 = vmatprep.subr.mxu0 0.0
      %2565 = vmatpush1.msra.mxu0 0.0
      %2566 = vmatprep.subr.mxu0 0.0
      %2567 = vmatpush1.msra.mxu0 0.0
      %2568 = vmatprep.subr.mxu0 0.0
      %2569 = vmatpush1.msra.mxu0 0.0
      %2570 = vmatprep.subr.mxu0 0.0
      %2571 = vmatpush1.msra.mxu0 0.0
      %2572 = vmatprep.subr.mxu0 0.0
      %2573 = vmatpush1.msra.mxu0 0.0
      %2574 = vmatprep.subr.mxu0 0.0
      %2575 = vmatpush1.msra.mxu0 0.0
      %2576 = vmatprep.subr.mxu0 0.0
      %2577 = vmatpush1.msra.mxu0 0.0
      %2578 = vmatprep.mubr.f32.mxu0 0.0
      %2579 = vmatmul.mubr.f32.gmra.mrb[0].mxu0 %v2512
      %v2580 = vpop.f32.mrb[0].mxu0
      %v2581 = vadd.f32 %v2402, %v2580
      %v2582 = vpop.f32.mrb[0].mxu0
      %2583 = vdwg.mxu0
      %v2584 = vmax.f32 %v2581, 0.0
      %2585 = vrot.lane.b32.xlu0 %v2340, 124
      %v2586 = vpop.permute.xlu0 %2585
      %vm2588 = vcmask 97280
      %v2589 = vsel %vm2588, %v2586, 0.0
      %v2591 = vlaneseq
      %v2592 = vshrl.u32 %v2591, 7
      %v2593 = vsub.s32 0, %v2592
      %v2594 = vrot.slane %v2352, %v2593
      %v2596 = vmul.f32 %v2589, %v2594
      %2597 = vrot.lane.b32.xlu0 %v2340, 125
      %v2598 = vpop.permute.xlu0 %2597
      %vm2600 = vcmask 105472
      %v2601 = vsel %vm2600, %v2598, 0.0
      %v2603 = vlaneseq
      %v2604 = vshrl.u32 %v2603, 7
      %v2605 = vsub.s32 0, %v2604
      %v2606 = vrot.slane %v2351, %v2605
      %v2608 = vmul.f32 %v2601, %v2606
      %v2610 = vrot.slane %v2608, 4
      %v2612 = vsel %vm1439, %v2596, %v2610
      %v2614 = vsel %vm2404, %v2343, 0
      %2616 = vmatprep.subr.mxu0 0.0
      %2617 = vmatpush1.msra.mxu0 %v2397
      %2618 = vmatprep.subr.mxu0 0.0
      %2619 = vmatpush1.msra.mxu0 %v2612
      %2620 = vmatprep.subr.mxu0 0.0
      %2621 = vmatpush1.msra.mxu0 0.0
      %2622 = vmatprep.subr.mxu0 0.0
      %2623 = vmatpush1.msra.mxu0 0.0
      %2624 = vmatprep.subr.mxu0 0.0
      %2625 = vmatpush1.msra.mxu0 0.0
      %2626 = vmatprep.subr.mxu0 0.0
      %2627 = vmatpush1.msra.mxu0 0.0
      %2628 = vmatprep.subr.mxu0 0.0
      %2629 = vmatpush1.msra.mxu0 0.0
      %2630 = vmatprep.subr.mxu0 0.0
      %2631 = vmatpush1.msra.mxu0 0.0
      %2632 = vmatprep.subr.mxu0 0.0
      %2633 = vmatpush1.msra.mxu0 0.0
      %2634 = vmatprep.subr.mxu0 0.0
      %2635 = vmatpush1.msra.mxu0 0.0
      %2636 = vmatprep.subr.mxu0 0.0
      %2637 = vmatpush1.msra.mxu0 0.0
      %2638 = vmatprep.subr.mxu0 0.0
      %2639 = vmatpush1.msra.mxu0 0.0
      %2640 = vmatprep.subr.mxu0 0.0
      %2641 = vmatpush1.msra.mxu0 0.0
      %2642 = vmatprep.subr.mxu0 0.0
      %2643 = vmatpush1.msra.mxu0 0.0
      %2644 = vmatprep.subr.mxu0 0.0
      %2645 = vmatpush1.msra.mxu0 0.0
      %2646 = vmatprep.subr.mxu0 0.0
      %2647 = vmatpush1.msra.mxu0 0.0
      %2648 = vmatprep.subr.mxu0 0.0
      %2649 = vmatpush1.msra.mxu0 0.0
      %2650 = vmatprep.subr.mxu0 0.0
      %2651 = vmatpush1.msra.mxu0 0.0
      %2652 = vmatprep.subr.mxu0 0.0
      %2653 = vmatpush1.msra.mxu0 0.0
      %2654 = vmatprep.subr.mxu0 0.0
      %2655 = vmatpush1.msra.mxu0 0.0
      %2656 = vmatprep.subr.mxu0 0.0
      %2657 = vmatpush1.msra.mxu0 0.0
      %2658 = vmatprep.subr.mxu0 0.0
      %2659 = vmatpush1.msra.mxu0 0.0
      %2660 = vmatprep.subr.mxu0 0.0
      %2661 = vmatpush1.msra.mxu0 0.0
      %2662 = vmatprep.subr.mxu0 0.0
      %2663 = vmatpush1.msra.mxu0 0.0
      %2664 = vmatprep.subr.mxu0 0.0
      %2665 = vmatpush1.msra.mxu0 0.0
      %2666 = vmatprep.subr.mxu0 0.0
      %2667 = vmatpush1.msra.mxu0 0.0
      %2668 = vmatprep.subr.mxu0 0.0
      %2669 = vmatpush1.msra.mxu0 0.0
      %2670 = vmatprep.subr.mxu0 0.0
      %2671 = vmatpush1.msra.mxu0 0.0
      %2672 = vmatprep.subr.mxu0 0.0
      %2673 = vmatpush1.msra.mxu0 0.0
      %2674 = vmatprep.subr.mxu0 0.0
      %2675 = vmatpush1.msra.mxu0 0.0
      %2676 = vmatprep.subr.mxu0 0.0
      %2677 = vmatpush1.msra.mxu0 0.0
      %2678 = vmatprep.subr.mxu0 0.0
      %2679 = vmatpush1.msra.mxu0 0.0
      %2680 = vmatprep.mubr.f32.mxu0 0.0
      %2681 = vmatmul.mubr.f32.gmra.mrb[0].mxu0 %v2614
      %v2682 = vpop.f32.mrb[0].mxu0
      %v2683 = vadd.f32 %v2402, %v2682
      %v2684 = vpop.f32.mrb[0].mxu0
      %2685 = vdwg.mxu0
      %v2686 = vmax.f32 %v2683, 0.0
      %2687 = vrot.lane.b32.xlu0 %v2340, 123
      %v2688 = vpop.permute.xlu0 %2687
      %vm2690 = vcmask 89088
      %v2691 = vsel %vm2690, %v2688, 0.0
      %v2693 = vlaneseq
      %v2694 = vshrl.u32 %v2693, 7
      %v2695 = vsub.s32 0, %v2694
      %v2696 = vrot.slane %v2353, %v2695
      %v2698 = vmul.f32 %v2691, %v2696
      %v2700 = vrot.slane %v2698, 4
      %v2702 = vsel %vm1439, %v2596, %v2700
      %v2704 = vsel %vm2404, %v2344, 0
      %2706 = vmatprep.subr.mxu0 0.0
      %2707 = vmatpush1.msra.mxu0 %v2509
      %2708 = vmatprep.subr.mxu0 0.0
      %2709 = vmatpush1.msra.mxu0 %v2702
      %2710 = vmatprep.subr.mxu0 0.0
      %2711 = vmatpush1.msra.mxu0 0.0
      %2712 = vmatprep.subr.mxu0 0.0
      %2713 = vmatpush1.msra.mxu0 0.0
      %2714 = vmatprep.subr.mxu0 0.0
      %2715 = vmatpush1.msra.mxu0 0.0
      %2716 = vmatprep.subr.mxu0 0.0
      %2717 = vmatpush1.msra.mxu0 0.0
      %2718 = vmatprep.subr.mxu0 0.0
      %2719 = vmatpush1.msra.mxu0 0.0
      %2720 = vmatprep.subr.mxu0 0.0
      %2721 = vmatpush1.msra.mxu0 0.0
      %2722 = vmatprep.subr.mxu0 0.0
      %2723 = vmatpush1.msra.mxu0 0.0
      %2724 = vmatprep.subr.mxu0 0.0
      %2725 = vmatpush1.msra.mxu0 0.0
      %2726 = vmatprep.subr.mxu0 0.0
      %2727 = vmatpush1.msra.mxu0 0.0
      %2728 = vmatprep.subr.mxu0 0.0
      %2729 = vmatpush1.msra.mxu0 0.0
      %2730 = vmatprep.subr.mxu0 0.0
      %2731 = vmatpush1.msra.mxu0 0.0
      %2732 = vmatprep.subr.mxu0 0.0
      %2733 = vmatpush1.msra.mxu0 0.0
      %2734 = vmatprep.subr.mxu0 0.0
      %2735 = vmatpush1.msra.mxu0 0.0
      %2736 = vmatprep.subr.mxu0 0.0
      %2737 = vmatpush1.msra.mxu0 0.0
      %2738 = vmatprep.subr.mxu0 0.0
      %2739 = vmatpush1.msra.mxu0 0.0
      %2740 = vmatprep.subr.mxu0 0.0
      %2741 = vmatpush1.msra.mxu0 0.0
      %2742 = vmatprep.subr.mxu0 0.0
      %2743 = vmatpush1.msra.mxu0 0.0
      %2744 = vmatprep.subr.mxu0 0.0
      %2745 = vmatpush1.msra.mxu0 0.0
      %2746 = vmatprep.subr.mxu0 0.0
      %2747 = vmatpush1.msra.mxu0 0.0
      %2748 = vmatprep.subr.mxu0 0.0
      %2749 = vmatpush1.msra.mxu0 0.0
      %2750 = vmatprep.subr.mxu0 0.0
      %2751 = vmatpush1.msra.mxu0 0.0
      %2752 = vmatprep.subr.mxu0 0.0
      %2753 = vmatpush1.msra.mxu0 0.0
      %2754 = vmatprep.subr.mxu0 0.0
      %2755 = vmatpush1.msra.mxu0 0.0
      %2756 = vmatprep.subr.mxu0 0.0
      %2757 = vmatpush1.msra.mxu0 0.0
      %2758 = vmatprep.subr.mxu0 0.0
      %2759 = vmatpush1.msra.mxu0 0.0
      %2760 = vmatprep.subr.mxu0 0.0
      %2761 = vmatpush1.msra.mxu0 0.0
      %2762 = vmatprep.subr.mxu0 0.0
      %2763 = vmatpush1.msra.mxu0 0.0
      %2764 = vmatprep.subr.mxu0 0.0
      %2765 = vmatpush1.msra.mxu0 0.0
      %2766 = vmatprep.subr.mxu0 0.0
      %2767 = vmatpush1.msra.mxu0 0.0
      %2768 = vmatprep.subr.mxu0 0.0
      %2769 = vmatpush1.msra.mxu0 0.0
      %2770 = vmatprep.mubr.f32.mxu0 0.0
      %2771 = vmatmul.mubr.f32.gmra.mrb[0].mxu0 %v2704
      %v2772 = vpop.f32.mrb[0].mxu0
      %v2773 = vadd.f32 %v2402, %v2772
      %v2774 = vpop.f32.mrb[0].mxu0
      %2775 = vdwg.mxu0
      %v2776 = vmax.f32 %v2773, 0.0
      %2778 = vrot.lane.b32.xlu0 %v2584, 16
      %v2779 = vpop.permute.xlu0 %2778
      %2782 = vrot.lane.b32.xlu0 %v2686, 32
      %v2783 = vpop.permute.xlu0 %2782
      %2786 = vrot.lane.b32.xlu0 %v2776, 48
      %v2787 = vpop.permute.xlu0 %2786
      %v2789 = vsel %vm2404, %v2478, %v2779
      %vm2790 = vcmask 261120
      %v2791 = vsel %vm2790, %v2789, %v2783
      %vm2792 = vcmask 392192
      %v2793 = vsel %vm2792, %v2791, %v2787
      %v2794 = vld [vmem:[%s10] sm:$0xff]
      %v2795 = vld [vmem:[%s10 + $0x8] sm:$0xff]
      %v2796 = vld [vmem:[%s10 + $0x10] sm:$0xff]
      %v2797 = vld [vmem:[%s10 + $0x18] sm:$0xff]
      %v2798 = vld [vmem:[%s10 + $0x20] sm:$0xff]
      %v2799 = vld [vmem:[%s10 + $0x28] sm:$0xff]
      %v2800 = vld [vmem:[%s10 + $0x30] sm:$0xff]
      %v2801 = vld [vmem:[%s10 + $0x38] sm:$0xff]
      %v2803 = vsel %vm1537, %v2793, 0
      %2805 = vmatprep.subr.mxu0 0.0
      %2806 = vmatpush1.msra.mxu0 %v2794
      %2807 = vmatprep.subr.mxu0 0.0
      %2808 = vmatpush1.msra.mxu0 %v2795
      %2809 = vmatprep.subr.mxu0 0.0
      %2810 = vmatpush1.msra.mxu0 %v2796
      %2811 = vmatprep.subr.mxu0 0.0
      %2812 = vmatpush1.msra.mxu0 %v2797
      %2813 = vmatprep.subr.mxu0 0.0
      %2814 = vmatpush1.msra.mxu0 %v2798
      %2815 = vmatprep.subr.mxu0 0.0
      %2816 = vmatpush1.msra.mxu0 %v2799
      %2817 = vmatprep.subr.mxu0 0.0
      %2818 = vmatpush1.msra.mxu0 %v2800
      %2819 = vmatprep.subr.mxu0 0.0
      %2820 = vmatpush1.msra.mxu0 %v2801
      %2821 = vmatprep.subr.mxu0 0.0
      %2822 = vmatpush1.msra.mxu0 0.0
      %2823 = vmatprep.subr.mxu0 0.0
      %2824 = vmatpush1.msra.mxu0 0.0
      %2825 = vmatprep.subr.mxu0 0.0
      %2826 = vmatpush1.msra.mxu0 0.0
      %2827 = vmatprep.subr.mxu0 0.0
      %2828 = vmatpush1.msra.mxu0 0.0
      %2829 = vmatprep.subr.mxu0 0.0
      %2830 = vmatpush1.msra.mxu0 0.0
      %2831 = vmatprep.subr.mxu0 0.0
      %2832 = vmatpush1.msra.mxu0 0.0
      %2833 = vmatprep.subr.mxu0 0.0
      %2834 = vmatpush1.msra.mxu0 0.0
      %2835 = vmatprep.subr.mxu0 0.0
      %2836 = vmatpush1.msra.mxu0 0.0
      %2837 = vmatprep.subr.mxu0 0.0
      %2838 = vmatpush1.msra.mxu0 0.0
      %2839 = vmatprep.subr.mxu0 0.0
      %2840 = vmatpush1.msra.mxu0 0.0
      %2841 = vmatprep.subr.mxu0 0.0
      %2842 = vmatpush1.msra.mxu0 0.0
      %2843 = vmatprep.subr.mxu0 0.0
      %2844 = vmatpush1.msra.mxu0 0.0
      %2845 = vmatprep.subr.mxu0 0.0
      %2846 = vmatpush1.msra.mxu0 0.0
      %2847 = vmatprep.subr.mxu0 0.0
      %2848 = vmatpush1.msra.mxu0 0.0
      %2849 = vmatprep.subr.mxu0 0.0
      %2850 = vmatpush1.msra.mxu0 0.0
      %2851 = vmatprep.subr.mxu0 0.0
      %2852 = vmatpush1.msra.mxu0 0.0
      %2853 = vmatprep.subr.mxu0 0.0
      %2854 = vmatpush1.msra.mxu0 0.0
      %2855 = vmatprep.subr.mxu0 0.0
      %2856 = vmatpush1.msra.mxu0 0.0
      %2857 = vmatprep.subr.mxu0 0.0
      %2858 = vmatpush1.msra.mxu0 0.0
      %2859 = vmatprep.subr.mxu0 0.0
      %2860 = vmatpush1.msra.mxu0 0.0
      %2861 = vmatprep.subr.mxu0 0.0
      %2862 = vmatpush1.msra.mxu0 0.0
      %2863 = vmatprep.subr.mxu0 0.0
      %2864 = vmatpush1.msra.mxu0 0.0
      %2865 = vmatprep.subr.mxu0 0.0
      %2866 = vmatpush1.msra.mxu0 0.0
      %2867 = vmatprep.subr.mxu0 0.0
      %2868 = vmatpush1.msra.mxu0 0.0
      %2869 = vmatprep.mubr.f32.mxu0 0.0
      %2870 = vmatmul.mubr.f32.gmra.mrb[0].mxu0 %v2803
      %v2871 = vpop.f32.mrb[0].mxu0
      %v2872 = vadd.f32 0.0, %v2871
      %v2873 = vpop.f32.mrb[0].mxu0
      %2874 = vdwg.mxu0
      %v2875 = vrot.slane %v1526, 4
      %v2877 = vsel %vm1439, %v2872, %v2875
      %v2878 = vld [vmem:[%s12] sm:$0xf]
      %v2879 = vld [vmem:[%s12 + $0x4] sm:$0xf]
      %v2880 = vld [vmem:[%s12 + $0x8] sm:$0xf]
      %v2881 = vld [vmem:[%s12 + $0xc] sm:$0xf]
      %v2882 = vld [vmem:[%s13] sm:$0xf]
      %v2883 = vld [vmem:[%s11] sm:$0x1]
      %v2884 = vld [vmem:[%s11 + $0x1] sm:$0x1]
      %v2885 = vld [vmem:[%s11 + $0x2] sm:$0x1]
      %v2886 = vld [vmem:[%s11 + $0x3] sm:$0x1]
      %v2887 = vld [vmem:[%s11 + $0x5] sm:$0x1]
      %v2888 = vld [vmem:[%s11 + $0x6] sm:$0x1]
      %v2889 = vld [vmem:[%s11 + $0x7] sm:$0x1]
      %v2890 = vld [vmem:[%s11 + $0x8] sm:$0x1]
      %2892 = vrot.lane.b32.xlu0 %v2877, 1
      %v2893 = vpop.permute.xlu0 %2892
      %v2895 = vsel %vm2358, 0.0, %v2893
      %v2897 = vlaneseq
      %v2898 = vshrl.u32 %v2897, 7
      %v2899 = vsub.s32 0, %v2898
      %v2900 = vrot.slane %v2886, %v2899
      %v2902 = vmul.f32 %v2895, %v2900
      %2903 = vrot.lane.b32.xlu0 %v2877, 8
      %v2904 = vpop.permute.xlu0 %2903
      %vm2906 = vcmask 64512
      %v2907 = vsel %vm2906, 0.0, %v2904
      %v2909 = vlaneseq
      %v2910 = vshrl.u32 %v2909, 7
      %v2911 = vsub.s32 0, %v2910
      %v2912 = vrot.slane %v2884, %v2911
      %v2914 = vmul.f32 %v2907, %v2912
      %2915 = vrot.lane.b32.xlu0 %v2877, 9
      %v2916 = vpop.permute.xlu0 %2915
      %vm2918 = vcmask 72704
      %v2919 = vsel %vm2918, 0.0, %v2916
      %v2921 = vlaneseq
      %v2922 = vshrl.u32 %v2921, 7
      %v2923 = vsub.s32 0, %v2922
      %v2924 = vrot.slane %v2883, %v2923
      %v2926 = vmul.f32 %v2919, %v2924
      %2928 = vset.pattern.permute.xlu0 0
      %2929 = vperm.xlu0 %2928, %v2882
      %v2930 = vpop.permute.xlu0 %2929
      %v2933 = vsel %vm2790, %v2878, 0
      %2935 = vmatprep.subr.mxu0 0.0
      %2936 = vmatpush1.msra.mxu0 %v2877
      %2937 = vmatprep.subr.mxu0 0.0
      %2938 = vmatpush1.msra.mxu0 %v2902
      %2939 = vmatprep.subr.mxu0 0.0
      %2940 = vmatpush1.msra.mxu0 %v2914
      %2941 = vmatprep.subr.mxu0 0.0
      %2942 = vmatpush1.msra.mxu0 %v2926
      %2943 = vmatprep.subr.mxu0 0.0
      %2944 = vmatpush1.msra.mxu0 0.0
      %2945 = vmatprep.subr.mxu0 0.0
      %2946 = vmatpush1.msra.mxu0 0.0
      %2947 = vmatprep.subr.mxu0 0.0
      %2948 = vmatpush1.msra.mxu0 0.0
      %2949 = vmatprep.subr.mxu0 0.0
      %2950 = vmatpush1.msra.mxu0 0.0
      %2951 = vmatprep.subr.mxu0 0.0
      %2952 = vmatpush1.msra.mxu0 0.0
      %2953 = vmatprep.subr.mxu0 0.0
      %2954 = vmatpush1.msra.mxu0 0.0
      %2955 = vmatprep.subr.mxu0 0.0
      %2956 = vmatpush1.msra.mxu0 0.0
      %2957 = vmatprep.subr.mxu0 0.0
      %2958 = vmatpush1.msra.mxu0 0.0
      %2959 = vmatprep.subr.mxu0 0.0
      %2960 = vmatpush1.msra.mxu0 0.0
      %2961 = vmatprep.subr.mxu0 0.0
      %2962 = vmatpush1.msra.mxu0 0.0
      %2963 = vmatprep.subr.mxu0 0.0
      %2964 = vmatpush1.msra.mxu0 0.0
      %2965 = vmatprep.subr.mxu0 0.0
      %2966 = vmatpush1.msra.mxu0 0.0
      %2967 = vmatprep.subr.mxu0 0.0
      %2968 = vmatpush1.msra.mxu0 0.0
      %2969 = vmatprep.subr.mxu0 0.0
      %2970 = vmatpush1.msra.mxu0 0.0
      %2971 = vmatprep.subr.mxu0 0.0
      %2972 = vmatpush1.msra.mxu0 0.0
      %2973 = vmatprep.subr.mxu0 0.0
      %2974 = vmatpush1.msra.mxu0 0.0
      %2975 = vmatprep.subr.mxu0 0.0
      %2976 = vmatpush1.msra.mxu0 0.0
      %2977 = vmatprep.subr.mxu0 0.0
      %2978 = vmatpush1.msra.mxu0 0.0
      %2979 = vmatprep.subr.mxu0 0.0
      %2980 = vmatpush1.msra.mxu0 0.0
      %2981 = vmatprep.subr.mxu0 0.0
      %2982 = vmatpush1.msra.mxu0 0.0
      %2983 = vmatprep.subr.mxu0 0.0
      %2984 = vmatpush1.msra.mxu0 0.0
      %2985 = vmatprep.subr.mxu0 0.0
      %2986 = vmatpush1.msra.mxu0 0.0
      %2987 = vmatprep.subr.mxu0 0.0
      %2988 = vmatpush1.msra.mxu0 0.0
      %2989 = vmatprep.subr.mxu0 0.0
      %2990 = vmatpush1.msra.mxu0 0.0
      %2991 = vmatprep.subr.mxu0 0.0
      %2992 = vmatpush1.msra.mxu0 0.0
      %2993 = vmatprep.subr.mxu0 0.0
      %2994 = vmatpush1.msra.mxu0 0.0
      %2995 = vmatprep.subr.mxu0 0.0
      %2996 = vmatpush1.msra.mxu0 0.0
      %2997 = vmatprep.subr.mxu0 0.0
      %2998 = vmatpush1.msra.mxu0 0.0
      %2999 = vmatprep.mubr.f32.mxu0 0.0
      %3000 = vmatmul.mubr.f32.gmra.mrb[0].mxu0 %v2933
      %v3001 = vpop.f32.mrb[0].mxu0
      %v3002 = vadd.f32 %v2930, %v3001
      %v3003 = vpop.f32.mrb[0].mxu0
      %3004 = vdwg.mxu0
      %v3005 = vmax.f32 %v3002, 0.0
      %3006 = vrot.lane.b32.xlu0 %v2877, 127
      %v3007 = vpop.permute.xlu0 %3006
      %vm3009 = vcmask 515072
      %v3010 = vsel %vm3009, %v3007, 0.0
      %v3012 = vlaneseq
      %v3013 = vshrl.u32 %v3012, 7
      %v3014 = vsub.s32 0, %v3013
      %v3015 = vrot.slane %v2887, %v3014
      %v3017 = vmul.f32 %v3010, %v3015
      %3018 = vrot.lane.b32.xlu0 %v2877, 7
      %v3019 = vpop.permute.xlu0 %3018
      %vm3021 = vcmask 56320
      %v3022 = vsel %vm3021, 0.0, %v3019
      %v3024 = vlaneseq
      %v3025 = vshrl.u32 %v3024, 7
      %v3026 = vsub.s32 0, %v3025
      %v3027 = vrot.slane %v2885, %v3026
      %v3029 = vmul.f32 %v3022, %v3027
      %v3031 = vsel %vm2790, %v2879, 0
      %3033 = vmatprep.subr.mxu0 0.0
      %3034 = vmatpush1.msra.mxu0 %v2877
      %3035 = vmatprep.subr.mxu0 0.0
      %3036 = vmatpush1.msra.mxu0 %v3017
      %3037 = vmatprep.subr.mxu0 0.0
      %3038 = vmatpush1.msra.mxu0 %v2914
      %3039 = vmatprep.subr.mxu0 0.0
      %3040 = vmatpush1.msra.mxu0 %v3029
      %3041 = vmatprep.subr.mxu0 0.0
      %3042 = vmatpush1.msra.mxu0 0.0
      %3043 = vmatprep.subr.mxu0 0.0
      %3044 = vmatpush1.msra.mxu0 0.0
      %3045 = vmatprep.subr.mxu0 0.0
      %3046 = vmatpush1.msra.mxu0 0.0
      %3047 = vmatprep.subr.mxu0 0.0
      %3048 = vmatpush1.msra.mxu0 0.0
      %3049 = vmatprep.subr.mxu0 0.0
      %3050 = vmatpush1.msra.mxu0 0.0
      %3051 = vmatprep.subr.mxu0 0.0
      %3052 = vmatpush1.msra.mxu0 0.0
      %3053 = vmatprep.subr.mxu0 0.0
      %3054 = vmatpush1.msra.mxu0 0.0
      %3055 = vmatprep.subr.mxu0 0.0
      %3056 = vmatpush1.msra.mxu0 0.0
      %3057 = vmatprep.subr.mxu0 0.0
      %3058 = vmatpush1.msra.mxu0 0.0
      %3059 = vmatprep.subr.mxu0 0.0
      %3060 = vmatpush1.msra.mxu0 0.0
      %3061 = vmatprep.subr.mxu0 0.0
      %3062 = vmatpush1.msra.mxu0 0.0
      %3063 = vmatprep.subr.mxu0 0.0
      %3064 = vmatpush1.msra.mxu0 0.0
      %3065 = vmatprep.subr.mxu0 0.0
      %3066 = vmatpush1.msra.mxu0 0.0
      %3067 = vmatprep.subr.mxu0 0.0
      %3068 = vmatpush1.msra.mxu0 0.0
      %3069 = vmatprep.subr.mxu0 0.0
      %3070 = vmatpush1.msra.mxu0 0.0
      %3071 = vmatprep.subr.mxu0 0.0
      %3072 = vmatpush1.msra.mxu0 0.0
      %3073 = vmatprep.subr.mxu0 0.0
      %3074 = vmatpush1.msra.mxu0 0.0
      %3075 = vmatprep.subr.mxu0 0.0
      %3076 = vmatpush1.msra.mxu0 0.0
      %3077 = vmatprep.subr.mxu0 0.0
      %3078 = vmatpush1.msra.mxu0 0.0
      %3079 = vmatprep.subr.mxu0 0.0
      %3080 = vmatpush1.msra.mxu0 0.0
      %3081 = vmatprep.subr.mxu0 0.0
      %3082 = vmatpush1.msra.mxu0 0.0
      %3083 = vmatprep.subr.mxu0 0.0
      %3084 = vmatpush1.msra.mxu0 0.0
      %3085 = vmatprep.subr.mxu0 0.0
      %3086 = vmatpush1.msra.mxu0 0.0
      %3087 = vmatprep.subr.mxu0 0.0
      %3088 = vmatpush1.msra.mxu0 0.0
      %3089 = vmatprep.subr.mxu0 0.0
      %3090 = vmatpush1.msra.mxu0 0.0
      %3091 = vmatprep.subr.mxu0 0.0
      %3092 = vmatpush1.msra.mxu0 0.0
      %3093 = vmatprep.subr.mxu0 0.0
      %3094 = vmatpush1.msra.mxu0 0.0
      %3095 = vmatprep.subr.mxu0 0.0
      %3096 = vmatpush1.msra.mxu0 0.0
      %3097 = vmatprep.mubr.f32.mxu0 0.0
      %3098 = vmatmul.mubr.f32.gmra.mrb[0].mxu0 %v3031
      %v3099 = vpop.f32.mrb[0].mxu0
      %v3100 = vadd.f32 %v2930, %v3099
      %v3101 = vpop.f32.mrb[0].mxu0
      %3102 = vdwg.mxu0
      %v3103 = vmax.f32 %v3100, 0.0
      %3104 = vrot.lane.b32.xlu0 %v2877, 120
      %v3105 = vpop.permute.xlu0 %3104
      %vm3107 = vcmask 457728
      %v3108 = vsel %vm3107, %v3105, 0.0
      %v3110 = vlaneseq
      %v3111 = vshrl.u32 %v3110, 7
      %v3112 = vsub.s32 0, %v3111
      %v3113 = vrot.slane %v2889, %v3112
      %v3115 = vmul.f32 %v3108, %v3113
      %3116 = vrot.lane.b32.xlu0 %v2877, 121
      %v3117 = vpop.permute.xlu0 %3116
      %vm3119 = vcmask 465920
      %v3120 = vsel %vm3119, %v3117, 0.0
      %v3122 = vlaneseq
      %v3123 = vshrl.u32 %v3122, 7
      %v3124 = vsub.s32 0, %v3123
      %v3125 = vrot.slane %v2888, %v3124
      %v3127 = vmul.f32 %v3120, %v3125
      %v3129 = vsel %vm2790, %v2880, 0
      %3131 = vmatprep.subr.mxu0 0.0
      %3132 = vmatpush1.msra.mxu0 %v2877
      %3133 = vmatprep.subr.mxu0 0.0
      %3134 = vmatpush1.msra.mxu0 %v2902
      %3135 = vmatprep.subr.mxu0 0.0
      %3136 = vmatpush1.msra.mxu0 %v3115
      %3137 = vmatprep.subr.mxu0 0.0
      %3138 = vmatpush1.msra.mxu0 %v3127
      %3139 = vmatprep.subr.mxu0 0.0
      %3140 = vmatpush1.msra.mxu0 0.0
      %3141 = vmatprep.subr.mxu0 0.0
      %3142 = vmatpush1.msra.mxu0 0.0
      %3143 = vmatprep.subr.mxu0 0.0
      %3144 = vmatpush1.msra.mxu0 0.0
      %3145 = vmatprep.subr.mxu0 0.0
      %3146 = vmatpush1.msra.mxu0 0.0
      %3147 = vmatprep.subr.mxu0 0.0
      %3148 = vmatpush1.msra.mxu0 0.0
      %3149 = vmatprep.subr.mxu0 0.0
      %3150 = vmatpush1.msra.mxu0 0.0
      %3151 = vmatprep.subr.mxu0 0.0
      %3152 = vmatpush1.msra.mxu0 0.0
      %3153 = vmatprep.subr.mxu0 0.0
      %3154 = vmatpush1.msra.mxu0 0.0
      %3155 = vmatprep.subr.mxu0 0.0
      %3156 = vmatpush1.msra.mxu0 0.0
      %3157 = vmatprep.subr.mxu0 0.0
      %3158 = vmatpush1.msra.mxu0 0.0
      %3159 = vmatprep.subr.mxu0 0.0
      %3160 = vmatpush1.msra.mxu0 0.0
      %3161 = vmatprep.subr.mxu0 0.0
      %3162 = vmatpush1.msra.mxu0 0.0
      %3163 = vmatprep.subr.mxu0 0.0
      %3164 = vmatpush1.msra.mxu0 0.0
      %3165 = vmatprep.subr.mxu0 0.0
      %3166 = vmatpush1.msra.mxu0 0.0
      %3167 = vmatprep.subr.mxu0 0.0
      %3168 = vmatpush1.msra.mxu0 0.0
      %3169 = vmatprep.subr.mxu0 0.0
      %3170 = vmatpush1.msra.mxu0 0.0
      %3171 = vmatprep.subr.mxu0 0.0
      %3172 = vmatpush1.msra.mxu0 0.0
      %3173 = vmatprep.subr.mxu0 0.0
      %3174 = vmatpush1.msra.mxu0 0.0
      %3175 = vmatprep.subr.mxu0 0.0
      %3176 = vmatpush1.msra.mxu0 0.0
      %3177 = vmatprep.subr.mxu0 0.0
      %3178 = vmatpush1.msra.mxu0 0.0
      %3179 = vmatprep.subr.mxu0 0.0
      %3180 = vmatpush1.msra.mxu0 0.0
      %3181 = vmatprep.subr.mxu0 0.0
      %3182 = vmatpush1.msra.mxu0 0.0
      %3183 = vmatprep.subr.mxu0 0.0
      %3184 = vmatpush1.msra.mxu0 0.0
      %3185 = vmatprep.subr.mxu0 0.0
      %3186 = vmatpush1.msra.mxu0 0.0
      %3187 = vmatprep.subr.mxu0 0.0
      %3188 = vmatpush1.msra.mxu0 0.0
      %3189 = vmatprep.subr.mxu0 0.0
      %3190 = vmatpush1.msra.mxu0 0.0
      %3191 = vmatprep.subr.mxu0 0.0
      %3192 = vmatpush1.msra.mxu0 0.0
      %3193 = vmatprep.subr.mxu0 0.0
      %3194 = vmatpush1.msra.mxu0 0.0
      %3195 = vmatprep.mubr.f32.mxu0 0.0
      %3196 = vmatmul.mubr.f32.gmra.mrb[0].mxu0 %v3129
      %v3197 = vpop.f32.mrb[0].mxu0
      %v3198 = vadd.f32 %v2930, %v3197
      %v3199 = vpop.f32.mrb[0].mxu0
      %3200 = vdwg.mxu0
      %v3201 = vmax.f32 %v3198, 0.0
      %3202 = vrot.lane.b32.xlu0 %v2877, 119
      %v3203 = vpop.permute.xlu0 %3202
      %vm3205 = vcmask 449536
      %v3206 = vsel %vm3205, %v3203, 0.0
      %v3208 = vlaneseq
      %v3209 = vshrl.u32 %v3208, 7
      %v3210 = vsub.s32 0, %v3209
      %v3211 = vrot.slane %v2890, %v3210
      %v3213 = vmul.f32 %v3206, %v3211
      %v3215 = vsel %vm2790, %v2881, 0
      %3217 = vmatprep.subr.mxu0 0.0
      %3218 = vmatpush1.msra.mxu0 %v2877
      %3219 = vmatprep.subr.mxu0 0.0
      %3220 = vmatpush1.msra.mxu0 %v3017
      %3221 = vmatprep.subr.mxu0 0.0
      %3222 = vmatpush1.msra.mxu0 %v3115
      %3223 = vmatprep.subr.mxu0 0.0
      %3224 = vmatpush1.msra.mxu0 %v3213
      %3225 = vmatprep.subr.mxu0 0.0
      %3226 = vmatpush1.msra.mxu0 0.0
      %3227 = vmatprep.subr.mxu0 0.0
      %3228 = vmatpush1.msra.mxu0 0.0
      %3229 = vmatprep.subr.mxu0 0.0
      %3230 = vmatpush1.msra.mxu0 0.0
      %3231 = vmatprep.subr.mxu0 0.0
      %3232 = vmatpush1.msra.mxu0 0.0
      %3233 = vmatprep.subr.mxu0 0.0
      %3234 = vmatpush1.msra.mxu0 0.0
      %3235 = vmatprep.subr.mxu0 0.0
      %3236 = vmatpush1.msra.mxu0 0.0
      %3237 = vmatprep.subr.mxu0 0.0
      %3238 = vmatpush1.msra.mxu0 0.0
      %3239 = vmatprep.subr.mxu0 0.0
      %3240 = vmatpush1.msra.mxu0 0.0
      %3241 = vmatprep.subr.mxu0 0.0
      %3242 = vmatpush1.msra.mxu0 0.0
      %3243 = vmatprep.subr.mxu0 0.0
      %3244 = vmatpush1.msra.mxu0 0.0
      %3245 = vmatprep.subr.mxu0 0.0
      %3246 = vmatpush1.msra.mxu0 0.0
      %3247 = vmatprep.subr.mxu0 0.0
      %3248 = vmatpush1.msra.mxu0 0.0
      %3249 = vmatprep.subr.mxu0 0.0
      %3250 = vmatpush1.msra.mxu0 0.0
      %3251 = vmatprep.subr.mxu0 0.0
      %3252 = vmatpush1.msra.mxu0 0.0
      %3253 = vmatprep.subr.mxu0 0.0
      %3254 = vmatpush1.msra.mxu0 0.0
      %3255 = vmatprep.subr.mxu0 0.0
      %3256 = vmatpush1.msra.mxu0 0.0
      %3257 = vmatprep.subr.mxu0 0.0
      %3258 = vmatpush1.msra.mxu0 0.0
      %3259 = vmatprep.subr.mxu0 0.0
      %3260 = vmatpush1.msra.mxu0 0.0
      %3261 = vmatprep.subr.mxu0 0.0
      %3262 = vmatpush1.msra.mxu0 0.0
      %3263 = vmatprep.subr.mxu0 0.0
      %3264 = vmatpush1.msra.mxu0 0.0
      %3265 = vmatprep.subr.mxu0 0.0
      %3266 = vmatpush1.msra.mxu0 0.0
      %3267 = vmatprep.subr.mxu0 0.0
      %3268 = vmatpush1.msra.mxu0 0.0
      %3269 = vmatprep.subr.mxu0 0.0
      %3270 = vmatpush1.msra.mxu0 0.0
      %3271 = vmatprep.subr.mxu0 0.0
      %3272 = vmatpush1.msra.mxu0 0.0
      %3273 = vmatprep.subr.mxu0 0.0
      %3274 = vmatpush1.msra.mxu0 0.0
      %3275 = vmatprep.subr.mxu0 0.0
      %3276 = vmatpush1.msra.mxu0 0.0
      %3277 = vmatprep.subr.mxu0 0.0
      %3278 = vmatpush1.msra.mxu0 0.0
      %3279 = vmatprep.subr.mxu0 0.0
      %3280 = vmatpush1.msra.mxu0 0.0
      %3281 = vmatprep.mubr.f32.mxu0 0.0
      %3282 = vmatmul.mubr.f32.gmra.mrb[0].mxu0 %v3215
      %v3283 = vpop.f32.mrb[0].mxu0
      %v3284 = vadd.f32 %v2930, %v3283
      %v3285 = vpop.f32.mrb[0].mxu0
      %3286 = vdwg.mxu0
      %v3287 = vmax.f32 %v3284, 0.0
      %3289 = vrot.lane.b32.xlu0 %v3103, 64
      %v3290 = vpop.permute.xlu0 %3289
      %3293 = vrot.lane.b32.xlu0 %v3287, 64
      %v3294 = vpop.permute.xlu0 %3293
      %v3296 = vsel %vm1537, %v3005, %v3290
      %v3297 = vsel %vm1537, %v3201, %v3294
      %v3298 = vld [vmem:[%s14] sm:$0xff]
      %v3299 = vld [vmem:[%s14 + $0x8] sm:$0xff]
      %v3300 = vld [vmem:[%s14 + $0x10] sm:$0xff]
      %v3301 = vld [vmem:[%s14 + $0x18] sm:$0xff]
      %v3302 = vld [vmem:[%s14 + $0x20] sm:$0xff]
      %v3303 = vld [vmem:[%s14 + $0x28] sm:$0xff]
      %v3304 = vld [vmem:[%s14 + $0x30] sm:$0xff]
      %v3305 = vld [vmem:[%s14 + $0x38] sm:$0xff]
      %v3306 = vld [vmem:[%s14 + $0x40] sm:$0xff]
      %v3307 = vld [vmem:[%s14 + $0x48] sm:$0xff]
      %v3308 = vld [vmem:[%s14 + $0x50] sm:$0xff]
      %v3309 = vld [vmem:[%s14 + $0x58] sm:$0xff]
      %v3310 = vld [vmem:[%s14 + $0x60] sm:$0xff]
      %v3311 = vld [vmem:[%s14 + $0x68] sm:$0xff]
      %v3312 = vld [vmem:[%s14 + $0x70] sm:$0xff]
      %v3313 = vld [vmem:[%s14 + $0x78] sm:$0xff]
      %v3314 = vld [vmem:[%s14 + $0x80] sm:$0xff]
      %v3315 = vld [vmem:[%s14 + $0x88] sm:$0xff]
      %v3316 = vld [vmem:[%s14 + $0x90] sm:$0xff]
      %v3317 = vld [vmem:[%s14 + $0x98] sm:$0xff]
      %v3318 = vld [vmem:[%s14 + $0xa0] sm:$0xff]
      %v3319 = vld [vmem:[%s14 + $0xa8] sm:$0xff]
      %v3320 = vld [vmem:[%s14 + $0xb0] sm:$0xff]
      %v3321 = vld [vmem:[%s14 + $0xb8] sm:$0xff]
      %v3322 = vld [vmem:[%s14 + $0xc0] sm:$0xff]
      %v3323 = vld [vmem:[%s14 + $0xc8] sm:$0xff]
      %v3324 = vld [vmem:[%s14 + $0xd0] sm:$0xff]
      %v3325 = vld [vmem:[%s14 + $0xd8] sm:$0xff]
      %v3326 = vld [vmem:[%s14 + $0xe0] sm:$0xff]
      %v3327 = vld [vmem:[%s14 + $0xe8] sm:$0xff]
      %v3328 = vld [vmem:[%s14 + $0xf0] sm:$0xff]
      %v3329 = vld [vmem:[%s14 + $0xf8] sm:$0xff]
      %v3330 = vld [vmem:[%s14 + $0x100] sm:$0xff]
      %v3331 = vld [vmem:[%s14 + $0x108] sm:$0xff]
      %v3332 = vld [vmem:[%s14 + $0x110] sm:$0xff]
      %v3333 = vld [vmem:[%s14 + $0x118] sm:$0xff]
      %v3334 = vld [vmem:[%s14 + $0x120] sm:$0xff]
      %v3335 = vld [vmem:[%s14 + $0x128] sm:$0xff]
      %v3336 = vld [vmem:[%s14 + $0x130] sm:$0xff]
      %v3337 = vld [vmem:[%s14 + $0x138] sm:$0xff]
      %v3338 = vld [vmem:[%s14 + $0x140] sm:$0xff]
      %v3339 = vld [vmem:[%s14 + $0x148] sm:$0xff]
      %v3340 = vld [vmem:[%s14 + $0x150] sm:$0xff]
      %v3341 = vld [vmem:[%s14 + $0x158] sm:$0xff]
      %v3342 = vld [vmem:[%s14 + $0x160] sm:$0xff]
      %v3343 = vld [vmem:[%s14 + $0x168] sm:$0xff]
      %v3344 = vld [vmem:[%s14 + $0x170] sm:$0xff]
      %v3345 = vld [vmem:[%s14 + $0x178] sm:$0xff]
      %v3346 = vld [vmem:[%s14 + $0x180] sm:$0xff]
      %v3347 = vld [vmem:[%s14 + $0x188] sm:$0xff]
      %v3348 = vld [vmem:[%s14 + $0x190] sm:$0xff]
      %v3349 = vld [vmem:[%s14 + $0x198] sm:$0xff]
      %v3350 = vld [vmem:[%s14 + $0x1a0] sm:$0xff]
      %v3351 = vld [vmem:[%s14 + $0x1a8] sm:$0xff]
      %v3352 = vld [vmem:[%s14 + $0x1b0] sm:$0xff]
      %v3353 = vld [vmem:[%s14 + $0x1b8] sm:$0xff]
      %v3354 = vld [vmem:[%s14 + $0x1c0] sm:$0xff]
      %v3355 = vld [vmem:[%s14 + $0x1c8] sm:$0xff]
      %v3356 = vld [vmem:[%s14 + $0x1d0] sm:$0xff]
      %v3357 = vld [vmem:[%s14 + $0x1d8] sm:$0xff]
      %v3358 = vld [vmem:[%s14 + $0x1e0] sm:$0xff]
      %v3359 = vld [vmem:[%s14 + $0x1e8] sm:$0xff]
      %v3360 = vld [vmem:[%s14 + $0x1f0] sm:$0xff]
      %v3361 = vld [vmem:[%s14 + $0x1f8] sm:$0xff]
      %3362 = vmatprep.subr.mxu0 %v3299
      %3363 = vmatpush1.msra.mxu0 %v3298
      %3364 = vmatprep.subr.mxu0 %v3301
      %3365 = vmatpush1.msra.mxu0 %v3300
      %3366 = vmatprep.subr.mxu0 %v3303
      %3367 = vmatpush1.msra.mxu0 %v3302
      %3368 = vmatprep.subr.mxu0 %v3305
      %3369 = vmatpush1.msra.mxu0 %v3304
      %3370 = vmatprep.subr.mxu0 %v3307
      %3371 = vmatpush1.msra.mxu0 %v3306
      %3372 = vmatprep.subr.mxu0 %v3309
      %3373 = vmatpush1.msra.mxu0 %v3308
      %3374 = vmatprep.subr.mxu0 %v3311
      %3375 = vmatpush1.msra.mxu0 %v3310
      %3376 = vmatprep.subr.mxu0 %v3313
      %3377 = vmatpush1.msra.mxu0 %v3312
      %3378 = vmatprep.subr.mxu0 %v3315
      %3379 = vmatpush1.msra.mxu0 %v3314
      %3380 = vmatprep.subr.mxu0 %v3317
      %3381 = vmatpush1.msra.mxu0 %v3316
      %3382 = vmatprep.subr.mxu0 %v3319
      %3383 = vmatpush1.msra.mxu0 %v3318
      %3384 = vmatprep.subr.mxu0 %v3321
      %3385 = vmatpush1.msra.mxu0 %v3320
      %3386 = vmatprep.subr.mxu0 %v3323
      %3387 = vmatpush1.msra.mxu0 %v3322
      %3388 = vmatprep.subr.mxu0 %v3325
      %3389 = vmatpush1.msra.mxu0 %v3324
      %3390 = vmatprep.subr.mxu0 %v3327
      %3391 = vmatpush1.msra.mxu0 %v3326
      %3392 = vmatprep.subr.mxu0 %v3329
      %3393 = vmatpush1.msra.mxu0 %v3328
      %3394 = vmatprep.subr.mxu0 %v3331
      %3395 = vmatpush1.msra.mxu0 %v3330
      %3396 = vmatprep.subr.mxu0 %v3333
      %3397 = vmatpush1.msra.mxu0 %v3332
      %3398 = vmatprep.subr.mxu0 %v3335
      %3399 = vmatpush1.msra.mxu0 %v3334
      %3400 = vmatprep.subr.mxu0 %v3337
      %3401 = vmatpush1.msra.mxu0 %v3336
      %3402 = vmatprep.subr.mxu0 %v3339
      %3403 = vmatpush1.msra.mxu0 %v3338
      %3404 = vmatprep.subr.mxu0 %v3341
      %3405 = vmatpush1.msra.mxu0 %v3340
      %3406 = vmatprep.subr.mxu0 %v3343
      %3407 = vmatpush1.msra.mxu0 %v3342
      %3408 = vmatprep.subr.mxu0 %v3345
      %3409 = vmatpush1.msra.mxu0 %v3344
      %3410 = vmatprep.subr.mxu0 %v3347
      %3411 = vmatpush1.msra.mxu0 %v3346
      %3412 = vmatprep.subr.mxu0 %v3349
      %3413 = vmatpush1.msra.mxu0 %v3348
      %3414 = vmatprep.subr.mxu0 %v3351
      %3415 = vmatpush1.msra.mxu0 %v3350
      %3416 = vmatprep.subr.mxu0 %v3353
      %3417 = vmatpush1.msra.mxu0 %v3352
      %3418 = vmatprep.subr.mxu0 %v3355
      %3419 = vmatpush1.msra.mxu0 %v3354
      %3420 = vmatprep.subr.mxu0 %v3357
      %3421 = vmatpush1.msra.mxu0 %v3356
      %3422 = vmatprep.subr.mxu0 %v3359
      %3423 = vmatpush1.msra.mxu0 %v3358
      %3424 = vmatprep.subr.mxu0 %v3361
      %3425 = vmatpush1.msra.mxu0 %v3360
      %3426 = vmatprep.mubr.f32.mxu0 %v3297
      %3427 = vmatmul.mubr.f32.gmra.mrb[0].mxu0 %v3296
      %v3428 = vpop.f32.mrb[0].mxu0
      %v3429 = vadd.f32 0.0, %v3428
      %v3430 = vpop.f32.mrb[0].mxu0
      %v3431 = vadd.f32 0.0, %v3430
      %3432 = vdwg.mxu0
      %v3435 = vcombine.low %v3429, %v3431
      %3437 = vst [vmem:[%s494] sm:$0xff] %v3435
      %p3438 = scmp.lt.s32.totalorder %s26, 1
      %s3439 = scalar_select %p3438, %s26, 1
      %s3440 = smul.addr %s3439, 2
      %s3441 = smul.addr %s3440, 4
      %s3442 = scalar_lea.vmem %s15, %s3441
      // Predicated region
      $region81: #{ublock_forward.1} parent=79 // pred_check
        %p3443 = pneg %p364
      $region82: #{ublock_forward.1} parent=79 // pred_check_branch
        %3445 = sbr.rel (%p3443) target = $region84
      $region83: #{ublock_forward.1} parent=79 // pred_region
        _
      $region84: #{ublock_forward.1} parent=79 // pred_fallthru
        _
    $region80: #{ublock_forward.1} parent=5 // pred_fallthru
      _
    %p3446 = scmp.le.s32.totalorder 2, %s21
    // Predicated region
    $region85: #{ublock_forward.1} parent=5 // pred_check
      %p3447 = pneg %p3446
    $region86: #{ublock_forward.1} parent=5 // pred_check_branch
      %3449 = sbr.rel (%p3447) target = $region88
    $region87: #{ublock_forward.1} parent=5 // pred_region
      %s3450 = ssub.s32 %s21, 2
      // Predicated region
      $region89: #{ublock_forward.1} parent=87 // pred_check
        %p3451 = pneg %p370
      $region90: #{ublock_forward.1} parent=87 // pred_check_branch
        %3453 = sbr.rel (%p3451) target = $region92
      $region91: #{ublock_forward.1} parent=87 // pred_region
        %p3454 = scmp.lt.s32.totalorder %s27, 1
        %s3455 = scalar_select %p3454, %s27, 1
        %s3456 = smul.addr %s3455, 2
        %s3457 = smul.addr %s3456, 4
        %s3458 = scalar_lea.vmem %s15, %s3457
      $region92: #{ublock_forward.1} parent=87 // pred_fallthru
        _
    $region88: #{ublock_forward.1} parent=5 // pred_fallthru
      _
  $region6: #{ublock_forward.1} parent=0 // loop_footer
    %s25 = sadd.s32 1, %s21
  $region7: #{ublock_forward.1} parent=0 // loop_footer_branch
    %20 = sbr.rel target = $region3
  $region8: #{ublock_forward.1} parent=0 // loop_exit
    _

</llo_original>
